<compile_context>
chip_gen: v5e
topology: v5e:2x2
jax: 0.10.0
libtpu: 0.0.40
codegen_flags: <defaults>
</compile_context>

<pallas_src>
import math
from functools import partial

import jax
import jax.numpy as jnp
from jax.experimental import pallas as pl
from jax.experimental.pallas import tpu as pltpu

# ----------------------------- configuration --------------------------------
Z_BATCH = 2
N_POINTS = 8
MUL = 4
MAX_RADIUS = 1.0
NBASIS = 3
RADIAL_LAYERS = 2
RADIAL_H = 16

DIM_IN = 4        # Rs_in  = [(4,0,+1)]
DIM_ACT_IN = 20   # scalars(4) + gates(4) + l=1 nonscalars(12)
DIM_ACT_OUT = 16  # scalars(4) + l=1 nonscalars(12)
DIM_OUT = 2       # Rs_out = [(2,0,+1)]

# Radial-output channel conventions (weights are randomly initialized, so this layout choice is
# just the parameterization of the same architecture):
#   layer 0: c = v*12 + w,  v = input scalar index (0..3), w = [4 scalar-out u | 4 gate u | 4 l=1 u]
#   layer 1: c = v*2 + p (path scalars<-scalars),  c = 8 + v*2 + p (path scalars<-l=1 vectors)
RADIAL0_OUT = 48
RADIAL1_OUT = 16

STATS_DIM = 20    # [sum of 8 scalar ch | sum of squares of 8 scalar ch | sum_pts mean_m(l=1 comp^2) per mul]
BN_EPS = 1e-5


# ----------------------------- in-kernel helpers -----------------------------
def _sigmoid(x):
    # TODO(synk): e3nn's rescaled_act applies second-moment normalization constants to
    # swish/sigmoid/tanh; plain activations are kept (acknowledged approximation).
    return 1.0 / (1.0 + jnp.exp(-x))


def _pairwise_geometry(g, n):
    """Per-batch pair geometry: component-normalized Y_{l=1}(r_ab) and Gaussian radial basis."""
    rvec = g[None, :, :] - g[:, None, :]                         # (N, N, 3), r_ab = r_b - r_a
    d2 = jnp.sum(rvec * rvec, axis=2, keepdims=True)             # (N, N, 1)
    d = jnp.sqrt(d2)
    rhat = jnp.where(d > 1e-9, rvec / jnp.maximum(d, 1e-9), 0.0)  # Y_{l>0}(r=0) := 0
    ysh1 = math.sqrt(3.0) * jnp.concatenate(
        [rhat[:, :, 1:2], rhat[:, :, 2:3], rhat[:, :, 0:1]], axis=2)   # (N, N, 3), order (y, z, x)
    spacing = MAX_RADIUS / (NBASIS - 1)
    sigma = 0.8 * spacing
    centers = jax.lax.broadcasted_iota(
        jnp.int32, (n, n, NBASIS), 2).astype(jnp.float32) * spacing
    basis = jnp.exp(-(((d - centers) / sigma) ** 2))              # (N, N, NBASIS)
    return ysh1, basis


def _radial_mlp(h, w1, b1, w2, b2, w3, b3):
    """Fused 3-layer radial network; all intermediates stay resident in VMEM."""
    h = jnp.dot(h, w1, preferred_element_type=jnp.float32) + b1
    h = h * _sigmoid(h)                                           # swish
    h = jnp.dot(h, w2, preferred_element_type=jnp.float32) + b2
    h = h * _sigmoid(h)
    return jnp.dot(h, w3, preferred_element_type=jnp.float32) + b3


# ----------------------------- kernel 1: conv0 + BN partial stats ------------
def _layer0_kernel(feat_ref, geom_ref, w1_ref, b1_ref, w2_ref, b2_ref, w3_ref, b3_ref,
                   y_ref, stats_ref, *, n, scale):
    x = feat_ref[0]                       # (N, 4)   input scalars
    g = geom_ref[0]                       # (N, 3)
    ysh1, basis = _pairwise_geometry(g, n)

    r = _radial_mlp(basis.reshape(n * n, NBASIS),
                    w1_ref[...], b1_ref[...], w2_ref[...], b2_ref[...],
                    w3_ref[...], b3_ref[...])
    r3 = r.reshape(n, n, RADIAL0_OUT)     # (N, N, 48), channel c = v*12 + w

    # T[a, b, w] = sum_v R[a, b, v*12 + w] * x[b, v]
    # (w: 0-3 scalar path, 4-7 gate path, 8-11 l=1 path -- per-mul pre-Y contraction)
    t = r3[:, :, 0:12] * x[None, :, 0:1]
    for v in range(1, MUL):
        t = t + r3[:, :, 12 * v:12 * (v + 1)] * x[None, :, v:v + 1]

    out_sg = jnp.sum(t[:, :, 0:8], axis=1)                        # (N, 8) scalars + gates
    ns_parts = [jnp.sum(t[:, :, 8 + u:9 + u] * ysh1, axis=1)      # (N, 3) per output mul u
                for u in range(MUL)]
    y0 = jnp.concatenate([out_sg] + ns_parts, axis=1) * scale     # (N, 20)
    y_ref[0] = y0

    # Per-batch partial sums for the training-mode, component-normalized BatchNorm.
    # TODO(synk): running-statistics buffers (eval mode / momentum update) are not modeled.
    sg = y0[:, 0:8]
    s_sum = jnp.sum(sg, axis=0, keepdims=True)                    # (1, 8)
    s_sq = jnp.sum(sg * sg, axis=0, keepdims=True)                # (1, 8)
    nsq = y0[:, 8:20] * y0[:, 8:20]
    ns_cols = jnp.concatenate(
        [jnp.sum(nsq[:, 3 * u:3 * u + 3], axis=1, keepdims=True) for u in range(MUL)], axis=1)
    ns_norm = jnp.sum(ns_cols, axis=0, keepdims=True) * (1.0 / 3.0)   # (1, 4)
    stats_ref[0] = jnp.concatenate([s_sum, s_sq, ns_norm], axis=1)    # (1, 20)


# ----------------------------- kernel 2: BN + gate + final conv --------------
def _layer1_kernel(y_ref, stats_ref, geom_ref, w1_ref, b1_ref, w2_ref, b2_ref, w3_ref, b3_ref,
                   out_ref, *, n, n_batch, scale):
    y = y_ref[0]                          # (N, 20)
    g = geom_ref[0]                       # (N, 3)

    # ---- BatchNorm (stats over all Z*N points, combined from tiny per-batch partial sums) ----
    tot = jnp.sum(stats_ref[...], axis=0)                         # (1, 20)
    inv_m = 1.0 / float(n_batch * n)
    mean_s = tot[:, 0:8] * inv_m
    var_s = tot[:, 8:16] * inv_m - mean_s * mean_s
    inv_std = jax.lax.rsqrt(var_s + BN_EPS)                       # (1, 8)
    inv_nrm = jax.lax.rsqrt(tot[:, 16:20] * inv_m + BN_EPS)       # (1, 4)

    sg = (y[:, 0:8] - mean_s) * inv_std                           # normalized scalars + gates
    # ---- GatedBlockParity: swish scalars, sigmoid gates scale the l=1 fields (pure VPU) ----
    s_act = sg[:, 0:4] * _sigmoid(sg[:, 0:4])                     # (N, 4)
    gate = _sigmoid(sg[:, 4:8])                                   # (N, 4)
    ns_g = [y[:, 8 + 3 * u:11 + 3 * u] * (inv_nrm[:, u:u + 1] * gate[:, u:u + 1])
            for u in range(MUL)]                                  # 4 x (N, 3) gated hidden vectors

    # ---- final equivariant convolution to Rs_out (radial MLP + on-the-fly contraction) ----
    ysh1, basis = _pairwise_geometry(g, n)
    r = _radial_mlp(basis.reshape(n * n, NBASIS),
                    w1_ref[...], b1_ref[...], w2_ref[...], b2_ref[...],
                    w3_ref[...], b3_ref[...])
    r3 = r.reshape(n, n, RADIAL1_OUT)                             # (N, N, 16)

    # path A: output scalars <- hidden scalars (l_f = 0)
    t = r3[:, :, 0:2] * s_act[None, :, 0:1]
    for v in range(1, MUL):
        t = t + r3[:, :, 2 * v:2 * v + 2] * s_act[None, :, v:v + 1]
    # path B: output scalars <- hidden l=1 vectors (l_f = 1)
    for v in range(MUL):
        q = jnp.sum(ysh1 * ns_g[v][None, :, :], axis=2, keepdims=True)   # (N, N, 1)
        t = t + r3[:, :, 8 + 2 * v:10 + 2 * v] * q
    out_ref[0] = jnp.sum(t, axis=1) * scale                       # (N, 2)


# ----------------------------- wrapper ----------------------------------------
def variable_parity_network(features, geometry, params):
    z, n, _ = features.shape
    n_norm = n                                                    # forward(): n_norm = geometry.shape[-2]
    # TODO(synk): exact e3nn per-path norm_coef for general (l_in, l_out) not reproduced;
    # every path here has l_in == 0 or l_out == 0 so the CG is a scaled identity.
    scale = (1.0 / math.sqrt(MUL)) / math.sqrt(n_norm)            # 1/sqrt(mul_in) * 1/sqrt(n_norm)
    f32 = jnp.float32

    (w0a, b0a), (w0b, b0b), (w0c, b0c) = params['radial0']
    (w1a, b1a), (w1b, b1b), (w1c, b1c) = params['radial1']

    zmap = lambda zz: (zz, 0, 0)
    wmap = lambda zz: (0, 0)

    radial0_specs = [
        pl.BlockSpec((NBASIS, RADIAL_H), wmap), pl.BlockSpec((1, RADIAL_H), wmap),
        pl.BlockSpec((RADIAL_H, RADIAL_H), wmap), pl.BlockSpec((1, RADIAL_H), wmap),
        pl.BlockSpec((RADIAL_H, RADIAL0_OUT), wmap), pl.BlockSpec((1, RADIAL0_OUT), wmap),
    ]
    radial1_specs = [
        pl.BlockSpec((NBASIS, RADIAL_H), wmap), pl.BlockSpec((1, RADIAL_H), wmap),
        pl.BlockSpec((RADIAL_H, RADIAL_H), wmap), pl.BlockSpec((1, RADIAL_H), wmap),
        pl.BlockSpec((RADIAL_H, RADIAL1_OUT), wmap), pl.BlockSpec((1, RADIAL1_OUT), wmap),
    ]

    # --- block 0: fused equivariant conv (+ BN partial statistics), one grid step per batch ---
    y0, stats = pl.pallas_call(
        partial(_layer0_kernel, n=n, scale=scale),
        out_shape=(jax.ShapeDtypeStruct((z, n, DIM_ACT_IN), f32),
                   jax.ShapeDtypeStruct((z, 1, STATS_DIM), f32)),
        grid=(z,),
        in_specs=[pl.BlockSpec((1, n, DIM_IN), zmap),
                  pl.BlockSpec((1, n, 3), zmap)] + radial0_specs,
        out_specs=(pl.BlockSpec((1, n, DIM_ACT_IN), zmap),
                   pl.BlockSpec((1, 1, STATS_DIM), zmap)),
        compiler_params=pltpu.CompilerParams(dimension_semantics=("parallel",)),
    )(features, geometry,
      w0a, b0a.reshape(1, -1), w0b, b0b.reshape(1, -1), w0c, b0c.reshape(1, -1))

    # --- fused BatchNorm + GatedBlockParity + final equivariant conv ---
    out = pl.pallas_call(
        partial(_layer1_kernel, n=n, n_batch=z, scale=scale),
        out_shape=jax.ShapeDtypeStruct((z, n, DIM_OUT), f32),
        grid=(z,),
        in_specs=[pl.BlockSpec((1, n, DIM_ACT_IN), zmap),
                  pl.BlockSpec((z, 1, STATS_DIM), lambda zz: (0, 0, 0)),
                  pl.BlockSpec((1, n, 3), zmap)] + radial1_specs,
        out_specs=pl.BlockSpec((1, n, DIM_OUT), zmap),
        compiler_params=pltpu.CompilerParams(dimension_semantics=("parallel",)),
    )(y0, stats, geometry,
      w1a, b1a.reshape(1, -1), w1b, b1b.reshape(1, -1), w1c, b1c.reshape(1, -1))
    return out


# ----------------------------- parameter init --------------------------------
def init_radial_net(key, nbasis, hidden, n_layers, out_dim):
    dims = [nbasis] + [hidden] * n_layers + [out_dim]
    params = []
    for din, dout in zip(dims[:-1], dims[1:]):
        key, k = jax.random.split(key)
        w = jax.random.normal(k, (din, dout), jnp.float32) / math.sqrt(din)
        b = jnp.zeros((dout,), jnp.float32)
        params.append((w, b))
    return params


# ----------------------------- main -------------------------------------------
if __name__ == "__main__":
    key = jax.random.PRNGKey(0)
    k_feat, k_geom, k_r0, k_r1 = jax.random.split(key, 4)

    features = jax.random.normal(k_feat, (Z_BATCH, N_POINTS, DIM_IN), jnp.float32)
    geometry = 0.4 * jax.random.normal(k_geom, (Z_BATCH, N_POINTS, 3), jnp.float32)

    params = {
        'radial0': init_radial_net(k_r0, NBASIS, RADIAL_H, RADIAL_LAYERS, RADIAL0_OUT),
        'radial1': init_radial_net(k_r1, NBASIS, RADIAL_H, RADIAL_LAYERS, RADIAL1_OUT),
    }

    fwd = jax.jit(lambda f, g: variable_parity_network(f, g, params))
    out = fwd(features, geometry)
    jax.block_until_ready(out)
    assert out.shape == (Z_BATCH, N_POINTS, DIM_OUT)
    assert bool(jnp.all(jnp.isfinite(out)))
    print("KERNEL_OK")
</pallas_src>

<mosaic_0001>
module attributes {stable_mosaic.version = 11 : i64} {
  func.func @_layer0_kernel(%arg0: i32, %arg1: memref<1x8x4xf32, #tpu.memory_space<vmem>>, %arg2: memref<1x8x3xf32, #tpu.memory_space<vmem>>, %arg3: memref<3x16xf32, #tpu.memory_space<vmem>>, %arg4: memref<1x16xf32, #tpu.memory_space<vmem>>, %arg5: memref<16x16xf32, #tpu.memory_space<vmem>>, %arg6: memref<1x16xf32, #tpu.memory_space<vmem>>, %arg7: memref<16x48xf32, #tpu.memory_space<vmem>>, %arg8: memref<1x48xf32, #tpu.memory_space<vmem>>, %arg9: memref<1x8x20xf32, #tpu.memory_space<vmem>>, %arg10: memref<1x1x20xf32, #tpu.memory_space<vmem>>) attributes {dimension_semantics = [#tpu.dimension_semantics<parallel>], iteration_bounds = array<i64: 2>, scalar_prefetch = 0 : i64, scratch_operands = 0 : i64, tpu.core_type = #tpu.core_type<tc>, window_params = [{transform_indices = @transform_0, window_bounds = array<i64: 1, 8, 4>}, {transform_indices = @transform_1, window_bounds = array<i64: 1, 8, 3>}, {pipeline_mode = #tpu.pipeline_mode<synchronous>, transform_indices = @transform_2, window_bounds = array<i64: 3, 16>}, {pipeline_mode = #tpu.pipeline_mode<synchronous>, transform_indices = @transform_3, window_bounds = array<i64: 1, 16>}, {pipeline_mode = #tpu.pipeline_mode<synchronous>, transform_indices = @transform_4, window_bounds = array<i64: 16, 16>}, {pipeline_mode = #tpu.pipeline_mode<synchronous>, transform_indices = @transform_5, window_bounds = array<i64: 1, 16>}, {pipeline_mode = #tpu.pipeline_mode<synchronous>, transform_indices = @transform_6, window_bounds = array<i64: 16, 48>}, {pipeline_mode = #tpu.pipeline_mode<synchronous>, transform_indices = @transform_7, window_bounds = array<i64: 1, 48>}, {transform_indices = @transform_8, window_bounds = array<i64: 1, 8, 20>}, {transform_indices = @transform_9, window_bounds = array<i64: 1, 1, 20>}]} {
    %c0 = arith.constant 0 : index
    %c0_0 = arith.constant 0 : index
    %c0_1 = arith.constant 0 : index
    %0 = vector.load %arg1[%c0, %c0_0, %c0_1] : memref<1x8x4xf32, #tpu.memory_space<vmem>>, vector<1x8x4xf32>
    %1 = vector.shape_cast %0 : vector<1x8x4xf32> to vector<8x4xf32>
    %c0_2 = arith.constant 0 : index
    %c0_3 = arith.constant 0 : index
    %c0_4 = arith.constant 0 : index
    %2 = vector.load %arg2[%c0_2, %c0_3, %c0_4] : memref<1x8x3xf32, #tpu.memory_space<vmem>>, vector<1x8x3xf32>
    %3 = vector.shape_cast %2 : vector<1x8x3xf32> to vector<8x3xf32>
    %4 = vector.shape_cast %3 : vector<8x3xf32> to vector<1x8x3xf32>
    %5 = vector.shape_cast %3 : vector<8x3xf32> to vector<8x1x3xf32>
    %6 = vector.broadcast %4 : vector<1x8x3xf32> to vector<8x8x3xf32>
    %7 = vector.broadcast %5 : vector<8x1x3xf32> to vector<8x8x3xf32>
    %8 = arith.subf %6, %7 : vector<8x8x3xf32>
    %9 = arith.mulf %8, %8 : vector<8x8x3xf32>
    %cst = arith.constant dense<0.000000e+00> : vector<8x8xf32>
    %10 = vector.multi_reduction <add>, %9, %cst [2] : vector<8x8x3xf32> to vector<8x8xf32>
    %11 = vector.shape_cast %10 : vector<8x8xf32> to vector<8x8x1xf32>
    %12 = math.sqrt %11 : vector<8x8x1xf32>
    %cst_5 = arith.constant 9.99999971E-10 : f32
    %13 = vector.broadcast %cst_5 : f32 to vector<8x8x1xf32>
    %14 = arith.cmpf ogt, %12, %13 : vector<8x8x1xf32>
    %cst_6 = arith.constant 9.99999971E-10 : f32
    %15 = vector.broadcast %cst_6 : f32 to vector<8x8x1xf32>
    %16 = arith.maximumf %12, %15 : vector<8x8x1xf32>
    %17 = vector.broadcast %16 : vector<8x8x1xf32> to vector<8x8x3xf32>
    %18 = arith.divf %8, %17 : vector<8x8x3xf32>
    %cst_7 = arith.constant 0.000000e+00 : f32
    %19 = vector.shape_cast %14 : vector<8x8x1xi1> to vector<8x8x1xi1>
    %20 = vector.broadcast %19 : vector<8x8x1xi1> to vector<8x8x3xi1>
    %21 = vector.broadcast %cst_7 : f32 to vector<8x8x3xf32>
    %22 = arith.select %20, %18, %21 : vector<8x8x3xi1>, vector<8x8x3xf32>
    %23 = vector.extract_strided_slice %22 {offsets = [0, 0, 1], sizes = [8, 8, 1], strides = [1, 1, 1]} : vector<8x8x3xf32> to vector<8x8x1xf32>
    %24 = vector.extract_strided_slice %22 {offsets = [0, 0, 2], sizes = [8, 8, 1], strides = [1, 1, 1]} : vector<8x8x3xf32> to vector<8x8x1xf32>
    %25 = vector.extract_strided_slice %22 {offsets = [0, 0, 0], sizes = [8, 8, 1], strides = [1, 1, 1]} : vector<8x8x3xf32> to vector<8x8x1xf32>
    %26 = tpu.concatenate %23, %24, %25 in 2 : vector<8x8x1xf32>, vector<8x8x1xf32>, vector<8x8x1xf32> -> vector<8x8x3xf32>
    %cst_8 = arith.constant 1.73205078 : f32
    %27 = vector.broadcast %cst_8 : f32 to vector<8x8x3xf32>
    %28 = arith.mulf %27, %26 : vector<8x8x3xf32>
    %29 = tpu.iota {dimensions = array<i32: 2>} : vector<8x8x3xi32>
    %30 = arith.sitofp %29 : vector<8x8x3xi32> to vector<8x8x3xf32>
    %cst_9 = arith.constant 5.000000e-01 : f32
    %31 = vector.broadcast %cst_9 : f32 to vector<8x8x3xf32>
    %32 = arith.mulf %30, %31 : vector<8x8x3xf32>
    %33 = vector.broadcast %12 : vector<8x8x1xf32> to vector<8x8x3xf32>
    %34 = arith.subf %33, %32 : vector<8x8x3xf32>
    %cst_10 = arith.constant 4.000000e-01 : f32
    %35 = vector.broadcast %cst_10 : f32 to vector<8x8x3xf32>
    %36 = arith.divf %34, %35 : vector<8x8x3xf32>
    %37 = arith.mulf %36, %36 : vector<8x8x3xf32>
    %cst_11 = arith.constant 0.000000e+00 : f32
    %38 = vector.broadcast %cst_11 : f32 to vector<8x8x3xf32>
    %39 = arith.subf %38, %37 : vector<8x8x3xf32>
    %40 = math.exp %39 : vector<8x8x3xf32>
    %41 = vector.shape_cast %40 : vector<8x8x3xf32> to vector<64x3xf32>
    %c0_12 = arith.constant 0 : index
    %c0_13 = arith.constant 0 : index
    %42 = vector.load %arg3[%c0_12, %c0_13] : memref<3x16xf32, #tpu.memory_space<vmem>>, vector<3x16xf32>
    %c0_14 = arith.constant 0 : index
    %c0_15 = arith.constant 0 : index
    %43 = vector.load %arg4[%c0_14, %c0_15] : memref<1x16xf32, #tpu.memory_space<vmem>>, vector<1x16xf32>
    %c0_16 = arith.constant 0 : index
    %c0_17 = arith.constant 0 : index
    %44 = vector.load %arg5[%c0_16, %c0_17] : memref<16x16xf32, #tpu.memory_space<vmem>>, vector<16x16xf32>
    %c0_18 = arith.constant 0 : index
    %c0_19 = arith.constant 0 : index
    %45 = vector.load %arg6[%c0_18, %c0_19] : memref<1x16xf32, #tpu.memory_space<vmem>>, vector<1x16xf32>
    %c0_20 = arith.constant 0 : index
    %c0_21 = arith.constant 0 : index
    %46 = vector.load %arg7[%c0_20, %c0_21] : memref<16x48xf32, #tpu.memory_space<vmem>>, vector<16x48xf32>
    %c0_22 = arith.constant 0 : index
    %c0_23 = arith.constant 0 : index
    %47 = vector.load %arg8[%c0_22, %c0_23] : memref<1x48xf32, #tpu.memory_space<vmem>>, vector<1x48xf32>
    %cst_24 = arith.constant dense<0.000000e+00> : vector<64x16xf32>
    %48 = tpu.matmul %41, %42, %cst_24 {dimension_numbers = #tpu.dot_dimension_numbers<[1], [0], [0], [1], [0, 0, 1, 1], [], []>} : vector<64x3xf32>, vector<3x16xf32>, vector<64x16xf32> -> vector<64x16xf32>
    %49 = vector.broadcast %43 : vector<1x16xf32> to vector<64x16xf32>
    %50 = arith.addf %48, %49 : vector<64x16xf32>
    %cst_25 = arith.constant 0.000000e+00 : f32
    %51 = vector.broadcast %cst_25 : f32 to vector<64x16xf32>
    %52 = arith.subf %51, %50 : vector<64x16xf32>
    %53 = math.exp %52 : vector<64x16xf32>
    %cst_26 = arith.constant 1.000000e+00 : f32
    %54 = vector.broadcast %cst_26 : f32 to vector<64x16xf32>
    %55 = arith.addf %54, %53 : vector<64x16xf32>
    %cst_27 = arith.constant 1.000000e+00 : f32
    %56 = vector.broadcast %cst_27 : f32 to vector<64x16xf32>
    %57 = arith.divf %56, %55 : vector<64x16xf32>
    %58 = arith.mulf %50, %57 : vector<64x16xf32>
    %cst_28 = arith.constant dense<0.000000e+00> : vector<64x16xf32>
    %59 = tpu.matmul %58, %44, %cst_28 {dimension_numbers = #tpu.dot_dimension_numbers<[1], [0], [0], [1], [0, 0, 1, 1], [], []>} : vector<64x16xf32>, vector<16x16xf32>, vector<64x16xf32> -> vector<64x16xf32>
    %60 = vector.broadcast %45 : vector<1x16xf32> to vector<64x16xf32>
    %61 = arith.addf %59, %60 : vector<64x16xf32>
    %cst_29 = arith.constant 0.000000e+00 : f32
    %62 = vector.broadcast %cst_29 : f32 to vector<64x16xf32>
    %63 = arith.subf %62, %61 : vector<64x16xf32>
    %64 = math.exp %63 : vector<64x16xf32>
    %cst_30 = arith.constant 1.000000e+00 : f32
    %65 = vector.broadcast %cst_30 : f32 to vector<64x16xf32>
    %66 = arith.addf %65, %64 : vector<64x16xf32>
    %cst_31 = arith.constant 1.000000e+00 : f32
    %67 = vector.broadcast %cst_31 : f32 to vector<64x16xf32>
    %68 = arith.divf %67, %66 : vector<64x16xf32>
    %69 = arith.mulf %61, %68 : vector<64x16xf32>
    %cst_32 = arith.constant dense<0.000000e+00> : vector<64x48xf32>
    %70 = tpu.matmul %69, %46, %cst_32 {dimension_numbers = #tpu.dot_dimension_numbers<[1], [0], [0], [1], [0, 0, 1, 1], [], []>} : vector<64x16xf32>, vector<16x48xf32>, vector<64x48xf32> -> vector<64x48xf32>
    %71 = vector.broadcast %47 : vector<1x48xf32> to vector<64x48xf32>
    %72 = arith.addf %70, %71 : vector<64x48xf32>
    %73 = vector.shape_cast %72 : vector<64x48xf32> to vector<8x8x48xf32>
    %74 = vector.extract_strided_slice %73 {offsets = [0, 0, 0], sizes = [8, 8, 12], strides = [1, 1, 1]} : vector<8x8x48xf32> to vector<8x8x12xf32>
    %75 = vector.extract_strided_slice %1 {offsets = [0, 0], sizes = [8, 1], strides = [1, 1]} : vector<8x4xf32> to vector<8x1xf32>
    %76 = vector.shape_cast %75 : vector<8x1xf32> to vector<1x8x1xf32>
    %77 = vector.broadcast %76 : vector<1x8x1xf32> to vector<8x8x12xf32>
    %78 = arith.mulf %74, %77 : vector<8x8x12xf32>
    %79 = vector.extract_strided_slice %73 {offsets = [0, 0, 12], sizes = [8, 8, 12], strides = [1, 1, 1]} : vector<8x8x48xf32> to vector<8x8x12xf32>
    %80 = vector.extract_strided_slice %1 {offsets = [0, 1], sizes = [8, 1], strides = [1, 1]} : vector<8x4xf32> to vector<8x1xf32>
    %81 = vector.shape_cast %80 : vector<8x1xf32> to vector<1x8x1xf32>
    %82 = vector.broadcast %81 : vector<1x8x1xf32> to vector<8x8x12xf32>
    %83 = arith.mulf %79, %82 : vector<8x8x12xf32>
    %84 = arith.addf %78, %83 : vector<8x8x12xf32>
    %85 = vector.extract_strided_slice %73 {offsets = [0, 0, 24], sizes = [8, 8, 12], strides = [1, 1, 1]} : vector<8x8x48xf32> to vector<8x8x12xf32>
    %86 = vector.extract_strided_slice %1 {offsets = [0, 2], sizes = [8, 1], strides = [1, 1]} : vector<8x4xf32> to vector<8x1xf32>
    %87 = vector.shape_cast %86 : vector<8x1xf32> to vector<1x8x1xf32>
    %88 = vector.broadcast %87 : vector<1x8x1xf32> to vector<8x8x12xf32>
    %89 = arith.mulf %85, %88 : vector<8x8x12xf32>
    %90 = arith.addf %84, %89 : vector<8x8x12xf32>
    %91 = vector.extract_strided_slice %73 {offsets = [0, 0, 36], sizes = [8, 8, 12], strides = [1, 1, 1]} : vector<8x8x48xf32> to vector<8x8x12xf32>
    %92 = vector.extract_strided_slice %1 {offsets = [0, 3], sizes = [8, 1], strides = [1, 1]} : vector<8x4xf32> to vector<8x1xf32>
    %93 = vector.shape_cast %92 : vector<8x1xf32> to vector<1x8x1xf32>
    %94 = vector.broadcast %93 : vector<1x8x1xf32> to vector<8x8x12xf32>
    %95 = arith.mulf %91, %94 : vector<8x8x12xf32>
    %96 = arith.addf %90, %95 : vector<8x8x12xf32>
    %97 = vector.extract_strided_slice %96 {offsets = [0, 0, 0], sizes = [8, 8, 8], strides = [1, 1, 1]} : vector<8x8x12xf32> to vector<8x8x8xf32>
    %cst_33 = arith.constant dense<0.000000e+00> : vector<8x8xf32>
    %98 = vector.multi_reduction <add>, %97, %cst_33 [1] : vector<8x8x8xf32> to vector<8x8xf32>
    %99 = vector.extract_strided_slice %96 {offsets = [0, 0, 8], sizes = [8, 8, 1], strides = [1, 1, 1]} : vector<8x8x12xf32> to vector<8x8x1xf32>
    %100 = vector.broadcast %99 : vector<8x8x1xf32> to vector<8x8x3xf32>
    %101 = arith.mulf %100, %28 : vector<8x8x3xf32>
    %cst_34 = arith.constant dense<0.000000e+00> : vector<8x3xf32>
    %102 = vector.multi_reduction <add>, %101, %cst_34 [1] : vector<8x8x3xf32> to vector<8x3xf32>
    %103 = vector.extract_strided_slice %96 {offsets = [0, 0, 9], sizes = [8, 8, 1], strides = [1, 1, 1]} : vector<8x8x12xf32> to vector<8x8x1xf32>
    %104 = vector.broadcast %103 : vector<8x8x1xf32> to vector<8x8x3xf32>
    %105 = arith.mulf %104, %28 : vector<8x8x3xf32>
    %cst_35 = arith.constant dense<0.000000e+00> : vector<8x3xf32>
    %106 = vector.multi_reduction <add>, %105, %cst_35 [1] : vector<8x8x3xf32> to vector<8x3xf32>
    %107 = vector.extract_strided_slice %96 {offsets = [0, 0, 10], sizes = [8, 8, 1], strides = [1, 1, 1]} : vector<8x8x12xf32> to vector<8x8x1xf32>
    %108 = vector.broadcast %107 : vector<8x8x1xf32> to vector<8x8x3xf32>
    %109 = arith.mulf %108, %28 : vector<8x8x3xf32>
    %cst_36 = arith.constant dense<0.000000e+00> : vector<8x3xf32>
    %110 = vector.multi_reduction <add>, %109, %cst_36 [1] : vector<8x8x3xf32> to vector<8x3xf32>
    %111 = vector.extract_strided_slice %96 {offsets = [0, 0, 11], sizes = [8, 8, 1], strides = [1, 1, 1]} : vector<8x8x12xf32> to vector<8x8x1xf32>
    %112 = vector.broadcast %111 : vector<8x8x1xf32> to vector<8x8x3xf32>
    %113 = arith.mulf %112, %28 : vector<8x8x3xf32>
    %cst_37 = arith.constant dense<0.000000e+00> : vector<8x3xf32>
    %114 = vector.multi_reduction <add>, %113, %cst_37 [1] : vector<8x8x3xf32> to vector<8x3xf32>
    %115 = tpu.concatenate %98, %102, %106, %110, %114 in 1 : vector<8x8xf32>, vector<8x3xf32>, vector<8x3xf32>, vector<8x3xf32>, vector<8x3xf32> -> vector<8x20xf32>
    %cst_38 = arith.constant 0.176776692 : f32
    %116 = vector.broadcast %cst_38 : f32 to vector<8x20xf32>
    %117 = arith.mulf %115, %116 : vector<8x20xf32>
    %c0_39 = arith.constant 0 : index
    %c0_40 = arith.constant 0 : index
    %c0_41 = arith.constant 0 : index
    %118 = vector.load %arg9[%c0_39, %c0_40, %c0_41] : memref<1x8x20xf32, #tpu.memory_space<vmem>>, vector<1x8x20xf32>
    %119 = vector.shape_cast %118 : vector<1x8x20xf32> to vector<8x20xf32>
    %120 = vector.shape_cast %117 : vector<8x20xf32> to vector<1x8x20xf32>
    tpu.vector_store %arg9[%c0_39, %c0_40, %c0_41], %120 {strides = array<i32>} : memref<1x8x20xf32, #tpu.memory_space<vmem>>, vector<1x8x20xf32>,
    %121 = vector.extract_strided_slice %117 {offsets = [0, 0], sizes = [8, 8], strides = [1, 1]} : vector<8x20xf32> to vector<8x8xf32>
    %cst_42 = arith.constant dense<0.000000e+00> : vector<8xf32>
    %122 = vector.multi_reduction <add>, %121, %cst_42 [0] : vector<8x8xf32> to vector<8xf32>
    %123 = vector.shape_cast %122 : vector<8xf32> to vector<1x8xf32>
    %124 = arith.mulf %121, %121 : vector<8x8xf32>
    %cst_43 = arith.constant dense<0.000000e+00> : vector<8xf32>
    %125 = vector.multi_reduction <add>, %124, %cst_43 [0] : vector<8x8xf32> to vector<8xf32>
    %126 = vector.shape_cast %125 : vector<8xf32> to vector<1x8xf32>
    %127 = vector.extract_strided_slice %117 {offsets = [0, 8], sizes = [8, 12], strides = [1, 1]} : vector<8x20xf32> to vector<8x12xf32>
    %128 = vector.extract_strided_slice %117 {offsets = [0, 8], sizes = [8, 12], strides = [1, 1]} : vector<8x20xf32> to vector<8x12xf32>
    %129 = arith.mulf %127, %128 : vector<8x12xf32>
    %130 = vector.extract_strided_slice %129 {offsets = [0, 0], sizes = [8, 3], strides = [1, 1]} : vector<8x12xf32> to vector<8x3xf32>
    %cst_44 = arith.constant dense<0.000000e+00> : vector<8xf32>
    %131 = vector.multi_reduction <add>, %130, %cst_44 [1] : vector<8x3xf32> to vector<8xf32>
    %132 = vector.shape_cast %131 : vector<8xf32> to vector<8x1xf32>
    %133 = vector.extract_strided_slice %129 {offsets = [0, 3], sizes = [8, 3], strides = [1, 1]} : vector<8x12xf32> to vector<8x3xf32>
    %cst_45 = arith.constant dense<0.000000e+00> : vector<8xf32>
    %134 = vector.multi_reduction <add>, %133, %cst_45 [1] : vector<8x3xf32> to vector<8xf32>
    %135 = vector.shape_cast %134 : vector<8xf32> to vector<8x1xf32>
    %136 = vector.extract_strided_slice %129 {offsets = [0, 6], sizes = [8, 3], strides = [1, 1]} : vector<8x12xf32> to vector<8x3xf32>
    %cst_46 = arith.constant dense<0.000000e+00> : vector<8xf32>
    %137 = vector.multi_reduction <add>, %136, %cst_46 [1] : vector<8x3xf32> to vector<8xf32>
    %138 = vector.shape_cast %137 : vector<8xf32> to vector<8x1xf32>
    %139 = vector.extract_strided_slice %129 {offsets = [0, 9], sizes = [8, 3], strides = [1, 1]} : vector<8x12xf32> to vector<8x3xf32>
    %cst_47 = arith.constant dense<0.000000e+00> : vector<8xf32>
    %140 = vector.multi_reduction <add>, %139, %cst_47 [1] : vector<8x3xf32> to vector<8xf32>
    %141 = vector.shape_cast %140 : vector<8xf32> to vector<8x1xf32>
    %142 = tpu.concatenate %132, %135, %138, %141 in 1 : vector<8x1xf32>, vector<8x1xf32>, vector<8x1xf32>, vector<8x1xf32> -> vector<8x4xf32>
    %cst_48 = arith.constant dense<0.000000e+00> : vector<4xf32>
    %143 = vector.multi_reduction <add>, %142, %cst_48 [0] : vector<8x4xf32> to vector<4xf32>
    %144 = vector.shape_cast %143 : vector<4xf32> to vector<1x4xf32>
    %cst_49 = arith.constant 0.333333343 : f32
    %145 = vector.broadcast %cst_49 : f32 to vector<1x4xf32>
    %146 = arith.mulf %144, %145 : vector<1x4xf32>
    %147 = tpu.concatenate %123, %126, %146 in 1 : vector<1x8xf32>, vector<1x8xf32>, vector<1x4xf32> -> vector<1x20xf32>
    %c0_50 = arith.constant 0 : index
    %c0_51 = arith.constant 0 : index
    %c0_52 = arith.constant 0 : index
    %148 = vector.load %arg10[%c0_50, %c0_51, %c0_52] : memref<1x1x20xf32, #tpu.memory_space<vmem>>, vector<1x1x20xf32>
    %149 = vector.shape_cast %148 : vector<1x1x20xf32> to vector<1x20xf32>
    %150 = vector.shape_cast %147 : vector<1x20xf32> to vector<1x1x20xf32>
    tpu.vector_store %arg10[%c0_50, %c0_51, %c0_52], %150 {strides = array<i32>} : memref<1x1x20xf32, #tpu.memory_space<vmem>>, vector<1x1x20xf32>,
    return
  }
  func.func @transform_0(%arg0: i32) -> (i32, i32, i32) {
    %c0_i32 = arith.constant 0 : i32
    %c0_i32_0 = arith.constant 0 : i32
    %c0_i32_1 = arith.constant 0 : i32
    return %arg0, %c0_i32, %c0_i32_0 : i32, i32, i32
  }
  func.func @transform_1(%arg0: i32) -> (i32, i32, i32) {
    %c0_i32 = arith.constant 0 : i32
    %c0_i32_0 = arith.constant 0 : i32
    %c0_i32_1 = arith.constant 0 : i32
    return %arg0, %c0_i32, %c0_i32_0 : i32, i32, i32
  }
  func.func @transform_2(%arg0: i32) -> (i32, i32) {
    %c0_i32 = arith.constant 0 : i32
    %c0_i32_0 = arith.constant 0 : i32
    %c0_i32_1 = arith.constant 0 : i32
    return %c0_i32, %c0_i32_0 : i32, i32
  }
  func.func @transform_3(%arg0: i32) -> (i32, i32) {
    %c0_i32 = arith.constant 0 : i32
    %c0_i32_0 = arith.constant 0 : i32
    %c0_i32_1 = arith.constant 0 : i32
    return %c0_i32, %c0_i32_0 : i32, i32
  }
  func.func @transform_4(%arg0: i32) -> (i32, i32) {
    %c0_i32 = arith.constant 0 : i32
    %c0_i32_0 = arith.constant 0 : i32
    %c0_i32_1 = arith.constant 0 : i32
    return %c0_i32, %c0_i32_0 : i32, i32
  }
  func.func @transform_5(%arg0: i32) -> (i32, i32) {
    %c0_i32 = arith.constant 0 : i32
    %c0_i32_0 = arith.constant 0 : i32
    %c0_i32_1 = arith.constant 0 : i32
    return %c0_i32, %c0_i32_0 : i32, i32
  }
  func.func @transform_6(%arg0: i32) -> (i32, i32) {
    %c0_i32 = arith.constant 0 : i32
    %c0_i32_0 = arith.constant 0 : i32
    %c0_i32_1 = arith.constant 0 : i32
    return %c0_i32, %c0_i32_0 : i32, i32
  }
  func.func @transform_7(%arg0: i32) -> (i32, i32) {
    %c0_i32 = arith.constant 0 : i32
    %c0_i32_0 = arith.constant 0 : i32
    %c0_i32_1 = arith.constant 0 : i32
    return %c0_i32, %c0_i32_0 : i32, i32
  }
  func.func @transform_8(%arg0: i32) -> (i32, i32, i32) {
    %c0_i32 = arith.constant 0 : i32
    %c0_i32_0 = arith.constant 0 : i32
    %c0_i32_1 = arith.constant 0 : i32
    return %arg0, %c0_i32, %c0_i32_0 : i32, i32, i32
  }
  func.func @transform_9(%arg0: i32) -> (i32, i32, i32) {
    %c0_i32 = arith.constant 0 : i32
    %c0_i32_0 = arith.constant 0 : i32
    %c0_i32_1 = arith.constant 0 : i32
    return %arg0, %c0_i32, %c0_i32_0 : i32, i32, i32
  }
}

module attributes {stable_mosaic.version = 11 : i64} {
  func.func @_layer1_kernel(%arg0: i32, %arg1: memref<1x8x20xf32, #tpu.memory_space<vmem>>, %arg2: memref<2x1x20xf32, #tpu.memory_space<vmem>>, %arg3: memref<1x8x3xf32, #tpu.memory_space<vmem>>, %arg4: memref<3x16xf32, #tpu.memory_space<vmem>>, %arg5: memref<1x16xf32, #tpu.memory_space<vmem>>, %arg6: memref<16x16xf32, #tpu.memory_space<vmem>>, %arg7: memref<1x16xf32, #tpu.memory_space<vmem>>, %arg8: memref<16x16xf32, #tpu.memory_space<vmem>>, %arg9: memref<1x16xf32, #tpu.memory_space<vmem>>, %arg10: memref<1x8x2xf32, #tpu.memory_space<vmem>>) attributes {dimension_semantics = [#tpu.dimension_semantics<parallel>], iteration_bounds = array<i64: 2>, scalar_prefetch = 0 : i64, scratch_operands = 0 : i64, tpu.core_type = #tpu.core_type<tc>, window_params = [{transform_indices = @transform_0, window_bounds = array<i64: 1, 8, 20>}, {pipeline_mode = #tpu.pipeline_mode<synchronous>, transform_indices = @transform_1, window_bounds = array<i64: 2, 1, 20>}, {transform_indices = @transform_2, window_bounds = array<i64: 1, 8, 3>}, {pipeline_mode = #tpu.pipeline_mode<synchronous>, transform_indices = @transform_3, window_bounds = array<i64: 3, 16>}, {pipeline_mode = #tpu.pipeline_mode<synchronous>, transform_indices = @transform_4, window_bounds = array<i64: 1, 16>}, {pipeline_mode = #tpu.pipeline_mode<synchronous>, transform_indices = @transform_5, window_bounds = array<i64: 16, 16>}, {pipeline_mode = #tpu.pipeline_mode<synchronous>, transform_indices = @transform_6, window_bounds = array<i64: 1, 16>}, {pipeline_mode = #tpu.pipeline_mode<synchronous>, transform_indices = @transform_7, window_bounds = array<i64: 16, 16>}, {pipeline_mode = #tpu.pipeline_mode<synchronous>, transform_indices = @transform_8, window_bounds = array<i64: 1, 16>}, {transform_indices = @transform_9, window_bounds = array<i64: 1, 8, 2>}]} {
    %c0 = arith.constant 0 : index
    %c0_0 = arith.constant 0 : index
    %c0_1 = arith.constant 0 : index
    %0 = vector.load %arg1[%c0, %c0_0, %c0_1] : memref<1x8x20xf32, #tpu.memory_space<vmem>>, vector<1x8x20xf32>
    %1 = vector.shape_cast %0 : vector<1x8x20xf32> to vector<8x20xf32>
    %c0_2 = arith.constant 0 : index
    %c0_3 = arith.constant 0 : index
    %c0_4 = arith.constant 0 : index
    %2 = vector.load %arg3[%c0_2, %c0_3, %c0_4] : memref<1x8x3xf32, #tpu.memory_space<vmem>>, vector<1x8x3xf32>
    %3 = vector.shape_cast %2 : vector<1x8x3xf32> to vector<8x3xf32>
    %c0_5 = arith.constant 0 : index
    %c0_6 = arith.constant 0 : index
    %c0_7 = arith.constant 0 : index
    %4 = vector.load %arg2[%c0_5, %c0_6, %c0_7] : memref<2x1x20xf32, #tpu.memory_space<vmem>>, vector<2x1x20xf32>
    %cst = arith.constant dense<0.000000e+00> : vector<1x20xf32>
    %5 = vector.multi_reduction <add>, %4, %cst [0] : vector<2x1x20xf32> to vector<1x20xf32>
    %6 = vector.extract_strided_slice %5 {offsets = [0, 0], sizes = [1, 8], strides = [1, 1]} : vector<1x20xf32> to vector<1x8xf32>
    %cst_8 = arith.constant 6.250000e-02 : f32
    %7 = vector.broadcast %cst_8 : f32 to vector<1x8xf32>
    %8 = arith.mulf %6, %7 : vector<1x8xf32>
    %9 = vector.extract_strided_slice %5 {offsets = [0, 8], sizes = [1, 8], strides = [1, 1]} : vector<1x20xf32> to vector<1x8xf32>
    %cst_9 = arith.constant 6.250000e-02 : f32
    %10 = vector.broadcast %cst_9 : f32 to vector<1x8xf32>
    %11 = arith.mulf %9, %10 : vector<1x8xf32>
    %12 = arith.mulf %8, %8 : vector<1x8xf32>
    %13 = arith.subf %11, %12 : vector<1x8xf32>
    %cst_10 = arith.constant 9.99999974E-6 : f32
    %14 = vector.broadcast %cst_10 : f32 to vector<1x8xf32>
    %15 = arith.addf %13, %14 : vector<1x8xf32>
    %16 = math.rsqrt %15 : vector<1x8xf32>
    %17 = vector.extract_strided_slice %5 {offsets = [0, 16], sizes = [1, 4], strides = [1, 1]} : vector<1x20xf32> to vector<1x4xf32>
    %cst_11 = arith.constant 6.250000e-02 : f32
    %18 = vector.broadcast %cst_11 : f32 to vector<1x4xf32>
    %19 = arith.mulf %17, %18 : vector<1x4xf32>
    %cst_12 = arith.constant 9.99999974E-6 : f32
    %20 = vector.broadcast %cst_12 : f32 to vector<1x4xf32>
    %21 = arith.addf %19, %20 : vector<1x4xf32>
    %22 = math.rsqrt %21 : vector<1x4xf32>
    %23 = vector.extract_strided_slice %1 {offsets = [0, 0], sizes = [8, 8], strides = [1, 1]} : vector<8x20xf32> to vector<8x8xf32>
    %24 = vector.broadcast %8 : vector<1x8xf32> to vector<8x8xf32>
    %25 = arith.subf %23, %24 : vector<8x8xf32>
    %26 = vector.broadcast %16 : vector<1x8xf32> to vector<8x8xf32>
    %27 = arith.mulf %25, %26 : vector<8x8xf32>
    %28 = vector.extract_strided_slice %27 {offsets = [0, 0], sizes = [8, 4], strides = [1, 1]} : vector<8x8xf32> to vector<8x4xf32>
    %29 = vector.extract_strided_slice %27 {offsets = [0, 0], sizes = [8, 4], strides = [1, 1]} : vector<8x8xf32> to vector<8x4xf32>
    %cst_13 = arith.constant 0.000000e+00 : f32
    %30 = vector.broadcast %cst_13 : f32 to vector<8x4xf32>
    %31 = arith.subf %30, %29 : vector<8x4xf32>
    %32 = math.exp %31 : vector<8x4xf32>
    %cst_14 = arith.constant 1.000000e+00 : f32
    %33 = vector.broadcast %cst_14 : f32 to vector<8x4xf32>
    %34 = arith.addf %33, %32 : vector<8x4xf32>
    %cst_15 = arith.constant 1.000000e+00 : f32
    %35 = vector.broadcast %cst_15 : f32 to vector<8x4xf32>
    %36 = arith.divf %35, %34 : vector<8x4xf32>
    %37 = arith.mulf %28, %36 : vector<8x4xf32>
    %38 = vector.extract_strided_slice %27 {offsets = [0, 4], sizes = [8, 4], strides = [1, 1]} : vector<8x8xf32> to vector<8x4xf32>
    %cst_16 = arith.constant 0.000000e+00 : f32
    %39 = vector.broadcast %cst_16 : f32 to vector<8x4xf32>
    %40 = arith.subf %39, %38 : vector<8x4xf32>
    %41 = math.exp %40 : vector<8x4xf32>
    %cst_17 = arith.constant 1.000000e+00 : f32
    %42 = vector.broadcast %cst_17 : f32 to vector<8x4xf32>
    %43 = arith.addf %42, %41 : vector<8x4xf32>
    %cst_18 = arith.constant 1.000000e+00 : f32
    %44 = vector.broadcast %cst_18 : f32 to vector<8x4xf32>
    %45 = arith.divf %44, %43 : vector<8x4xf32>
    %46 = vector.extract_strided_slice %1 {offsets = [0, 8], sizes = [8, 3], strides = [1, 1]} : vector<8x20xf32> to vector<8x3xf32>
    %47 = vector.extract_strided_slice %22 {offsets = [0, 0], sizes = [1, 1], strides = [1, 1]} : vector<1x4xf32> to vector<1x1xf32>
    %48 = vector.extract_strided_slice %45 {offsets = [0, 0], sizes = [8, 1], strides = [1, 1]} : vector<8x4xf32> to vector<8x1xf32>
    %49 = vector.broadcast %47 : vector<1x1xf32> to vector<8x1xf32>
    %50 = arith.mulf %49, %48 : vector<8x1xf32>
    %51 = vector.broadcast %50 : vector<8x1xf32> to vector<8x3xf32>
    %52 = arith.mulf %46, %51 : vector<8x3xf32>
    %53 = vector.extract_strided_slice %1 {offsets = [0, 11], sizes = [8, 3], strides = [1, 1]} : vector<8x20xf32> to vector<8x3xf32>
    %54 = vector.extract_strided_slice %22 {offsets = [0, 1], sizes = [1, 1], strides = [1, 1]} : vector<1x4xf32> to vector<1x1xf32>
    %55 = vector.extract_strided_slice %45 {offsets = [0, 1], sizes = [8, 1], strides = [1, 1]} : vector<8x4xf32> to vector<8x1xf32>
    %56 = vector.broadcast %54 : vector<1x1xf32> to vector<8x1xf32>
    %57 = arith.mulf %56, %55 : vector<8x1xf32>
    %58 = vector.broadcast %57 : vector<8x1xf32> to vector<8x3xf32>
    %59 = arith.mulf %53, %58 : vector<8x3xf32>
    %60 = vector.extract_strided_slice %1 {offsets = [0, 14], sizes = [8, 3], strides = [1, 1]} : vector<8x20xf32> to vector<8x3xf32>
    %61 = vector.extract_strided_slice %22 {offsets = [0, 2], sizes = [1, 1], strides = [1, 1]} : vector<1x4xf32> to vector<1x1xf32>
    %62 = vector.extract_strided_slice %45 {offsets = [0, 2], sizes = [8, 1], strides = [1, 1]} : vector<8x4xf32> to vector<8x1xf32>
    %63 = vector.broadcast %61 : vector<1x1xf32> to vector<8x1xf32>
    %64 = arith.mulf %63, %62 : vector<8x1xf32>
    %65 = vector.broadcast %64 : vector<8x1xf32> to vector<8x3xf32>
    %66 = arith.mulf %60, %65 : vector<8x3xf32>
    %67 = vector.extract_strided_slice %1 {offsets = [0, 17], sizes = [8, 3], strides = [1, 1]} : vector<8x20xf32> to vector<8x3xf32>
    %68 = vector.extract_strided_slice %22 {offsets = [0, 3], sizes = [1, 1], strides = [1, 1]} : vector<1x4xf32> to vector<1x1xf32>
    %69 = vector.extract_strided_slice %45 {offsets = [0, 3], sizes = [8, 1], strides = [1, 1]} : vector<8x4xf32> to vector<8x1xf32>
    %70 = vector.broadcast %68 : vector<1x1xf32> to vector<8x1xf32>
    %71 = arith.mulf %70, %69 : vector<8x1xf32>
    %72 = vector.broadcast %71 : vector<8x1xf32> to vector<8x3xf32>
    %73 = arith.mulf %67, %72 : vector<8x3xf32>
    %74 = vector.shape_cast %3 : vector<8x3xf32> to vector<1x8x3xf32>
    %75 = vector.shape_cast %3 : vector<8x3xf32> to vector<8x1x3xf32>
    %76 = vector.broadcast %74 : vector<1x8x3xf32> to vector<8x8x3xf32>
    %77 = vector.broadcast %75 : vector<8x1x3xf32> to vector<8x8x3xf32>
    %78 = arith.subf %76, %77 : vector<8x8x3xf32>
    %79 = arith.mulf %78, %78 : vector<8x8x3xf32>
    %cst_19 = arith.constant dense<0.000000e+00> : vector<8x8xf32>
    %80 = vector.multi_reduction <add>, %79, %cst_19 [2] : vector<8x8x3xf32> to vector<8x8xf32>
    %81 = vector.shape_cast %80 : vector<8x8xf32> to vector<8x8x1xf32>
    %82 = math.sqrt %81 : vector<8x8x1xf32>
    %cst_20 = arith.constant 9.99999971E-10 : f32
    %83 = vector.broadcast %cst_20 : f32 to vector<8x8x1xf32>
    %84 = arith.cmpf ogt, %82, %83 : vector<8x8x1xf32>
    %cst_21 = arith.constant 9.99999971E-10 : f32
    %85 = vector.broadcast %cst_21 : f32 to vector<8x8x1xf32>
    %86 = arith.maximumf %82, %85 : vector<8x8x1xf32>
    %87 = vector.broadcast %86 : vector<8x8x1xf32> to vector<8x8x3xf32>
    %88 = arith.divf %78, %87 : vector<8x8x3xf32>
    %cst_22 = arith.constant 0.000000e+00 : f32
    %89 = vector.shape_cast %84 : vector<8x8x1xi1> to vector<8x8x1xi1>
    %90 = vector.broadcast %89 : vector<8x8x1xi1> to vector<8x8x3xi1>
    %91 = vector.broadcast %cst_22 : f32 to vector<8x8x3xf32>
    %92 = arith.select %90, %88, %91 : vector<8x8x3xi1>, vector<8x8x3xf32>
    %93 = vector.extract_strided_slice %92 {offsets = [0, 0, 1], sizes = [8, 8, 1], strides = [1, 1, 1]} : vector<8x8x3xf32> to vector<8x8x1xf32>
    %94 = vector.extract_strided_slice %92 {offsets = [0, 0, 2], sizes = [8, 8, 1], strides = [1, 1, 1]} : vector<8x8x3xf32> to vector<8x8x1xf32>
    %95 = vector.extract_strided_slice %92 {offsets = [0, 0, 0], sizes = [8, 8, 1], strides = [1, 1, 1]} : vector<8x8x3xf32> to vector<8x8x1xf32>
    %96 = tpu.concatenate %93, %94, %95 in 2 : vector<8x8x1xf32>, vector<8x8x1xf32>, vector<8x8x1xf32> -> vector<8x8x3xf32>
    %cst_23 = arith.constant 1.73205078 : f32
    %97 = vector.broadcast %cst_23 : f32 to vector<8x8x3xf32>
    %98 = arith.mulf %97, %96 : vector<8x8x3xf32>
    %99 = tpu.iota {dimensions = array<i32: 2>} : vector<8x8x3xi32>
    %100 = arith.sitofp %99 : vector<8x8x3xi32> to vector<8x8x3xf32>
    %cst_24 = arith.constant 5.000000e-01 : f32
    %101 = vector.broadcast %cst_24 : f32 to vector<8x8x3xf32>
    %102 = arith.mulf %100, %101 : vector<8x8x3xf32>
    %103 = vector.broadcast %82 : vector<8x8x1xf32> to vector<8x8x3xf32>
    %104 = arith.subf %103, %102 : vector<8x8x3xf32>
    %cst_25 = arith.constant 4.000000e-01 : f32
    %105 = vector.broadcast %cst_25 : f32 to vector<8x8x3xf32>
    %106 = arith.divf %104, %105 : vector<8x8x3xf32>
    %107 = arith.mulf %106, %106 : vector<8x8x3xf32>
    %cst_26 = arith.constant 0.000000e+00 : f32
    %108 = vector.broadcast %cst_26 : f32 to vector<8x8x3xf32>
    %109 = arith.subf %108, %107 : vector<8x8x3xf32>
    %110 = math.exp %109 : vector<8x8x3xf32>
    %111 = vector.shape_cast %110 : vector<8x8x3xf32> to vector<64x3xf32>
    %c0_27 = arith.constant 0 : index
    %c0_28 = arith.constant 0 : index
    %112 = vector.load %arg4[%c0_27, %c0_28] : memref<3x16xf32, #tpu.memory_space<vmem>>, vector<3x16xf32>
    %c0_29 = arith.constant 0 : index
    %c0_30 = arith.constant 0 : index
    %113 = vector.load %arg5[%c0_29, %c0_30] : memref<1x16xf32, #tpu.memory_space<vmem>>, vector<1x16xf32>
    %c0_31 = arith.constant 0 : index
    %c0_32 = arith.constant 0 : index
    %114 = vector.load %arg6[%c0_31, %c0_32] : memref<16x16xf32, #tpu.memory_space<vmem>>, vector<16x16xf32>
    %c0_33 = arith.constant 0 : index
    %c0_34 = arith.constant 0 : index
    %115 = vector.load %arg7[%c0_33, %c0_34] : memref<1x16xf32, #tpu.memory_space<vmem>>, vector<1x16xf32>
    %c0_35 = arith.constant 0 : index
    %c0_36 = arith.constant 0 : index
    %116 = vector.load %arg8[%c0_35, %c0_36] : memref<16x16xf32, #tpu.memory_space<vmem>>, vector<16x16xf32>
    %c0_37 = arith.constant 0 : index
    %c0_38 = arith.constant 0 : index
    %117 = vector.load %arg9[%c0_37, %c0_38] : memref<1x16xf32, #tpu.memory_space<vmem>>, vector<1x16xf32>
    %cst_39 = arith.constant dense<0.000000e+00> : vector<64x16xf32>
    %118 = tpu.matmul %111, %112, %cst_39 {dimension_numbers = #tpu.dot_dimension_numbers<[1], [0], [0], [1], [0, 0, 1, 1], [], []>} : vector<64x3xf32>, vector<3x16xf32>, vector<64x16xf32> -> vector<64x16xf32>
    %119 = vector.broadcast %113 : vector<1x16xf32> to vector<64x16xf32>
    %120 = arith.addf %118, %119 : vector<64x16xf32>
    %cst_40 = arith.constant 0.000000e+00 : f32
    %121 = vector.broadcast %cst_40 : f32 to vector<64x16xf32>
    %122 = arith.subf %121, %120 : vector<64x16xf32>
    %123 = math.exp %122 : vector<64x16xf32>
    %cst_41 = arith.constant 1.000000e+00 : f32
    %124 = vector.broadcast %cst_41 : f32 to vector<64x16xf32>
    %125 = arith.addf %124, %123 : vector<64x16xf32>
    %cst_42 = arith.constant 1.000000e+00 : f32
    %126 = vector.broadcast %cst_42 : f32 to vector<64x16xf32>
    %127 = arith.divf %126, %125 : vector<64x16xf32>
    %128 = arith.mulf %120, %127 : vector<64x16xf32>
    %cst_43 = arith.constant dense<0.000000e+00> : vector<64x16xf32>
    %129 = tpu.matmul %128, %114, %cst_43 {dimension_numbers = #tpu.dot_dimension_numbers<[1], [0], [0], [1], [0, 0, 1, 1], [], []>} : vector<64x16xf32>, vector<16x16xf32>, vector<64x16xf32> -> vector<64x16xf32>
    %130 = vector.broadcast %115 : vector<1x16xf32> to vector<64x16xf32>
    %131 = arith.addf %129, %130 : vector<64x16xf32>
    %cst_44 = arith.constant 0.000000e+00 : f32
    %132 = vector.broadcast %cst_44 : f32 to vector<64x16xf32>
    %133 = arith.subf %132, %131 : vector<64x16xf32>
    %134 = math.exp %133 : vector<64x16xf32>
    %cst_45 = arith.constant 1.000000e+00 : f32
    %135 = vector.broadcast %cst_45 : f32 to vector<64x16xf32>
    %136 = arith.addf %135, %134 : vector<64x16xf32>
    %cst_46 = arith.constant 1.000000e+00 : f32
    %137 = vector.broadcast %cst_46 : f32 to vector<64x16xf32>
    %138 = arith.divf %137, %136 : vector<64x16xf32>
    %139 = arith.mulf %131, %138 : vector<64x16xf32>
    %cst_47 = arith.constant dense<0.000000e+00> : vector<64x16xf32>
    %140 = tpu.matmul %139, %116, %cst_47 {dimension_numbers = #tpu.dot_dimension_numbers<[1], [0], [0], [1], [0, 0, 1, 1], [], []>} : vector<64x16xf32>, vector<16x16xf32>, vector<64x16xf32> -> vector<64x16xf32>
    %141 = vector.broadcast %117 : vector<1x16xf32> to vector<64x16xf32>
    %142 = arith.addf %140, %141 : vector<64x16xf32>
    %143 = vector.shape_cast %142 : vector<64x16xf32> to vector<8x8x16xf32>
    %144 = vector.extract_strided_slice %143 {offsets = [0, 0, 0], sizes = [8, 8, 2], strides = [1, 1, 1]} : vector<8x8x16xf32> to vector<8x8x2xf32>
    %145 = vector.extract_strided_slice %37 {offsets = [0, 0], sizes = [8, 1], strides = [1, 1]} : vector<8x4xf32> to vector<8x1xf32>
    %146 = vector.shape_cast %145 : vector<8x1xf32> to vector<1x8x1xf32>
    %147 = vector.broadcast %146 : vector<1x8x1xf32> to vector<8x8x2xf32>
    %148 = arith.mulf %144, %147 : vector<8x8x2xf32>
    %149 = vector.extract_strided_slice %143 {offsets = [0, 0, 2], sizes = [8, 8, 2], strides = [1, 1, 1]} : vector<8x8x16xf32> to vector<8x8x2xf32>
    %150 = vector.extract_strided_slice %37 {offsets = [0, 1], sizes = [8, 1], strides = [1, 1]} : vector<8x4xf32> to vector<8x1xf32>
    %151 = vector.shape_cast %150 : vector<8x1xf32> to vector<1x8x1xf32>
    %152 = vector.broadcast %151 : vector<1x8x1xf32> to vector<8x8x2xf32>
    %153 = arith.mulf %149, %152 : vector<8x8x2xf32>
    %154 = arith.addf %148, %153 : vector<8x8x2xf32>
    %155 = vector.extract_strided_slice %143 {offsets = [0, 0, 4], sizes = [8, 8, 2], strides = [1, 1, 1]} : vector<8x8x16xf32> to vector<8x8x2xf32>
    %156 = vector.extract_strided_slice %37 {offsets = [0, 2], sizes = [8, 1], strides = [1, 1]} : vector<8x4xf32> to vector<8x1xf32>
    %157 = vector.shape_cast %156 : vector<8x1xf32> to vector<1x8x1xf32>
    %158 = vector.broadcast %157 : vector<1x8x1xf32> to vector<8x8x2xf32>
    %159 = arith.mulf %155, %158 : vector<8x8x2xf32>
    %160 = arith.addf %154, %159 : vector<8x8x2xf32>
    %161 = vector.extract_strided_slice %143 {offsets = [0, 0, 6], sizes = [8, 8, 2], strides = [1, 1, 1]} : vector<8x8x16xf32> to vector<8x8x2xf32>
    %162 = vector.extract_strided_slice %37 {offsets = [0, 3], sizes = [8, 1], strides = [1, 1]} : vector<8x4xf32> to vector<8x1xf32>
    %163 = vector.shape_cast %162 : vector<8x1xf32> to vector<1x8x1xf32>
    %164 = vector.broadcast %163 : vector<1x8x1xf32> to vector<8x8x2xf32>
    %165 = arith.mulf %161, %164 : vector<8x8x2xf32>
    %166 = arith.addf %160, %165 : vector<8x8x2xf32>
    %167 = vector.shape_cast %52 : vector<8x3xf32> to vector<1x8x3xf32>
    %168 = vector.broadcast %167 : vector<1x8x3xf32> to vector<8x8x3xf32>
    %169 = arith.mulf %98, %168 : vector<8x8x3xf32>
    %cst_48 = arith.constant dense<0.000000e+00> : vector<8x8xf32>
    %170 = vector.multi_reduction <add>, %169, %cst_48 [2] : vector<8x8x3xf32> to vector<8x8xf32>
    %171 = vector.shape_cast %170 : vector<8x8xf32> to vector<8x8x1xf32>
    %172 = vector.extract_strided_slice %143 {offsets = [0, 0, 8], sizes = [8, 8, 2], strides = [1, 1, 1]} : vector<8x8x16xf32> to vector<8x8x2xf32>
    %173 = vector.broadcast %171 : vector<8x8x1xf32> to vector<8x8x2xf32>
    %174 = arith.mulf %172, %173 : vector<8x8x2xf32>
    %175 = arith.addf %166, %174 : vector<8x8x2xf32>
    %176 = vector.shape_cast %59 : vector<8x3xf32> to vector<1x8x3xf32>
    %177 = vector.broadcast %176 : vector<1x8x3xf32> to vector<8x8x3xf32>
    %178 = arith.mulf %98, %177 : vector<8x8x3xf32>
    %cst_49 = arith.constant dense<0.000000e+00> : vector<8x8xf32>
    %179 = vector.multi_reduction <add>, %178, %cst_49 [2] : vector<8x8x3xf32> to vector<8x8xf32>
    %180 = vector.shape_cast %179 : vector<8x8xf32> to vector<8x8x1xf32>
    %181 = vector.extract_strided_slice %143 {offsets = [0, 0, 10], sizes = [8, 8, 2], strides = [1, 1, 1]} : vector<8x8x16xf32> to vector<8x8x2xf32>
    %182 = vector.broadcast %180 : vector<8x8x1xf32> to vector<8x8x2xf32>
    %183 = arith.mulf %181, %182 : vector<8x8x2xf32>
    %184 = arith.addf %175, %183 : vector<8x8x2xf32>
    %185 = vector.shape_cast %66 : vector<8x3xf32> to vector<1x8x3xf32>
    %186 = vector.broadcast %185 : vector<1x8x3xf32> to vector<8x8x3xf32>
    %187 = arith.mulf %98, %186 : vector<8x8x3xf32>
    %cst_50 = arith.constant dense<0.000000e+00> : vector<8x8xf32>
    %188 = vector.multi_reduction <add>, %187, %cst_50 [2] : vector<8x8x3xf32> to vector<8x8xf32>
    %189 = vector.shape_cast %188 : vector<8x8xf32> to vector<8x8x1xf32>
    %190 = vector.extract_strided_slice %143 {offsets = [0, 0, 12], sizes = [8, 8, 2], strides = [1, 1, 1]} : vector<8x8x16xf32> to vector<8x8x2xf32>
    %191 = vector.broadcast %189 : vector<8x8x1xf32> to vector<8x8x2xf32>
    %192 = arith.mulf %190, %191 : vector<8x8x2xf32>
    %193 = arith.addf %184, %192 : vector<8x8x2xf32>
    %194 = vector.shape_cast %73 : vector<8x3xf32> to vector<1x8x3xf32>
    %195 = vector.broadcast %194 : vector<1x8x3xf32> to vector<8x8x3xf32>
    %196 = arith.mulf %98, %195 : vector<8x8x3xf32>
    %cst_51 = arith.constant dense<0.000000e+00> : vector<8x8xf32>
    %197 = vector.multi_reduction <add>, %196, %cst_51 [2] : vector<8x8x3xf32> to vector<8x8xf32>
    %198 = vector.shape_cast %197 : vector<8x8xf32> to vector<8x8x1xf32>
    %199 = vector.extract_strided_slice %143 {offsets = [0, 0, 14], sizes = [8, 8, 2], strides = [1, 1, 1]} : vector<8x8x16xf32> to vector<8x8x2xf32>
    %200 = vector.broadcast %198 : vector<8x8x1xf32> to vector<8x8x2xf32>
    %201 = arith.mulf %199, %200 : vector<8x8x2xf32>
    %202 = arith.addf %193, %201 : vector<8x8x2xf32>
    %cst_52 = arith.constant dense<0.000000e+00> : vector<8x2xf32>
    %203 = vector.multi_reduction <add>, %202, %cst_52 [1] : vector<8x8x2xf32> to vector<8x2xf32>
    %cst_53 = arith.constant 0.176776692 : f32
    %204 = vector.broadcast %cst_53 : f32 to vector<8x2xf32>
    %205 = arith.mulf %203, %204 : vector<8x2xf32>
    %c0_54 = arith.constant 0 : index
    %c0_55 = arith.constant 0 : index
    %c0_56 = arith.constant 0 : index
    %206 = vector.load %arg10[%c0_54, %c0_55, %c0_56] : memref<1x8x2xf32, #tpu.memory_space<vmem>>, vector<1x8x2xf32>
    %207 = vector.shape_cast %206 : vector<1x8x2xf32> to vector<8x2xf32>
    %208 = vector.shape_cast %205 : vector<8x2xf32> to vector<1x8x2xf32>
    tpu.vector_store %arg10[%c0_54, %c0_55, %c0_56], %208 {strides = array<i32>} : memref<1x8x2xf32, #tpu.memory_space<vmem>>, vector<1x8x2xf32>,
    return
  }
  func.func @transform_0(%arg0: i32) -> (i32, i32, i32) {
    %c0_i32 = arith.constant 0 : i32
    %c0_i32_0 = arith.constant 0 : i32
    %c0_i32_1 = arith.constant 0 : i32
    return %arg0, %c0_i32, %c0_i32_0 : i32, i32, i32
  }
  func.func @transform_1(%arg0: i32) -> (i32, i32, i32) {
    %c0_i32 = arith.constant 0 : i32
    %c0_i32_0 = arith.constant 0 : i32
    %c0_i32_1 = arith.constant 0 : i32
    %c0_i32_2 = arith.constant 0 : i32
    return %c0_i32, %c0_i32_0, %c0_i32_1 : i32, i32, i32
  }
  func.func @transform_2(%arg0: i32) -> (i32, i32, i32) {
    %c0_i32 = arith.constant 0 : i32
    %c0_i32_0 = arith.constant 0 : i32
    %c0_i32_1 = arith.constant 0 : i32
    return %arg0, %c0_i32, %c0_i32_0 : i32, i32, i32
  }
  func.func @transform_3(%arg0: i32) -> (i32, i32) {
    %c0_i32 = arith.constant 0 : i32
    %c0_i32_0 = arith.constant 0 : i32
    %c0_i32_1 = arith.constant 0 : i32
    return %c0_i32, %c0_i32_0 : i32, i32
  }
  func.func @transform_4(%arg0: i32) -> (i32, i32) {
    %c0_i32 = arith.constant 0 : i32
    %c0_i32_0 = arith.constant 0 : i32
    %c0_i32_1 = arith.constant 0 : i32
    return %c0_i32, %c0_i32_0 : i32, i32
  }
  func.func @transform_5(%arg0: i32) -> (i32, i32) {
    %c0_i32 = arith.constant 0 : i32
    %c0_i32_0 = arith.constant 0 : i32
    %c0_i32_1 = arith.constant 0 : i32
    return %c0_i32, %c0_i32_0 : i32, i32
  }
  func.func @transform_6(%arg0: i32) -> (i32, i32) {
    %c0_i32 = arith.constant 0 : i32
    %c0_i32_0 = arith.constant 0 : i32
    %c0_i32_1 = arith.constant 0 : i32
    return %c0_i32, %c0_i32_0 : i32, i32
  }
  func.func @transform_7(%arg0: i32) -> (i32, i32) {
    %c0_i32 = arith.constant 0 : i32
    %c0_i32_0 = arith.constant 0 : i32
    %c0_i32_1 = arith.constant 0 : i32
    return %c0_i32, %c0_i32_0 : i32, i32
  }
  func.func @transform_8(%arg0: i32) -> (i32, i32) {
    %c0_i32 = arith.constant 0 : i32
    %c0_i32_0 = arith.constant 0 : i32
    %c0_i32_1 = arith.constant 0 : i32
    return %c0_i32, %c0_i32_0 : i32, i32
  }
  func.func @transform_9(%arg0: i32) -> (i32, i32, i32) {
    %c0_i32 = arith.constant 0 : i32
    %c0_i32_0 = arith.constant 0 : i32
    %c0_i32_1 = arith.constant 0 : i32
    return %arg0, %c0_i32, %c0_i32_0 : i32, i32, i32
  }
}

</mosaic_0001>

<llo_original>
// kernel: _lambda_.3
$region0: #{_lambda_.3}
  #allocation0 [shape = 'u32[]', space=smem, size = 0x4, offset = 0x4, fixed_abs, tag = 'smem constant byte address 0x4 - core index']
  #allocation1 [shape = 'u32[72,128]{1,0:T(1,128)}', space=vmem, size = 0x9000, scoped, tag = 'internal scratch']
  %s0 = inlined_call_operand.vmem [shape: f32[2,8,20], index: 0, kind: input, shape index: {}]
  %s1 = inlined_call_operand.vmem [shape: f32[2,1,20], index: 1, kind: input, shape index: {}]
  %s2 = inlined_call_operand.vmem [shape: f32[2,8,3], index: 2, kind: input, shape index: {}]
  %s3 = inlined_call_operand.hbm [shape: f32[3,16], index: 3, kind: input, shape index: {}]
  %s4 = inlined_call_operand.vmem [shape: f32[1,16], index: 4, kind: input, shape index: {}, may-alias: {4,6,8}]
  %s5 = inlined_call_operand.vmem [shape: f32[16,16], index: 5, kind: input, shape index: {}]
  %s6 = inlined_call_operand.vmem [shape: f32[1,16], index: 6, kind: input, shape index: {}, may-alias: {4,6,8}]
  %s7 = inlined_call_operand.vmem [shape: f32[16,16], index: 7, kind: input, shape index: {}]
  %s8 = inlined_call_operand.vmem [shape: f32[1,16], index: 8, kind: input, shape index: {}, may-alias: {4,6,8}]
  %s9 = inlined_call_operand.vmem [shape: f32[2,8,2], index: 9, kind: output, shape index: {}]
  %s10 = sld [smem:[#allocation0]]
  $region73: #{_lambda_.3} parent=0
    _
  %s12 = ssub.s32 1, %s10
  %s13 = scalar_select 0, %s12, %s10
  $region1: #{_lambda_.3} parent=0
    #allocation2 [shape = 'u8[2048]{0}', space=vmem, size = 0x800, scoped, tag = 'input window, operand 3, single buffered']
    #allocation3 [shape = 's32[2]{0}', space=sflag, size = 0x8, scoped, tag = 'scoped memory for _lambda_.3']
    %14 = vsyncpa [#allocation3], 0
    loop: start=0, step=1, limit=4
    $region2: #{_lambda_.3} parent=1 // loop_pre_header
      _
    $region3: #{_lambda_.3} parent=1 // loop_header
      %s16 = sphi 0, %s20
      %p17 = scmp.ge.s32.totalorder %s16, 4
      %s26 = sphi 0, %s28
      %s29 = sphi 0, %s26
      %s30 = sphi 0, %s29
      %s46 = sphi 0, %s30
      %s50 = sphi 0, %s50
      %s52 = sphi 0, %s50
      %s53 = sphi 0, %s52
      %s67 = sphi 0, %s53
      %s73 = sphi 0, %s75
      %s76 = sphi 0, %s73
      %s77 = sphi 0, %s76
      %s93 = sphi 0, %s77
      %s97 = sphi 0, %s97
      %s99 = sphi 0, %s97
      %s100 = sphi 0, %s99
      %s114 = sphi 0, %s100
      %s118 = sphi 0, %s118
      %s120 = sphi 0, %s118
      %s121 = sphi 0, %s120
      %s135 = sphi 0, %s121
      %s139 = sphi 0, %s139
      %s141 = sphi 0, %s139
      %s142 = sphi 0, %s141
      %s156 = sphi 0, %s142
      %s160 = sphi 0, %s160
      %s162 = sphi 0, %s160
      %s163 = sphi 0, %s162
      %s177 = sphi 0, %s163
      %s181 = sphi 0, %s181
      %s183 = sphi 0, %s181
      %s184 = sphi 0, %s183
      %s198 = sphi 0, %s184
      %s202 = sphi 0, %s202
      %s204 = sphi 0, %s202
      %s205 = sphi 0, %s204
      %s219 = sphi 0, %s205
      %s225 = sphi 0, %s227
      %s228 = sphi 0, %s225
      %s229 = sphi 0, %s228
      %s245 = sphi 0, %s229
    $region4: #{_lambda_.3} parent=1 // loop_header_branch
      %19 = sbr.rel (%p17) target = $region8
    $region5: #{_lambda_.3} parent=1 // loop_body
      %s21 = ssub.s32 %s16, 1
      %s22 = ssub.s32 %s16, 2
      %s23 = sadd.s32 %s16, 1
      %s24 = ssub.s32 %s16, %s23
      %p25 = scmp.eq.s32.totalorder %s24, 0
      %s27 = sadd.s32 %s26, 1
      %s28 = scalar_select %p25, %s26, %s27
      %p31 = pneg %p25
      %p32 = scmp.eq.s32.totalorder %s16, 1
      %p33 = por %p31, %p32
      %p34 = scmp.ne.s32.totalorder %s26, %s29
      %p35 = scmp.eq.s32.totalorder %s16, 0
      %p36 = por %p34, %p35
      %p37 = scmp.ne.s32.totalorder %s26, %s29
      %p38 = scmp.eq.s32.totalorder %s21, 1
      %p39 = por %p37, %p38
      %p40 = scmp.ne.s32.totalorder %s29, %s30
      %p41 = scmp.eq.s32.totalorder %s21, 0
      %p42 = por %p40, %p41
      %p43 = scmp.ne.s32.totalorder %s29, %s30
      %p44 = scmp.eq.s32.totalorder %s22, 1
      %p45 = por %p43, %p44
      %p47 = scmp.ne.s32.totalorder %s30, %s46
      %p48 = scmp.eq.s32.totalorder %s22, 0
      %p49 = por %p47, %p48
      %s51 = sadd.s32 %s50, 1
      %p54 = scmp.eq.s32.totalorder %s16, 1
      %p55 = scmp.ne.s32.totalorder %s50, %s52
      %p56 = scmp.eq.s32.totalorder %s16, 0
      %p57 = por %p55, %p56
      %p58 = scmp.ne.s32.totalorder %s50, %s52
      %p59 = scmp.eq.s32.totalorder %s21, 1
      %p60 = por %p58, %p59
      %p61 = scmp.ne.s32.totalorder %s52, %s53
      %p62 = scmp.eq.s32.totalorder %s21, 0
      %p63 = por %p61, %p62
      %p64 = scmp.ne.s32.totalorder %s52, %s53
      %p65 = scmp.eq.s32.totalorder %s22, 1
      %p66 = por %p64, %p65
      %p68 = scmp.ne.s32.totalorder %s53, %s67
      %p69 = scmp.eq.s32.totalorder %s22, 0
      %p70 = por %p68, %p69
      %s71 = ssub.s32 %s16, %s23
      %p72 = scmp.eq.s32.totalorder %s71, 0
      %s74 = sadd.s32 %s73, 1
      %s75 = scalar_select %p72, %s73, %s74
      %p78 = pneg %p72
      %p79 = scmp.eq.s32.totalorder %s16, 1
      %p80 = por %p78, %p79
      %p81 = scmp.ne.s32.totalorder %s73, %s76
      %p82 = scmp.eq.s32.totalorder %s16, 0
      %p83 = por %p81, %p82
      %p84 = scmp.ne.s32.totalorder %s73, %s76
      %p85 = scmp.eq.s32.totalorder %s21, 1
      %p86 = por %p84, %p85
      %p87 = scmp.ne.s32.totalorder %s76, %s77
      %p88 = scmp.eq.s32.totalorder %s21, 0
      %p89 = por %p87, %p88
      %p90 = scmp.ne.s32.totalorder %s76, %s77
      %p91 = scmp.eq.s32.totalorder %s22, 1
      %p92 = por %p90, %p91
      %p94 = scmp.ne.s32.totalorder %s77, %s93
      %p95 = scmp.eq.s32.totalorder %s22, 0
      %p96 = por %p94, %p95
      %s98 = sadd.s32 %s97, 1
      %p101 = scmp.eq.s32.totalorder %s16, 1
      %p102 = scmp.ne.s32.totalorder %s97, %s99
      %p103 = scmp.eq.s32.totalorder %s16, 0
      %p104 = por %p102, %p103
      %p105 = scmp.ne.s32.totalorder %s97, %s99
      %p106 = scmp.eq.s32.totalorder %s21, 1
      %p107 = por %p105, %p106
      %p108 = scmp.ne.s32.totalorder %s99, %s100
      %p109 = scmp.eq.s32.totalorder %s21, 0
      %p110 = por %p108, %p109
      %p111 = scmp.ne.s32.totalorder %s99, %s100
      %p112 = scmp.eq.s32.totalorder %s22, 1
      %p113 = por %p111, %p112
      %p115 = scmp.ne.s32.totalorder %s100, %s114
      %p116 = scmp.eq.s32.totalorder %s22, 0
      %p117 = por %p115, %p116
      %s119 = sadd.s32 %s118, 1
      %p122 = scmp.eq.s32.totalorder %s16, 1
      %p123 = scmp.ne.s32.totalorder %s118, %s120
      %p124 = scmp.eq.s32.totalorder %s16, 0
      %p125 = por %p123, %p124
      %p126 = scmp.ne.s32.totalorder %s118, %s120
      %p127 = scmp.eq.s32.totalorder %s21, 1
      %p128 = por %p126, %p127
      %p129 = scmp.ne.s32.totalorder %s120, %s121
      %p130 = scmp.eq.s32.totalorder %s21, 0
      %p131 = por %p129, %p130
      %p132 = scmp.ne.s32.totalorder %s120, %s121
      %p133 = scmp.eq.s32.totalorder %s22, 1
      %p134 = por %p132, %p133
      %p136 = scmp.ne.s32.totalorder %s121, %s135
      %p137 = scmp.eq.s32.totalorder %s22, 0
      %p138 = por %p136, %p137
      %s140 = sadd.s32 %s139, 1
      %p143 = scmp.eq.s32.totalorder %s16, 1
      %p144 = scmp.ne.s32.totalorder %s139, %s141
      %p145 = scmp.eq.s32.totalorder %s16, 0
      %p146 = por %p144, %p145
      %p147 = scmp.ne.s32.totalorder %s139, %s141
      %p148 = scmp.eq.s32.totalorder %s21, 1
      %p149 = por %p147, %p148
      %p150 = scmp.ne.s32.totalorder %s141, %s142
      %p151 = scmp.eq.s32.totalorder %s21, 0
      %p152 = por %p150, %p151
      %p153 = scmp.ne.s32.totalorder %s141, %s142
      %p154 = scmp.eq.s32.totalorder %s22, 1
      %p155 = por %p153, %p154
      %p157 = scmp.ne.s32.totalorder %s142, %s156
      %p158 = scmp.eq.s32.totalorder %s22, 0
      %p159 = por %p157, %p158
      %s161 = sadd.s32 %s160, 1
      %p164 = scmp.eq.s32.totalorder %s16, 1
      %p165 = scmp.ne.s32.totalorder %s160, %s162
      %p166 = scmp.eq.s32.totalorder %s16, 0
      %p167 = por %p165, %p166
      %p168 = scmp.ne.s32.totalorder %s160, %s162
      %p169 = scmp.eq.s32.totalorder %s21, 1
      %p170 = por %p168, %p169
      %p171 = scmp.ne.s32.totalorder %s162, %s163
      %p172 = scmp.eq.s32.totalorder %s21, 0
      %p173 = por %p171, %p172
      %p174 = scmp.ne.s32.totalorder %s162, %s163
      %p175 = scmp.eq.s32.totalorder %s22, 1
      %p176 = por %p174, %p175
      %p178 = scmp.ne.s32.totalorder %s163, %s177
      %p179 = scmp.eq.s32.totalorder %s22, 0
      %p180 = por %p178, %p179
      %s182 = sadd.s32 %s181, 1
      %p185 = scmp.eq.s32.totalorder %s16, 1
      %p186 = scmp.ne.s32.totalorder %s181, %s183
      %p187 = scmp.eq.s32.totalorder %s16, 0
      %p188 = por %p186, %p187
      %p189 = scmp.ne.s32.totalorder %s181, %s183
      %p190 = scmp.eq.s32.totalorder %s21, 1
      %p191 = por %p189, %p190
      %p192 = scmp.ne.s32.totalorder %s183, %s184
      %p193 = scmp.eq.s32.totalorder %s21, 0
      %p194 = por %p192, %p193
      %p195 = scmp.ne.s32.totalorder %s183, %s184
      %p196 = scmp.eq.s32.totalorder %s22, 1
      %p197 = por %p195, %p196
      %p199 = scmp.ne.s32.totalorder %s184, %s198
      %p200 = scmp.eq.s32.totalorder %s22, 0
      %p201 = por %p199, %p200
      %s203 = sadd.s32 %s202, 1
      %p206 = scmp.eq.s32.totalorder %s16, 1
      %p207 = scmp.ne.s32.totalorder %s202, %s204
      %p208 = scmp.eq.s32.totalorder %s16, 0
      %p209 = por %p207, %p208
      %p210 = scmp.ne.s32.totalorder %s202, %s204
      %p211 = scmp.eq.s32.totalorder %s21, 1
      %p212 = por %p210, %p211
      %p213 = scmp.ne.s32.totalorder %s204, %s205
      %p214 = scmp.eq.s32.totalorder %s21, 0
      %p215 = por %p213, %p214
      %p216 = scmp.ne.s32.totalorder %s204, %s205
      %p217 = scmp.eq.s32.totalorder %s22, 1
      %p218 = por %p216, %p217
      %p220 = scmp.ne.s32.totalorder %s205, %s219
      %p221 = scmp.eq.s32.totalorder %s22, 0
      %p222 = por %p220, %p221
      %s223 = ssub.s32 %s16, %s23
      %p224 = scmp.eq.s32.totalorder %s223, 0
      %s226 = sadd.s32 %s225, 1
      %s227 = scalar_select %p224, %s225, %s226
      %p230 = pneg %p224
      %p231 = scmp.eq.s32.totalorder %s16, 1
      %p232 = por %p230, %p231
      %p233 = scmp.ne.s32.totalorder %s225, %s228
      %p234 = scmp.eq.s32.totalorder %s16, 0
      %p235 = por %p233, %p234
      %p236 = scmp.ne.s32.totalorder %s225, %s228
      %p237 = scmp.eq.s32.totalorder %s21, 1
      %p238 = por %p236, %p237
      %p239 = scmp.ne.s32.totalorder %s228, %s229
      %p240 = scmp.eq.s32.totalorder %s21, 0
      %p241 = por %p239, %p240
      %p242 = scmp.ne.s32.totalorder %s228, %s229
      %p243 = scmp.eq.s32.totalorder %s22, 1
      %p244 = por %p242, %p243
      %p246 = scmp.ne.s32.totalorder %s229, %s245
      %p247 = scmp.eq.s32.totalorder %s22, 0
      %p248 = por %p246, %p247
      %p249 = scmp.le.s32.totalorder 1, %s16
      %p250 = scmp.lt.s32.totalorder %s16, 3
      %p251 = pnand %p249, %p250
      %p252 = pneg %p251
      // Predicated region
      $region9: #{_lambda_.3} parent=5 // pred_check
        _
      $region10: #{_lambda_.3} parent=5 // pred_check_branch
        %254 = sbr.rel (%p251) target = $region12
      $region11: #{_lambda_.3} parent=5 // pred_region
        %s255 = ssub.s32 %s16, 1
        // Predicated region
        $region13: #{_lambda_.3} parent=11 // pred_check
          %p256 = pneg %p63
        $region14: #{_lambda_.3} parent=11 // pred_check_branch
          %258 = sbr.rel (%p256) target = $region16
        $region15: #{_lambda_.3} parent=11 // pred_region
          _
        $region16: #{_lambda_.3} parent=11 // pred_fallthru
          _
        // Predicated region
        $region17: #{_lambda_.3} parent=11 // pred_check
          %p259 = pneg %p110
        $region18: #{_lambda_.3} parent=11 // pred_check_branch
          %261 = sbr.rel (%p259) target = $region20
        $region19: #{_lambda_.3} parent=11 // pred_region
          %263 = vsyncadd [#allocation3], 0
          %s265 = sshll.u32 %s3, 4
          %s266 = int_to_ptr.hbm [resolvable:$true] %s265
          %s267 = sshll.u32 [#allocation2], 4
          %s268 = int_to_ptr.vmem [resolvable:$true] %s267
          %270 = dma.hbm_to_vmem [thread:$0]  %s266, 64, %s268, [#allocation3]
        $region20: #{_lambda_.3} parent=11 // pred_fallthru
          _
        // Predicated region
        $region21: #{_lambda_.3} parent=11 // pred_check
          %p271 = pneg %p131
        $region22: #{_lambda_.3} parent=11 // pred_check_branch
          %273 = sbr.rel (%p271) target = $region24
        $region23: #{_lambda_.3} parent=11 // pred_region
          _
        $region24: #{_lambda_.3} parent=11 // pred_fallthru
          _
        // Predicated region
        $region25: #{_lambda_.3} parent=11 // pred_check
          %p274 = pneg %p152
        $region26: #{_lambda_.3} parent=11 // pred_check_branch
          %276 = sbr.rel (%p274) target = $region28
        $region27: #{_lambda_.3} parent=11 // pred_region
          _
        $region28: #{_lambda_.3} parent=11 // pred_fallthru
          _
        // Predicated region
        $region29: #{_lambda_.3} parent=11 // pred_check
          %p277 = pneg %p173
        $region30: #{_lambda_.3} parent=11 // pred_check_branch
          %279 = sbr.rel (%p277) target = $region32
        $region31: #{_lambda_.3} parent=11 // pred_region
          _
        $region32: #{_lambda_.3} parent=11 // pred_fallthru
          _
        // Predicated region
        $region33: #{_lambda_.3} parent=11 // pred_check
          %p280 = pneg %p194
        $region34: #{_lambda_.3} parent=11 // pred_check_branch
          %282 = sbr.rel (%p280) target = $region36
        $region35: #{_lambda_.3} parent=11 // pred_region
          _
        $region36: #{_lambda_.3} parent=11 // pred_fallthru
          _
        // Predicated region
        $region37: #{_lambda_.3} parent=11 // pred_check
          %p283 = pneg %p215
        $region38: #{_lambda_.3} parent=11 // pred_check_branch
          %285 = sbr.rel (%p283) target = $region40
        $region39: #{_lambda_.3} parent=11 // pred_region
          _
        $region40: #{_lambda_.3} parent=11 // pred_fallthru
          _
      $region12: #{_lambda_.3} parent=5 // pred_fallthru
        _
      %p286 = scmp.lt.s32.totalorder %s16, 2
      // Predicated region
      $region41: #{_lambda_.3} parent=5 // pred_check
        %p287 = pneg %p286
      $region42: #{_lambda_.3} parent=5 // pred_check_branch
        %289 = sbr.rel (%p287) target = $region44
      $region43: #{_lambda_.3} parent=5 // pred_region
        // Predicated region
        $region45: #{_lambda_.3} parent=43 // pred_check
          %p290 = pneg %p36
        $region46: #{_lambda_.3} parent=43 // pred_check_branch
          %292 = sbr.rel (%p290) target = $region48
        $region47: #{_lambda_.3} parent=43 // pred_region
          %p293 = scmp.lt.s32.totalorder %s16, 1
          %s294 = scalar_select %p293, %s16, 1
          %s295 = smul.addr %s294, 8
          %s296 = scalar_lea.vmem %s0, %s295
        $region48: #{_lambda_.3} parent=43 // pred_fallthru
          _
        // Predicated region
        $region49: #{_lambda_.3} parent=43 // pred_check
          %p297 = pneg %p83
        $region50: #{_lambda_.3} parent=43 // pred_check_branch
          %299 = sbr.rel (%p297) target = $region52
        $region51: #{_lambda_.3} parent=43 // pred_region
          %p300 = scmp.lt.s32.totalorder %s16, 1
          %s301 = scalar_select %p300, %s16, 1
          %s302 = smul.addr %s301, 8
          %s303 = scalar_lea.vmem %s2, %s302
        $region52: #{_lambda_.3} parent=43 // pred_fallthru
          _
      $region44: #{_lambda_.3} parent=5 // pred_fallthru
        _
      %p304 = scmp.le.s32.totalorder 1, %s16
      %p305 = scmp.lt.s32.totalorder %s16, 3
      %p306 = pnand %p304, %p305
      %p307 = pneg %p306
      // Predicated region
      $region53: #{_lambda_.3} parent=5 // pred_check
        _
      $region54: #{_lambda_.3} parent=5 // pred_check_branch
        %309 = sbr.rel (%p306) target = $region56
      $region55: #{_lambda_.3} parent=5 // pred_region
        %s310 = ssub.s32 %s16, 1
        // Predicated region
        $region57: #{_lambda_.3} parent=55 // pred_check
          %p311 = pneg %p110
        $region58: #{_lambda_.3} parent=55 // pred_check_branch
          %313 = sbr.rel (%p311) target = $region60
        $region59: #{_lambda_.3} parent=55 // pred_region
          %315 = dma.done [#allocation3], 64
        $region60: #{_lambda_.3} parent=55 // pred_fallthru
          _
        %p316 = scmp.lt.s32.totalorder %s21, 1
        %s317 = scalar_select %p316, %s21, 1
        %s318 = smul.addr %s317, 8
        %s319 = scalar_lea.vmem %s0, %s318
        %p320 = pneg %p42
        %p321 = pneg %p39
        %p322 = pneg %p63
        %p323 = pneg %p60
        %p324 = scmp.lt.s32.totalorder %s21, 1
        %s325 = scalar_select %p324, %s21, 1
        %s326 = smul.addr %s325, 8
        %s327 = scalar_lea.vmem %s2, %s326
        %p328 = pneg %p89
        %p329 = pneg %p86
        %p330 = pneg %p110
        %p331 = pneg %p107
        %p332 = pneg %p131
        %p333 = pneg %p128
        %p334 = pneg %p152
        %p335 = pneg %p149
        %p336 = pneg %p173
        %p337 = pneg %p170
        %p338 = pneg %p194
        %p339 = pneg %p191
        %p340 = pneg %p215
        %p341 = pneg %p212
        %p342 = pneg %p241
        %p343 = pneg %p238
        %p344 = scmp.lt.s32.totalorder %s21, 1
        %s345 = scalar_select %p344, %s21, 1
        %s346 = smul.addr %s345, 8
        %s347 = scalar_lea.vmem %s9, %s346
        %p348 = scmp.lt.s32.totalorder %s21, 1
        %s349 = scalar_select %p348, %s21, 1
        %s350 = smul.addr %s349, 8
        %s351 = scalar_lea.vmem %s0, %s350
        %p352 = scmp.lt.s32.totalorder %s21, 1
        %s353 = scalar_select %p352, %s21, 1
        %s354 = smul.addr %s353, 8
        %s355 = scalar_lea.vmem %s2, %s354
        %p356 = scmp.lt.s32.totalorder %s21, 1
        %s357 = scalar_select %p356, %s21, 1
        %s358 = smul.addr %s357, 8
        %s359 = scalar_lea.vmem %s9, %s358
        %v360 = vld [vmem:[%s351] sm:$0xff]
        %v361 = vld [vmem:[%s355] sm:$0xff]
        %v362 = vld [vmem:[%s1] sm:$0x1]
        %v363 = vld [vmem:[%s1 + $0x1] sm:$0x1]
        %vm364 = vcmask 155648
        %v365 = vsel %vm364, %v362, 0.0
        %v366 = vsel %vm364, %v363, 0.0
        %v367 = vadd.f32 %v365, %v366
        %v368 = vmul.f32 %v367, 0.0625
        %v369 = vmul.f32 %v368, %v368
        %371 = vrot.lane.b32.xlu0 %v369, 8
        %v372 = vpop.permute.xlu0 %371
        %v374 = vsub.f32 %v368, %v372
        %v375 = vadd.f32 %v374, 1e-05
        %v376 = vrsqrt.pop %v375
        %v377 = vmul.f32 %v376, %v375
        %v378 = vmul.f32 %v377, %v376
        %v379 = vmul.f32 0.5, %v378
        %v380 = vsub.f32 1.5, %v379
        %v381 = vmul.f32 %v376, %v380
        %vm382 = vweird.f32 %v375
        %vm383 = vweird.f32 %v376
        %vm384 = vmor %vm382, %vm383
        %v385 = vsel %vm384, %v376, %v381
        %v386 = vadd.f32 %v368, 1e-05
        %v387 = vrsqrt.pop %v386
        %v388 = vmul.f32 %v387, %v386
        %v389 = vmul.f32 %v388, %v387
        %v390 = vmul.f32 0.5, %v389
        %v391 = vsub.f32 1.5, %v390
        %v392 = vmul.f32 %v387, %v391
        %vm393 = vweird.f32 %v386
        %vm394 = vweird.f32 %v387
        %vm395 = vmor %vm393, %vm394
        %v396 = vsel %vm395, %v387, %v392
        %v397 = vperm.slane %v368, 0
        %v398 = vsub.f32 %v360, %v397
        %v399 = vperm.slane %v385, 0
        %401 = vrot.lane.b32.xlu0 %v399, 120
        %v402 = vpop.permute.xlu0 %401
        %v404 = vmul.f32 %v398, %v402
        %v405 = vsub.f32 0.0, %v404
        %v406 = vmul.f32 %v405, 1.442695
        %v407 = vpow.pop %v406
        %v408 = vadd.f32 %v407, 1.0
        %v409 = vrcp.pop %v408
        %v410 = vmul.f32 %v408, %v409
        %v411 = vsub.f32 1.0, %v410
        %v412 = vmul.f32 %v409, %v411
        %v413 = vadd.f32 %v409, %v412
        %vm414 = vweird.f32 %v408
        %vm415 = vweird.f32 %v409
        %vm416 = vmor %vm414, %vm415
        %v417 = vsel %vm416, %v409, %v413
        %v418 = vand.u32 2147483647, %v408
        %vm419 = vcmp.eq.f32.partialorder %v418, 8.507059e+37
        %v420 = vand.u32 %v408, 2147483648
        %v421 = vor.u32 1.1754944e-38, %v420
        %v422 = vsel %vm419, %v421, %v417
        %v423 = vmul.f32 1.0, %v422
        %v424 = vmul.f32 %v404, %v423
        %v425 = vperm.slane %v396, 0
        %427 = vrot.lane.b32.xlu0 %v423, 12
        %v428 = vpop.permute.xlu0 %427
        %v430 = vmul.f32 %v425, %v428
        %432 = vset.pattern.permute.xlu0 16
        %433 = vperm.xlu0 %432, %v430
        %v434 = vpop.permute.xlu0 %433
        %v436 = vmul.f32 %v360, %v434
        %437 = vset.pattern.permute.xlu0 17
        %438 = vperm.xlu0 %437, %v430
        %v439 = vpop.permute.xlu0 %438
        %v441 = vmul.f32 %v360, %v439
        %442 = vset.pattern.permute.xlu0 18
        %443 = vperm.xlu0 %442, %v430
        %v444 = vpop.permute.xlu0 %443
        %v446 = vmul.f32 %v360, %v444
        %447 = vset.pattern.permute.xlu0 19
        %448 = vperm.xlu0 %447, %v430
        %v449 = vpop.permute.xlu0 %448
        %v451 = vmul.f32 %v360, %v449
        %v453 = vrot.slane %v361, 1
        %v454 = vrot.slane %v361, 2
        %v455 = vrot.slane %v361, 3
        %v456 = vrot.slane %v361, 4
        %v457 = vrot.slane %v361, 5
        %v458 = vrot.slane %v361, 6
        %v459 = vrot.slane %v361, 7
        %v460 = vperm.slane %v361, 0
        %v461 = vperm.slane %v453, 0
        %v462 = vperm.slane %v454, 0
        %v463 = vperm.slane %v455, 0
        %v464 = vperm.slane %v456, 0
        %v465 = vperm.slane %v457, 0
        %v466 = vperm.slane %v458, 0
        %v467 = vperm.slane %v459, 0
        %v476 = vsub.f32 %v361, %v460
        %v477 = vsub.f32 %v361, %v461
        %v478 = vsub.f32 %v361, %v462
        %v479 = vsub.f32 %v361, %v463
        %v480 = vsub.f32 %v361, %v464
        %v481 = vsub.f32 %v361, %v465
        %v482 = vsub.f32 %v361, %v466
        %v483 = vsub.f32 %v361, %v467
        %v484 = vmul.f32 %v476, %v476
        %v485 = vmul.f32 %v477, %v477
        %v486 = vmul.f32 %v478, %v478
        %v487 = vmul.f32 %v479, %v479
        %v488 = vmul.f32 %v480, %v480
        %v489 = vmul.f32 %v481, %v481
        %v490 = vmul.f32 %v482, %v482
        %v491 = vmul.f32 %v483, %v483
        %vm492 = vcmask 23552
        %v493 = vsel %vm492, %v484, 0.0
        %494 = vadd.xlane.f32.xlu0 %v493
        %v495 = vpop.xlane.xlu0 %494
        %v496 = vsel %vm492, %v485, 0.0
        %497 = vadd.xlane.f32.xlu0 %v496
        %v498 = vpop.xlane.xlu0 %497
        %v499 = vsel %vm492, %v486, 0.0
        %500 = vadd.xlane.f32.xlu0 %v499
        %v501 = vpop.xlane.xlu0 %500
        %v502 = vsel %vm492, %v487, 0.0
        %503 = vadd.xlane.f32.xlu0 %v502
        %v504 = vpop.xlane.xlu0 %503
        %v505 = vsel %vm492, %v488, 0.0
        %506 = vadd.xlane.f32.xlu0 %v505
        %v507 = vpop.xlane.xlu0 %506
        %v508 = vsel %vm492, %v489, 0.0
        %509 = vadd.xlane.f32.xlu0 %v508
        %v510 = vpop.xlane.xlu0 %509
        %v511 = vsel %vm492, %v490, 0.0
        %512 = vadd.xlane.f32.xlu0 %v511
        %v513 = vpop.xlane.xlu0 %512
        %v514 = vsel %vm492, %v491, 0.0
        %515 = vadd.xlane.f32.xlu0 %v514
        %v516 = vpop.xlane.xlu0 %515
        %v517 = vrsqrt.pop %v495
        %v518 = vmul.f32 %v517, %v495
        %v519 = vmul.f32 %v518, %v517
        %v520 = vmul.f32 0.5, %v519
        %v521 = vsub.f32 1.5, %v520
        %v522 = vmul.f32 %v517, %v521
        %v523 = vmul.f32 %v495, %v522
        %vm524 = vcmp.eq.f32.partialorder %v495, inf
        %v525 = vsel %vm524, %v495, %v523
        %vm526 = vcmp.eq.f32.partialorder %v495, 0.0
        %v527 = vand.u32 %v495, 2147483648
        %v528 = vsel %vm526, %v527, %v525
        %v529 = vrsqrt.pop %v498
        %v530 = vmul.f32 %v529, %v498
        %v531 = vmul.f32 %v530, %v529
        %v532 = vmul.f32 0.5, %v531
        %v533 = vsub.f32 1.5, %v532
        %v534 = vmul.f32 %v529, %v533
        %v535 = vmul.f32 %v498, %v534
        %vm536 = vcmp.eq.f32.partialorder %v498, inf
        %v537 = vsel %vm536, %v498, %v535
        %vm538 = vcmp.eq.f32.partialorder %v498, 0.0
        %v539 = vand.u32 %v498, 2147483648
        %v540 = vsel %vm538, %v539, %v537
        %v541 = vrsqrt.pop %v501
        %v542 = vmul.f32 %v541, %v501
        %v543 = vmul.f32 %v542, %v541
        %v544 = vmul.f32 0.5, %v543
        %v545 = vsub.f32 1.5, %v544
        %v546 = vmul.f32 %v541, %v545
        %v547 = vmul.f32 %v501, %v546
        %vm548 = vcmp.eq.f32.partialorder %v501, inf
        %v549 = vsel %vm548, %v501, %v547
        %vm550 = vcmp.eq.f32.partialorder %v501, 0.0
        %v551 = vand.u32 %v501, 2147483648
        %v552 = vsel %vm550, %v551, %v549
        %v553 = vrsqrt.pop %v504
        %v554 = vmul.f32 %v553, %v504
        %v555 = vmul.f32 %v554, %v553
        %v556 = vmul.f32 0.5, %v555
        %v557 = vsub.f32 1.5, %v556
        %v558 = vmul.f32 %v553, %v557
        %v559 = vmul.f32 %v504, %v558
        %vm560 = vcmp.eq.f32.partialorder %v504, inf
        %v561 = vsel %vm560, %v504, %v559
        %vm562 = vcmp.eq.f32.partialorder %v504, 0.0
        %v563 = vand.u32 %v504, 2147483648
        %v564 = vsel %vm562, %v563, %v561
        %v565 = vrsqrt.pop %v507
        %v566 = vmul.f32 %v565, %v507
        %v567 = vmul.f32 %v566, %v565
        %v568 = vmul.f32 0.5, %v567
        %v569 = vsub.f32 1.5, %v568
        %v570 = vmul.f32 %v565, %v569
        %v571 = vmul.f32 %v507, %v570
        %vm572 = vcmp.eq.f32.partialorder %v507, inf
        %v573 = vsel %vm572, %v507, %v571
        %vm574 = vcmp.eq.f32.partialorder %v507, 0.0
        %v575 = vand.u32 %v507, 2147483648
        %v576 = vsel %vm574, %v575, %v573
        %v577 = vrsqrt.pop %v510
        %v578 = vmul.f32 %v577, %v510
        %v579 = vmul.f32 %v578, %v577
        %v580 = vmul.f32 0.5, %v579
        %v581 = vsub.f32 1.5, %v580
        %v582 = vmul.f32 %v577, %v581
        %v583 = vmul.f32 %v510, %v582
        %vm584 = vcmp.eq.f32.partialorder %v510, inf
        %v585 = vsel %vm584, %v510, %v583
        %vm586 = vcmp.eq.f32.partialorder %v510, 0.0
        %v587 = vand.u32 %v510, 2147483648
        %v588 = vsel %vm586, %v587, %v585
        %v589 = vrsqrt.pop %v513
        %v590 = vmul.f32 %v589, %v513
        %v591 = vmul.f32 %v590, %v589
        %v592 = vmul.f32 0.5, %v591
        %v593 = vsub.f32 1.5, %v592
        %v594 = vmul.f32 %v589, %v593
        %v595 = vmul.f32 %v513, %v594
        %vm596 = vcmp.eq.f32.partialorder %v513, inf
        %v597 = vsel %vm596, %v513, %v595
        %vm598 = vcmp.eq.f32.partialorder %v513, 0.0
        %v599 = vand.u32 %v513, 2147483648
        %v600 = vsel %vm598, %v599, %v597
        %v601 = vrsqrt.pop %v516
        %v602 = vmul.f32 %v601, %v516
        %v603 = vmul.f32 %v602, %v601
        %v604 = vmul.f32 0.5, %v603
        %v605 = vsub.f32 1.5, %v604
        %v606 = vmul.f32 %v601, %v605
        %v607 = vmul.f32 %v516, %v606
        %vm608 = vcmp.eq.f32.partialorder %v516, inf
        %v609 = vsel %vm608, %v516, %v607
        %vm610 = vcmp.eq.f32.partialorder %v516, 0.0
        %v611 = vand.u32 %v516, 2147483648
        %v612 = vsel %vm610, %v611, %v609
        %vm613 = vcmp.gt.f32.partialorder %v528, 1e-09
        %vm614 = vcmp.gt.f32.partialorder %v540, 1e-09
        %vm615 = vcmp.gt.f32.partialorder %v552, 1e-09
        %vm616 = vcmp.gt.f32.partialorder %v564, 1e-09
        %vm617 = vcmp.gt.f32.partialorder %v576, 1e-09
        %vm618 = vcmp.gt.f32.partialorder %v588, 1e-09
        %vm619 = vcmp.gt.f32.partialorder %v600, 1e-09
        %vm620 = vcmp.gt.f32.partialorder %v612, 1e-09
        %v621 = vmax.f32 %v528, 1e-09
        %v622 = vmax.f32 %v540, 1e-09
        %v623 = vmax.f32 %v552, 1e-09
        %v624 = vmax.f32 %v564, 1e-09
        %v625 = vmax.f32 %v576, 1e-09
        %v626 = vmax.f32 %v588, 1e-09
        %v627 = vmax.f32 %v600, 1e-09
        %v628 = vmax.f32 %v612, 1e-09
        %v629 = vrcp.pop %v621
        %v630 = vmul.f32 %v621, %v629
        %v631 = vsub.f32 1.0, %v630
        %v632 = vmul.f32 %v629, %v631
        %v633 = vadd.f32 %v629, %v632
        %vm634 = vweird.f32 %v621
        %vm635 = vweird.f32 %v629
        %vm636 = vmor %vm634, %vm635
        %v637 = vsel %vm636, %v629, %v633
        %v638 = vand.u32 2147483647, %v621
        %vm639 = vcmp.eq.f32.partialorder %v638, 8.507059e+37
        %v640 = vand.u32 %v621, 2147483648
        %v641 = vor.u32 1.1754944e-38, %v640
        %v642 = vsel %vm639, %v641, %v637
        %v643 = vmul.f32 %v476, %v642
        %v644 = vrcp.pop %v622
        %v645 = vmul.f32 %v622, %v644
        %v646 = vsub.f32 1.0, %v645
        %v647 = vmul.f32 %v644, %v646
        %v648 = vadd.f32 %v644, %v647
        %vm649 = vweird.f32 %v622
        %vm650 = vweird.f32 %v644
        %vm651 = vmor %vm649, %vm650
        %v652 = vsel %vm651, %v644, %v648
        %v653 = vand.u32 2147483647, %v622
        %vm654 = vcmp.eq.f32.partialorder %v653, 8.507059e+37
        %v655 = vand.u32 %v622, 2147483648
        %v656 = vor.u32 1.1754944e-38, %v655
        %v657 = vsel %vm654, %v656, %v652
        %v658 = vmul.f32 %v477, %v657
        %v659 = vrcp.pop %v623
        %v660 = vmul.f32 %v623, %v659
        %v661 = vsub.f32 1.0, %v660
        %v662 = vmul.f32 %v659, %v661
        %v663 = vadd.f32 %v659, %v662
        %vm664 = vweird.f32 %v623
        %vm665 = vweird.f32 %v659
        %vm666 = vmor %vm664, %vm665
        %v667 = vsel %vm666, %v659, %v663
        %v668 = vand.u32 2147483647, %v623
        %vm669 = vcmp.eq.f32.partialorder %v668, 8.507059e+37
        %v670 = vand.u32 %v623, 2147483648
        %v671 = vor.u32 1.1754944e-38, %v670
        %v672 = vsel %vm669, %v671, %v667
        %v673 = vmul.f32 %v478, %v672
        %v674 = vrcp.pop %v624
        %v675 = vmul.f32 %v624, %v674
        %v676 = vsub.f32 1.0, %v675
        %v677 = vmul.f32 %v674, %v676
        %v678 = vadd.f32 %v674, %v677
        %vm679 = vweird.f32 %v624
        %vm680 = vweird.f32 %v674
        %vm681 = vmor %vm679, %vm680
        %v682 = vsel %vm681, %v674, %v678
        %v683 = vand.u32 2147483647, %v624
        %vm684 = vcmp.eq.f32.partialorder %v683, 8.507059e+37
        %v685 = vand.u32 %v624, 2147483648
        %v686 = vor.u32 1.1754944e-38, %v685
        %v687 = vsel %vm684, %v686, %v682
        %v688 = vmul.f32 %v479, %v687
        %v689 = vrcp.pop %v625
        %v690 = vmul.f32 %v625, %v689
        %v691 = vsub.f32 1.0, %v690
        %v692 = vmul.f32 %v689, %v691
        %v693 = vadd.f32 %v689, %v692
        %vm694 = vweird.f32 %v625
        %vm695 = vweird.f32 %v689
        %vm696 = vmor %vm694, %vm695
        %v697 = vsel %vm696, %v689, %v693
        %v698 = vand.u32 2147483647, %v625
        %vm699 = vcmp.eq.f32.partialorder %v698, 8.507059e+37
        %v700 = vand.u32 %v625, 2147483648
        %v701 = vor.u32 1.1754944e-38, %v700
        %v702 = vsel %vm699, %v701, %v697
        %v703 = vmul.f32 %v480, %v702
        %v704 = vrcp.pop %v626
        %v705 = vmul.f32 %v626, %v704
        %v706 = vsub.f32 1.0, %v705
        %v707 = vmul.f32 %v704, %v706
        %v708 = vadd.f32 %v704, %v707
        %vm709 = vweird.f32 %v626
        %vm710 = vweird.f32 %v704
        %vm711 = vmor %vm709, %vm710
        %v712 = vsel %vm711, %v704, %v708
        %v713 = vand.u32 2147483647, %v626
        %vm714 = vcmp.eq.f32.partialorder %v713, 8.507059e+37
        %v715 = vand.u32 %v626, 2147483648
        %v716 = vor.u32 1.1754944e-38, %v715
        %v717 = vsel %vm714, %v716, %v712
        %v718 = vmul.f32 %v481, %v717
        %v719 = vrcp.pop %v627
        %v720 = vmul.f32 %v627, %v719
        %v721 = vsub.f32 1.0, %v720
        %v722 = vmul.f32 %v719, %v721
        %v723 = vadd.f32 %v719, %v722
        %vm724 = vweird.f32 %v627
        %vm725 = vweird.f32 %v719
        %vm726 = vmor %vm724, %vm725
        %v727 = vsel %vm726, %v719, %v723
        %v728 = vand.u32 2147483647, %v627
        %vm729 = vcmp.eq.f32.partialorder %v728, 8.507059e+37
        %v730 = vand.u32 %v627, 2147483648
        %v731 = vor.u32 1.1754944e-38, %v730
        %v732 = vsel %vm729, %v731, %v727
        %v733 = vmul.f32 %v482, %v732
        %v734 = vrcp.pop %v628
        %v735 = vmul.f32 %v628, %v734
        %v736 = vsub.f32 1.0, %v735
        %v737 = vmul.f32 %v734, %v736
        %v738 = vadd.f32 %v734, %v737
        %vm739 = vweird.f32 %v628
        %vm740 = vweird.f32 %v734
        %vm741 = vmor %vm739, %vm740
        %v742 = vsel %vm741, %v734, %v738
        %v743 = vand.u32 2147483647, %v628
        %vm744 = vcmp.eq.f32.partialorder %v743, 8.507059e+37
        %v745 = vand.u32 %v628, 2147483648
        %v746 = vor.u32 1.1754944e-38, %v745
        %v747 = vsel %vm744, %v746, %v742
        %v748 = vmul.f32 %v483, %v747
        %v749 = vsel %vm613, 1, 0
        %v750 = vsel %vm614, 1, 0
        %v751 = vsel %vm615, 1, 0
        %v752 = vsel %vm616, 1, 0
        %v753 = vsel %vm617, 1, 0
        %v754 = vsel %vm618, 1, 0
        %v755 = vsel %vm619, 1, 0
        %v756 = vsel %vm620, 1, 0
        %vm757 = vcmp.eq.s32.totalorder %v749, 1
        %vm758 = vcmp.eq.s32.totalorder %v750, 1
        %vm759 = vcmp.eq.s32.totalorder %v751, 1
        %vm760 = vcmp.eq.s32.totalorder %v752, 1
        %vm761 = vcmp.eq.s32.totalorder %v753, 1
        %vm762 = vcmp.eq.s32.totalorder %v754, 1
        %vm763 = vcmp.eq.s32.totalorder %v755, 1
        %vm764 = vcmp.eq.s32.totalorder %v756, 1
        %v765 = vsel %vm757, %v643, 0.0
        %v766 = vsel %vm758, %v658, 0.0
        %v767 = vsel %vm759, %v673, 0.0
        %v768 = vsel %vm760, %v688, 0.0
        %v769 = vsel %vm761, %v703, 0.0
        %v770 = vsel %vm762, %v718, 0.0
        %v771 = vsel %vm763, %v733, 0.0
        %v772 = vsel %vm764, %v748, 0.0
        %781 = vrot.lane.b32.xlu0 %v765, 127
        %v782 = vpop.permute.xlu0 %781
        %783 = vrot.lane.b32.xlu0 %v766, 127
        %v784 = vpop.permute.xlu0 %783
        %785 = vrot.lane.b32.xlu0 %v767, 127
        %v786 = vpop.permute.xlu0 %785
        %787 = vrot.lane.b32.xlu0 %v768, 127
        %v788 = vpop.permute.xlu0 %787
        %789 = vrot.lane.b32.xlu0 %v769, 127
        %v790 = vpop.permute.xlu0 %789
        %791 = vrot.lane.b32.xlu0 %v770, 127
        %v792 = vpop.permute.xlu0 %791
        %793 = vrot.lane.b32.xlu0 %v771, 127
        %v794 = vpop.permute.xlu0 %793
        %795 = vrot.lane.b32.xlu0 %v772, 127
        %v796 = vpop.permute.xlu0 %795
        %805 = vrot.lane.b32.xlu0 %v765, 2
        %v806 = vpop.permute.xlu0 %805
        %807 = vrot.lane.b32.xlu0 %v766, 2
        %v808 = vpop.permute.xlu0 %807
        %809 = vrot.lane.b32.xlu0 %v767, 2
        %v810 = vpop.permute.xlu0 %809
        %811 = vrot.lane.b32.xlu0 %v768, 2
        %v812 = vpop.permute.xlu0 %811
        %813 = vrot.lane.b32.xlu0 %v769, 2
        %v814 = vpop.permute.xlu0 %813
        %815 = vrot.lane.b32.xlu0 %v770, 2
        %v816 = vpop.permute.xlu0 %815
        %817 = vrot.lane.b32.xlu0 %v771, 2
        %v818 = vpop.permute.xlu0 %817
        %819 = vrot.lane.b32.xlu0 %v772, 2
        %v820 = vpop.permute.xlu0 %819
        %vm829 = vcmask 15360
        %v830 = vsel %vm829, %v782, %v806
        %v831 = vsel %vm829, %v784, %v808
        %v832 = vsel %vm829, %v786, %v810
        %v833 = vsel %vm829, %v788, %v812
        %v834 = vsel %vm829, %v790, %v814
        %v835 = vsel %vm829, %v792, %v816
        %v836 = vsel %vm829, %v794, %v818
        %v837 = vsel %vm829, %v796, %v820
        %v838 = vmul.f32 %v830, 1.7320508
        %v839 = vmul.f32 %v831, 1.7320508
        %v840 = vmul.f32 %v832, 1.7320508
        %v841 = vmul.f32 %v833, 1.7320508
        %v842 = vmul.f32 %v834, 1.7320508
        %v843 = vmul.f32 %v835, 1.7320508
        %v844 = vmul.f32 %v836, 1.7320508
        %v845 = vmul.f32 %v837, 1.7320508
        %v846 = vlaneseq
        %v847 = vand.u32 %v846, 127
        %v848 = vcvt.s32.f32 %v847
        %v849 = vmul.f32 %v848, 0.5
        %v850 = vsub.f32 %v528, %v849
        %v851 = vsub.f32 %v540, %v849
        %v852 = vsub.f32 %v552, %v849
        %v853 = vsub.f32 %v564, %v849
        %v854 = vsub.f32 %v576, %v849
        %v855 = vsub.f32 %v588, %v849
        %v856 = vsub.f32 %v600, %v849
        %v857 = vsub.f32 %v612, %v849
        %v858 = vrcp.pop 0.4
        %v859 = vmul.f32 0.4, %v858
        %v860 = vsub.f32 1.0, %v859
        %v861 = vmul.f32 %v858, %v860
        %v862 = vadd.f32 %v858, %v861
        %vm863 = vweird.f32 %v858
        %v864 = vsel %vm863, %v858, %v862
        %v865 = vmul.f32 %v850, %v864
        %v866 = vmul.f32 %v851, %v864
        %v867 = vmul.f32 %v852, %v864
        %v868 = vmul.f32 %v853, %v864
        %v869 = vmul.f32 %v854, %v864
        %v870 = vmul.f32 %v855, %v864
        %v871 = vmul.f32 %v856, %v864
        %v872 = vmul.f32 %v857, %v864
        %v873 = vmul.f32 %v865, %v865
        %v874 = vmul.f32 %v866, %v866
        %v875 = vmul.f32 %v867, %v867
        %v876 = vmul.f32 %v868, %v868
        %v877 = vmul.f32 %v869, %v869
        %v878 = vmul.f32 %v870, %v870
        %v879 = vmul.f32 %v871, %v871
        %v880 = vmul.f32 %v872, %v872
        %v881 = vsub.f32 0.0, %v873
        %v882 = vsub.f32 0.0, %v874
        %v883 = vsub.f32 0.0, %v875
        %v884 = vsub.f32 0.0, %v876
        %v885 = vsub.f32 0.0, %v877
        %v886 = vsub.f32 0.0, %v878
        %v887 = vsub.f32 0.0, %v879
        %v888 = vsub.f32 0.0, %v880
        %v889 = vmul.f32 %v881, 1.442695
        %v890 = vpow.pop %v889
        %v891 = vmul.f32 %v882, 1.442695
        %v892 = vpow.pop %v891
        %v893 = vmul.f32 %v883, 1.442695
        %v894 = vpow.pop %v893
        %v895 = vmul.f32 %v884, 1.442695
        %v896 = vpow.pop %v895
        %v897 = vmul.f32 %v885, 1.442695
        %v898 = vpow.pop %v897
        %v899 = vmul.f32 %v886, 1.442695
        %v900 = vpow.pop %v899
        %v901 = vmul.f32 %v887, 1.442695
        %v902 = vpow.pop %v901
        %v903 = vmul.f32 %v888, 1.442695
        %v904 = vpow.pop %v903
        %v905 = vld [vmem:[#allocation2] sm:$0x7]
        %v906 = vld [vmem:[%s4] sm:$0x1]
        %v907 = vld [vmem:[%s5] sm:$0xff]
        %v908 = vld [vmem:[%s5 + $0x8] sm:$0xff]
        %v909 = vld [vmem:[%s6] sm:$0x1]
        %v910 = vld [vmem:[%s7] sm:$0xff]
        %v911 = vld [vmem:[%s7 + $0x8] sm:$0xff]
        %v912 = vld [vmem:[%s8] sm:$0x1]
        %v914 = vperm.slane %v906, 0
        %v917 = vsel %vm492, %v890, 0
        %v920 = vsel %vm492, %v892, 0
        %v923 = vsel %vm492, %v894, 0
        %v926 = vsel %vm492, %v896, 0
        %v929 = vsel %vm492, %v898, 0
        %v932 = vsel %vm492, %v900, 0
        %v935 = vsel %vm492, %v902, 0
        %v938 = vsel %vm492, %v904, 0
        %vm940 = vcmask 1042432
        %v942 = vsel %vm940, %v905, 0
        %944 = vmatpush.msra.mxu0 0.0
        %945 = vmatpush.msra.mxu0 0.0
        %946 = vmatpush.msra.mxu0 0.0
        %947 = vmatpush.msra.mxu0 0.0
        %948 = vmatpush.msra.mxu0 0.0
        %949 = vmatpush.msra.mxu0 0.0
        %950 = vmatpush.msra.mxu0 0.0
        %951 = vmatpush.msra.mxu0 0.0
        %952 = vmatpush.msra.mxu0 0.0
        %953 = vmatpush.msra.mxu0 0.0
        %954 = vmatpush.msra.mxu0 0.0
        %955 = vmatpush.msra.mxu0 0.0
        %956 = vmatpush.msra.mxu0 0.0
        %957 = vmatpush.msra.mxu0 0.0
        %958 = vmatpush.msra.mxu0 0.0
        %959 = vmatpush.msra.mxu0 %v942
        %960 = vmatmul.f32.gmra.mxu0 %v917
        %v961 = vpop.f32.mrf.mxu0
        %v962 = vadd.f32 %v914, %v961
        %963 = vmatmul.f32.gmra.mxu0 %v920
        %v964 = vpop.f32.mrf.mxu0
        %v965 = vadd.f32 %v914, %v964
        %966 = vmatmul.f32.gmra.mxu0 %v923
        %v967 = vpop.f32.mrf.mxu0
        %v968 = vadd.f32 %v914, %v967
        %969 = vmatmul.f32.gmra.mxu0 %v926
        %v970 = vpop.f32.mrf.mxu0
        %v971 = vadd.f32 %v914, %v970
        %972 = vmatmul.f32.gmra.mxu0 %v929
        %v973 = vpop.f32.mrf.mxu0
        %v974 = vadd.f32 %v914, %v973
        %975 = vmatmul.f32.gmra.mxu0 %v932
        %v976 = vpop.f32.mrf.mxu0
        %v977 = vadd.f32 %v914, %v976
        %978 = vmatmul.f32.gmra.mxu0 %v935
        %v979 = vpop.f32.mrf.mxu0
        %v980 = vadd.f32 %v914, %v979
        %981 = vmatmul.f32.gmra.mxu0 %v938
        %v982 = vpop.f32.mrf.mxu0
        %v983 = vadd.f32 %v914, %v982
        %984 = vdwg.mxu0
        %v985 = vsub.f32 0.0, %v962
        %v986 = vsub.f32 0.0, %v965
        %v987 = vsub.f32 0.0, %v968
        %v988 = vsub.f32 0.0, %v971
        %v989 = vsub.f32 0.0, %v974
        %v990 = vsub.f32 0.0, %v977
        %v991 = vsub.f32 0.0, %v980
        %v992 = vsub.f32 0.0, %v983
        %v993 = vmul.f32 %v985, 1.442695
        %v994 = vpow.pop %v993
        %v995 = vmul.f32 %v986, 1.442695
        %v996 = vpow.pop %v995
        %v997 = vmul.f32 %v987, 1.442695
        %v998 = vpow.pop %v997
        %v999 = vmul.f32 %v988, 1.442695
        %v1000 = vpow.pop %v999
        %v1001 = vmul.f32 %v989, 1.442695
        %v1002 = vpow.pop %v1001
        %v1003 = vmul.f32 %v990, 1.442695
        %v1004 = vpow.pop %v1003
        %v1005 = vmul.f32 %v991, 1.442695
        %v1006 = vpow.pop %v1005
        %v1007 = vmul.f32 %v992, 1.442695
        %v1008 = vpow.pop %v1007
        %v1009 = vadd.f32 %v994, 1.0
        %v1010 = vadd.f32 %v996, 1.0
        %v1011 = vadd.f32 %v998, 1.0
        %v1012 = vadd.f32 %v1000, 1.0
        %v1013 = vadd.f32 %v1002, 1.0
        %v1014 = vadd.f32 %v1004, 1.0
        %v1015 = vadd.f32 %v1006, 1.0
        %v1016 = vadd.f32 %v1008, 1.0
        %v1017 = vrcp.pop %v1009
        %v1018 = vmul.f32 %v1009, %v1017
        %v1019 = vsub.f32 1.0, %v1018
        %v1020 = vmul.f32 %v1017, %v1019
        %v1021 = vadd.f32 %v1017, %v1020
        %vm1022 = vweird.f32 %v1009
        %vm1023 = vweird.f32 %v1017
        %vm1024 = vmor %vm1022, %vm1023
        %v1025 = vsel %vm1024, %v1017, %v1021
        %v1026 = vand.u32 2147483647, %v1009
        %vm1027 = vcmp.eq.f32.partialorder %v1026, 8.507059e+37
        %v1028 = vand.u32 %v1009, 2147483648
        %v1029 = vor.u32 1.1754944e-38, %v1028
        %v1030 = vsel %vm1027, %v1029, %v1025
        %v1031 = vmul.f32 1.0, %v1030
        %v1032 = vrcp.pop %v1010
        %v1033 = vmul.f32 %v1010, %v1032
        %v1034 = vsub.f32 1.0, %v1033
        %v1035 = vmul.f32 %v1032, %v1034
        %v1036 = vadd.f32 %v1032, %v1035
        %vm1037 = vweird.f32 %v1010
        %vm1038 = vweird.f32 %v1032
        %vm1039 = vmor %vm1037, %vm1038
        %v1040 = vsel %vm1039, %v1032, %v1036
        %v1041 = vand.u32 2147483647, %v1010
        %vm1042 = vcmp.eq.f32.partialorder %v1041, 8.507059e+37
        %v1043 = vand.u32 %v1010, 2147483648
        %v1044 = vor.u32 1.1754944e-38, %v1043
        %v1045 = vsel %vm1042, %v1044, %v1040
        %v1046 = vmul.f32 1.0, %v1045
        %v1047 = vrcp.pop %v1011
        %v1048 = vmul.f32 %v1011, %v1047
        %v1049 = vsub.f32 1.0, %v1048
        %v1050 = vmul.f32 %v1047, %v1049
        %v1051 = vadd.f32 %v1047, %v1050
        %vm1052 = vweird.f32 %v1011
        %vm1053 = vweird.f32 %v1047
        %vm1054 = vmor %vm1052, %vm1053
        %v1055 = vsel %vm1054, %v1047, %v1051
        %v1056 = vand.u32 2147483647, %v1011
        %vm1057 = vcmp.eq.f32.partialorder %v1056, 8.507059e+37
        %v1058 = vand.u32 %v1011, 2147483648
        %v1059 = vor.u32 1.1754944e-38, %v1058
        %v1060 = vsel %vm1057, %v1059, %v1055
        %v1061 = vmul.f32 1.0, %v1060
        %v1062 = vrcp.pop %v1012
        %v1063 = vmul.f32 %v1012, %v1062
        %v1064 = vsub.f32 1.0, %v1063
        %v1065 = vmul.f32 %v1062, %v1064
        %v1066 = vadd.f32 %v1062, %v1065
        %vm1067 = vweird.f32 %v1012
        %vm1068 = vweird.f32 %v1062
        %vm1069 = vmor %vm1067, %vm1068
        %v1070 = vsel %vm1069, %v1062, %v1066
        %v1071 = vand.u32 2147483647, %v1012
        %vm1072 = vcmp.eq.f32.partialorder %v1071, 8.507059e+37
        %v1073 = vand.u32 %v1012, 2147483648
        %v1074 = vor.u32 1.1754944e-38, %v1073
        %v1075 = vsel %vm1072, %v1074, %v1070
        %v1076 = vmul.f32 1.0, %v1075
        %v1077 = vrcp.pop %v1013
        %v1078 = vmul.f32 %v1013, %v1077
        %v1079 = vsub.f32 1.0, %v1078
        %v1080 = vmul.f32 %v1077, %v1079
        %v1081 = vadd.f32 %v1077, %v1080
        %vm1082 = vweird.f32 %v1013
        %vm1083 = vweird.f32 %v1077
        %vm1084 = vmor %vm1082, %vm1083
        %v1085 = vsel %vm1084, %v1077, %v1081
        %v1086 = vand.u32 2147483647, %v1013
        %vm1087 = vcmp.eq.f32.partialorder %v1086, 8.507059e+37
        %v1088 = vand.u32 %v1013, 2147483648
        %v1089 = vor.u32 1.1754944e-38, %v1088
        %v1090 = vsel %vm1087, %v1089, %v1085
        %v1091 = vmul.f32 1.0, %v1090
        %v1092 = vrcp.pop %v1014
        %v1093 = vmul.f32 %v1014, %v1092
        %v1094 = vsub.f32 1.0, %v1093
        %v1095 = vmul.f32 %v1092, %v1094
        %v1096 = vadd.f32 %v1092, %v1095
        %vm1097 = vweird.f32 %v1014
        %vm1098 = vweird.f32 %v1092
        %vm1099 = vmor %vm1097, %vm1098
        %v1100 = vsel %vm1099, %v1092, %v1096
        %v1101 = vand.u32 2147483647, %v1014
        %vm1102 = vcmp.eq.f32.partialorder %v1101, 8.507059e+37
        %v1103 = vand.u32 %v1014, 2147483648
        %v1104 = vor.u32 1.1754944e-38, %v1103
        %v1105 = vsel %vm1102, %v1104, %v1100
        %v1106 = vmul.f32 1.0, %v1105
        %v1107 = vrcp.pop %v1015
        %v1108 = vmul.f32 %v1015, %v1107
        %v1109 = vsub.f32 1.0, %v1108
        %v1110 = vmul.f32 %v1107, %v1109
        %v1111 = vadd.f32 %v1107, %v1110
        %vm1112 = vweird.f32 %v1015
        %vm1113 = vweird.f32 %v1107
        %vm1114 = vmor %vm1112, %vm1113
        %v1115 = vsel %vm1114, %v1107, %v1111
        %v1116 = vand.u32 2147483647, %v1015
        %vm1117 = vcmp.eq.f32.partialorder %v1116, 8.507059e+37
        %v1118 = vand.u32 %v1015, 2147483648
        %v1119 = vor.u32 1.1754944e-38, %v1118
        %v1120 = vsel %vm1117, %v1119, %v1115
        %v1121 = vmul.f32 1.0, %v1120
        %v1122 = vrcp.pop %v1016
        %v1123 = vmul.f32 %v1016, %v1122
        %v1124 = vsub.f32 1.0, %v1123
        %v1125 = vmul.f32 %v1122, %v1124
        %v1126 = vadd.f32 %v1122, %v1125
        %vm1127 = vweird.f32 %v1016
        %vm1128 = vweird.f32 %v1122
        %vm1129 = vmor %vm1127, %vm1128
        %v1130 = vsel %vm1129, %v1122, %v1126
        %v1131 = vand.u32 2147483647, %v1016
        %vm1132 = vcmp.eq.f32.partialorder %v1131, 8.507059e+37
        %v1133 = vand.u32 %v1016, 2147483648
        %v1134 = vor.u32 1.1754944e-38, %v1133
        %v1135 = vsel %vm1132, %v1134, %v1130
        %v1136 = vmul.f32 1.0, %v1135
        %v1137 = vmul.f32 %v962, %v1031
        %v1138 = vmul.f32 %v965, %v1046
        %v1139 = vmul.f32 %v968, %v1061
        %v1140 = vmul.f32 %v971, %v1076
        %v1141 = vmul.f32 %v974, %v1091
        %v1142 = vmul.f32 %v977, %v1106
        %v1143 = vmul.f32 %v980, %v1121
        %v1144 = vmul.f32 %v983, %v1136
        %v1146 = vperm.slane %v909, 0
        %vm1148 = vcmask 130048
        %v1150 = vsel %vm1148, %v1137, 0
        %v1153 = vsel %vm1148, %v1138, 0
        %v1156 = vsel %vm1148, %v1139, 0
        %v1159 = vsel %vm1148, %v1140, 0
        %v1162 = vsel %vm1148, %v1141, 0
        %v1165 = vsel %vm1148, %v1142, 0
        %v1168 = vsel %vm1148, %v1143, 0
        %v1171 = vsel %vm1148, %v1144, 0
        %1173 = vmatpush.msra.mxu0 0.0
        %1174 = vmatpush.msra.mxu0 0.0
        %1175 = vmatpush.msra.mxu0 0.0
        %1176 = vmatpush.msra.mxu0 0.0
        %1177 = vmatpush.msra.mxu0 0.0
        %1178 = vmatpush.msra.mxu0 0.0
        %1179 = vmatpush.msra.mxu0 0.0
        %1180 = vmatpush.msra.mxu0 0.0
        %1181 = vmatpush.msra.mxu0 0.0
        %1182 = vmatpush.msra.mxu0 0.0
        %1183 = vmatpush.msra.mxu0 0.0
        %1184 = vmatpush.msra.mxu0 0.0
        %1185 = vmatpush.msra.mxu0 0.0
        %1186 = vmatpush.msra.mxu0 0.0
        %1187 = vmatpush.msra.mxu0 %v908
        %1188 = vmatpush.msra.mxu0 %v907
        %1189 = vmatmul.f32.gmra.mxu0 %v1150
        %v1190 = vpop.f32.mrf.mxu0
        %v1191 = vadd.f32 %v1146, %v1190
        %1192 = vmatmul.f32.gmra.mxu0 %v1153
        %v1193 = vpop.f32.mrf.mxu0
        %v1194 = vadd.f32 %v1146, %v1193
        %1195 = vmatmul.f32.gmra.mxu0 %v1156
        %v1196 = vpop.f32.mrf.mxu0
        %v1197 = vadd.f32 %v1146, %v1196
        %1198 = vmatmul.f32.gmra.mxu0 %v1159
        %v1199 = vpop.f32.mrf.mxu0
        %v1200 = vadd.f32 %v1146, %v1199
        %1201 = vmatmul.f32.gmra.mxu0 %v1162
        %v1202 = vpop.f32.mrf.mxu0
        %v1203 = vadd.f32 %v1146, %v1202
        %1204 = vmatmul.f32.gmra.mxu0 %v1165
        %v1205 = vpop.f32.mrf.mxu0
        %v1206 = vadd.f32 %v1146, %v1205
        %1207 = vmatmul.f32.gmra.mxu0 %v1168
        %v1208 = vpop.f32.mrf.mxu0
        %v1209 = vadd.f32 %v1146, %v1208
        %1210 = vmatmul.f32.gmra.mxu0 %v1171
        %v1211 = vpop.f32.mrf.mxu0
        %v1212 = vadd.f32 %v1146, %v1211
        %1213 = vdwg.mxu0
        %v1214 = vsub.f32 0.0, %v1191
        %v1215 = vsub.f32 0.0, %v1194
        %v1216 = vsub.f32 0.0, %v1197
        %v1217 = vsub.f32 0.0, %v1200
        %v1218 = vsub.f32 0.0, %v1203
        %v1219 = vsub.f32 0.0, %v1206
        %v1220 = vsub.f32 0.0, %v1209
        %v1221 = vsub.f32 0.0, %v1212
        %v1222 = vmul.f32 %v1214, 1.442695
        %v1223 = vpow.pop %v1222
        %v1224 = vmul.f32 %v1215, 1.442695
        %v1225 = vpow.pop %v1224
        %v1226 = vmul.f32 %v1216, 1.442695
        %v1227 = vpow.pop %v1226
        %v1228 = vmul.f32 %v1217, 1.442695
        %v1229 = vpow.pop %v1228
        %v1230 = vmul.f32 %v1218, 1.442695
        %v1231 = vpow.pop %v1230
        %v1232 = vmul.f32 %v1219, 1.442695
        %v1233 = vpow.pop %v1232
        %v1234 = vmul.f32 %v1220, 1.442695
        %v1235 = vpow.pop %v1234
        %v1236 = vmul.f32 %v1221, 1.442695
        %v1237 = vpow.pop %v1236
        %v1238 = vadd.f32 %v1223, 1.0
        %v1239 = vadd.f32 %v1225, 1.0
        %v1240 = vadd.f32 %v1227, 1.0
        %v1241 = vadd.f32 %v1229, 1.0
        %v1242 = vadd.f32 %v1231, 1.0
        %v1243 = vadd.f32 %v1233, 1.0
        %v1244 = vadd.f32 %v1235, 1.0
        %v1245 = vadd.f32 %v1237, 1.0
        %v1246 = vrcp.pop %v1238
        %v1247 = vmul.f32 %v1238, %v1246
        %v1248 = vsub.f32 1.0, %v1247
        %v1249 = vmul.f32 %v1246, %v1248
        %v1250 = vadd.f32 %v1246, %v1249
        %vm1251 = vweird.f32 %v1238
        %vm1252 = vweird.f32 %v1246
        %vm1253 = vmor %vm1251, %vm1252
        %v1254 = vsel %vm1253, %v1246, %v1250
        %v1255 = vand.u32 2147483647, %v1238
        %vm1256 = vcmp.eq.f32.partialorder %v1255, 8.507059e+37
        %v1257 = vand.u32 %v1238, 2147483648
        %v1258 = vor.u32 1.1754944e-38, %v1257
        %v1259 = vsel %vm1256, %v1258, %v1254
        %v1260 = vmul.f32 1.0, %v1259
        %v1261 = vrcp.pop %v1239
        %v1262 = vmul.f32 %v1239, %v1261
        %v1263 = vsub.f32 1.0, %v1262
        %v1264 = vmul.f32 %v1261, %v1263
        %v1265 = vadd.f32 %v1261, %v1264
        %vm1266 = vweird.f32 %v1239
        %vm1267 = vweird.f32 %v1261
        %vm1268 = vmor %vm1266, %vm1267
        %v1269 = vsel %vm1268, %v1261, %v1265
        %v1270 = vand.u32 2147483647, %v1239
        %vm1271 = vcmp.eq.f32.partialorder %v1270, 8.507059e+37
        %v1272 = vand.u32 %v1239, 2147483648
        %v1273 = vor.u32 1.1754944e-38, %v1272
        %v1274 = vsel %vm1271, %v1273, %v1269
        %v1275 = vmul.f32 1.0, %v1274
        %v1276 = vrcp.pop %v1240
        %v1277 = vmul.f32 %v1240, %v1276
        %v1278 = vsub.f32 1.0, %v1277
        %v1279 = vmul.f32 %v1276, %v1278
        %v1280 = vadd.f32 %v1276, %v1279
        %vm1281 = vweird.f32 %v1240
        %vm1282 = vweird.f32 %v1276
        %vm1283 = vmor %vm1281, %vm1282
        %v1284 = vsel %vm1283, %v1276, %v1280
        %v1285 = vand.u32 2147483647, %v1240
        %vm1286 = vcmp.eq.f32.partialorder %v1285, 8.507059e+37
        %v1287 = vand.u32 %v1240, 2147483648
        %v1288 = vor.u32 1.1754944e-38, %v1287
        %v1289 = vsel %vm1286, %v1288, %v1284
        %v1290 = vmul.f32 1.0, %v1289
        %v1291 = vrcp.pop %v1241
        %v1292 = vmul.f32 %v1241, %v1291
        %v1293 = vsub.f32 1.0, %v1292
        %v1294 = vmul.f32 %v1291, %v1293
        %v1295 = vadd.f32 %v1291, %v1294
        %vm1296 = vweird.f32 %v1241
        %vm1297 = vweird.f32 %v1291
        %vm1298 = vmor %vm1296, %vm1297
        %v1299 = vsel %vm1298, %v1291, %v1295
        %v1300 = vand.u32 2147483647, %v1241
        %vm1301 = vcmp.eq.f32.partialorder %v1300, 8.507059e+37
        %v1302 = vand.u32 %v1241, 2147483648
        %v1303 = vor.u32 1.1754944e-38, %v1302
        %v1304 = vsel %vm1301, %v1303, %v1299
        %v1305 = vmul.f32 1.0, %v1304
        %v1306 = vrcp.pop %v1242
        %v1307 = vmul.f32 %v1242, %v1306
        %v1308 = vsub.f32 1.0, %v1307
        %v1309 = vmul.f32 %v1306, %v1308
        %v1310 = vadd.f32 %v1306, %v1309
        %vm1311 = vweird.f32 %v1242
        %vm1312 = vweird.f32 %v1306
        %vm1313 = vmor %vm1311, %vm1312
        %v1314 = vsel %vm1313, %v1306, %v1310
        %v1315 = vand.u32 2147483647, %v1242
        %vm1316 = vcmp.eq.f32.partialorder %v1315, 8.507059e+37
        %v1317 = vand.u32 %v1242, 2147483648
        %v1318 = vor.u32 1.1754944e-38, %v1317
        %v1319 = vsel %vm1316, %v1318, %v1314
        %v1320 = vmul.f32 1.0, %v1319
        %v1321 = vrcp.pop %v1243
        %v1322 = vmul.f32 %v1243, %v1321
        %v1323 = vsub.f32 1.0, %v1322
        %v1324 = vmul.f32 %v1321, %v1323
        %v1325 = vadd.f32 %v1321, %v1324
        %vm1326 = vweird.f32 %v1243
        %vm1327 = vweird.f32 %v1321
        %vm1328 = vmor %vm1326, %vm1327
        %v1329 = vsel %vm1328, %v1321, %v1325
        %v1330 = vand.u32 2147483647, %v1243
        %vm1331 = vcmp.eq.f32.partialorder %v1330, 8.507059e+37
        %v1332 = vand.u32 %v1243, 2147483648
        %v1333 = vor.u32 1.1754944e-38, %v1332
        %v1334 = vsel %vm1331, %v1333, %v1329
        %v1335 = vmul.f32 1.0, %v1334
        %v1336 = vrcp.pop %v1244
        %v1337 = vmul.f32 %v1244, %v1336
        %v1338 = vsub.f32 1.0, %v1337
        %v1339 = vmul.f32 %v1336, %v1338
        %v1340 = vadd.f32 %v1336, %v1339
        %vm1341 = vweird.f32 %v1244
        %vm1342 = vweird.f32 %v1336
        %vm1343 = vmor %vm1341, %vm1342
        %v1344 = vsel %vm1343, %v1336, %v1340
        %v1345 = vand.u32 2147483647, %v1244
        %vm1346 = vcmp.eq.f32.partialorder %v1345, 8.507059e+37
        %v1347 = vand.u32 %v1244, 2147483648
        %v1348 = vor.u32 1.1754944e-38, %v1347
        %v1349 = vsel %vm1346, %v1348, %v1344
        %v1350 = vmul.f32 1.0, %v1349
        %v1351 = vrcp.pop %v1245
        %v1352 = vmul.f32 %v1245, %v1351
        %v1353 = vsub.f32 1.0, %v1352
        %v1354 = vmul.f32 %v1351, %v1353
        %v1355 = vadd.f32 %v1351, %v1354
        %vm1356 = vweird.f32 %v1245
        %vm1357 = vweird.f32 %v1351
        %vm1358 = vmor %vm1356, %vm1357
        %v1359 = vsel %vm1358, %v1351, %v1355
        %v1360 = vand.u32 2147483647, %v1245
        %vm1361 = vcmp.eq.f32.partialorder %v1360, 8.507059e+37
        %v1362 = vand.u32 %v1245, 2147483648
        %v1363 = vor.u32 1.1754944e-38, %v1362
        %v1364 = vsel %vm1361, %v1363, %v1359
        %v1365 = vmul.f32 1.0, %v1364
        %v1366 = vmul.f32 %v1191, %v1260
        %v1367 = vmul.f32 %v1194, %v1275
        %v1368 = vmul.f32 %v1197, %v1290
        %v1369 = vmul.f32 %v1200, %v1305
        %v1370 = vmul.f32 %v1203, %v1320
        %v1371 = vmul.f32 %v1206, %v1335
        %v1372 = vmul.f32 %v1209, %v1350
        %v1373 = vmul.f32 %v1212, %v1365
        %v1375 = vperm.slane %v912, 0
        %v1378 = vsel %vm1148, %v1366, 0
        %v1381 = vsel %vm1148, %v1367, 0
        %v1384 = vsel %vm1148, %v1368, 0
        %v1387 = vsel %vm1148, %v1369, 0
        %v1390 = vsel %vm1148, %v1370, 0
        %v1393 = vsel %vm1148, %v1371, 0
        %v1396 = vsel %vm1148, %v1372, 0
        %v1399 = vsel %vm1148, %v1373, 0
        %1401 = vmatpush.msra.mxu0 0.0
        %1402 = vmatpush.msra.mxu0 0.0
        %1403 = vmatpush.msra.mxu0 0.0
        %1404 = vmatpush.msra.mxu0 0.0
        %1405 = vmatpush.msra.mxu0 0.0
        %1406 = vmatpush.msra.mxu0 0.0
        %1407 = vmatpush.msra.mxu0 0.0
        %1408 = vmatpush.msra.mxu0 0.0
        %1409 = vmatpush.msra.mxu0 0.0
        %1410 = vmatpush.msra.mxu0 0.0
        %1411 = vmatpush.msra.mxu0 0.0
        %1412 = vmatpush.msra.mxu0 0.0
        %1413 = vmatpush.msra.mxu0 0.0
        %1414 = vmatpush.msra.mxu0 0.0
        %1415 = vmatpush.msra.mxu0 %v911
        %1416 = vmatpush.msra.mxu0 %v910
        %1417 = vmatmul.f32.gmra.mxu0 %v1378
        %v1418 = vpop.f32.mrf.mxu0
        %v1419 = vadd.f32 %v1375, %v1418
        %1420 = vmatmul.f32.gmra.mxu0 %v1381
        %v1421 = vpop.f32.mrf.mxu0
        %v1422 = vadd.f32 %v1375, %v1421
        %1423 = vmatmul.f32.gmra.mxu0 %v1384
        %v1424 = vpop.f32.mrf.mxu0
        %v1425 = vadd.f32 %v1375, %v1424
        %1426 = vmatmul.f32.gmra.mxu0 %v1387
        %v1427 = vpop.f32.mrf.mxu0
        %v1428 = vadd.f32 %v1375, %v1427
        %1429 = vmatmul.f32.gmra.mxu0 %v1390
        %v1430 = vpop.f32.mrf.mxu0
        %v1431 = vadd.f32 %v1375, %v1430
        %1432 = vmatmul.f32.gmra.mxu0 %v1393
        %v1433 = vpop.f32.mrf.mxu0
        %v1434 = vadd.f32 %v1375, %v1433
        %1435 = vmatmul.f32.gmra.mxu0 %v1396
        %v1436 = vpop.f32.mrf.mxu0
        %v1437 = vadd.f32 %v1375, %v1436
        %1438 = vmatmul.f32.gmra.mxu0 %v1399
        %v1439 = vpop.f32.mrf.mxu0
        %v1440 = vadd.f32 %v1375, %v1439
        %1441 = vdwg.mxu0
        %1443 = vset.pattern.permute.xlu0 0
        %1444 = vperm.xlu0 %1443, %v424
        %v1445 = vpop.permute.xlu0 %1444
        %v1447 = vmul.f32 %v1419, %v1445
        %v1448 = vmul.f32 %v1422, %v1445
        %v1449 = vmul.f32 %v1425, %v1445
        %v1450 = vmul.f32 %v1428, %v1445
        %v1451 = vmul.f32 %v1431, %v1445
        %v1452 = vmul.f32 %v1434, %v1445
        %v1453 = vmul.f32 %v1437, %v1445
        %v1454 = vmul.f32 %v1440, %v1445
        %1455 = vset.pattern.permute.xlu0 1
        %1456 = vperm.xlu0 %1455, %v424
        %v1457 = vpop.permute.xlu0 %1456
        %v1459 = vmul.f32 %v1419, %v1457
        %v1460 = vmul.f32 %v1422, %v1457
        %v1461 = vmul.f32 %v1425, %v1457
        %v1462 = vmul.f32 %v1428, %v1457
        %v1463 = vmul.f32 %v1431, %v1457
        %v1464 = vmul.f32 %v1434, %v1457
        %v1465 = vmul.f32 %v1437, %v1457
        %v1466 = vmul.f32 %v1440, %v1457
        %1475 = vrot.lane.b32.xlu0 %v1459, 126
        %v1476 = vpop.permute.xlu0 %1475
        %1477 = vrot.lane.b32.xlu0 %v1460, 126
        %v1478 = vpop.permute.xlu0 %1477
        %1479 = vrot.lane.b32.xlu0 %v1461, 126
        %v1480 = vpop.permute.xlu0 %1479
        %1481 = vrot.lane.b32.xlu0 %v1462, 126
        %v1482 = vpop.permute.xlu0 %1481
        %1483 = vrot.lane.b32.xlu0 %v1463, 126
        %v1484 = vpop.permute.xlu0 %1483
        %1485 = vrot.lane.b32.xlu0 %v1464, 126
        %v1486 = vpop.permute.xlu0 %1485
        %1487 = vrot.lane.b32.xlu0 %v1465, 126
        %v1488 = vpop.permute.xlu0 %1487
        %1489 = vrot.lane.b32.xlu0 %v1466, 126
        %v1490 = vpop.permute.xlu0 %1489
        %v1499 = vadd.f32 %v1447, %v1476
        %v1500 = vadd.f32 %v1448, %v1478
        %v1501 = vadd.f32 %v1449, %v1480
        %v1502 = vadd.f32 %v1450, %v1482
        %v1503 = vadd.f32 %v1451, %v1484
        %v1504 = vadd.f32 %v1452, %v1486
        %v1505 = vadd.f32 %v1453, %v1488
        %v1506 = vadd.f32 %v1454, %v1490
        %1507 = vset.pattern.permute.xlu0 2
        %1508 = vperm.xlu0 %1507, %v424
        %v1509 = vpop.permute.xlu0 %1508
        %v1511 = vmul.f32 %v1419, %v1509
        %v1512 = vmul.f32 %v1422, %v1509
        %v1513 = vmul.f32 %v1425, %v1509
        %v1514 = vmul.f32 %v1428, %v1509
        %v1515 = vmul.f32 %v1431, %v1509
        %v1516 = vmul.f32 %v1434, %v1509
        %v1517 = vmul.f32 %v1437, %v1509
        %v1518 = vmul.f32 %v1440, %v1509
        %1527 = vrot.lane.b32.xlu0 %v1511, 124
        %v1528 = vpop.permute.xlu0 %1527
        %1529 = vrot.lane.b32.xlu0 %v1512, 124
        %v1530 = vpop.permute.xlu0 %1529
        %1531 = vrot.lane.b32.xlu0 %v1513, 124
        %v1532 = vpop.permute.xlu0 %1531
        %1533 = vrot.lane.b32.xlu0 %v1514, 124
        %v1534 = vpop.permute.xlu0 %1533
        %1535 = vrot.lane.b32.xlu0 %v1515, 124
        %v1536 = vpop.permute.xlu0 %1535
        %1537 = vrot.lane.b32.xlu0 %v1516, 124
        %v1538 = vpop.permute.xlu0 %1537
        %1539 = vrot.lane.b32.xlu0 %v1517, 124
        %v1540 = vpop.permute.xlu0 %1539
        %1541 = vrot.lane.b32.xlu0 %v1518, 124
        %v1542 = vpop.permute.xlu0 %1541
        %v1551 = vadd.f32 %v1499, %v1528
        %v1552 = vadd.f32 %v1500, %v1530
        %v1553 = vadd.f32 %v1501, %v1532
        %v1554 = vadd.f32 %v1502, %v1534
        %v1555 = vadd.f32 %v1503, %v1536
        %v1556 = vadd.f32 %v1504, %v1538
        %v1557 = vadd.f32 %v1505, %v1540
        %v1558 = vadd.f32 %v1506, %v1542
        %1559 = vset.pattern.permute.xlu0 3
        %1560 = vperm.xlu0 %1559, %v424
        %v1561 = vpop.permute.xlu0 %1560
        %v1563 = vmul.f32 %v1419, %v1561
        %v1564 = vmul.f32 %v1422, %v1561
        %v1565 = vmul.f32 %v1425, %v1561
        %v1566 = vmul.f32 %v1428, %v1561
        %v1567 = vmul.f32 %v1431, %v1561
        %v1568 = vmul.f32 %v1434, %v1561
        %v1569 = vmul.f32 %v1437, %v1561
        %v1570 = vmul.f32 %v1440, %v1561
        %1579 = vrot.lane.b32.xlu0 %v1563, 122
        %v1580 = vpop.permute.xlu0 %1579
        %1581 = vrot.lane.b32.xlu0 %v1564, 122
        %v1582 = vpop.permute.xlu0 %1581
        %1583 = vrot.lane.b32.xlu0 %v1565, 122
        %v1584 = vpop.permute.xlu0 %1583
        %1585 = vrot.lane.b32.xlu0 %v1566, 122
        %v1586 = vpop.permute.xlu0 %1585
        %1587 = vrot.lane.b32.xlu0 %v1567, 122
        %v1588 = vpop.permute.xlu0 %1587
        %1589 = vrot.lane.b32.xlu0 %v1568, 122
        %v1590 = vpop.permute.xlu0 %1589
        %1591 = vrot.lane.b32.xlu0 %v1569, 122
        %v1592 = vpop.permute.xlu0 %1591
        %1593 = vrot.lane.b32.xlu0 %v1570, 122
        %v1594 = vpop.permute.xlu0 %1593
        %v1603 = vadd.f32 %v1551, %v1580
        %v1604 = vadd.f32 %v1552, %v1582
        %v1605 = vadd.f32 %v1553, %v1584
        %v1606 = vadd.f32 %v1554, %v1586
        %v1607 = vadd.f32 %v1555, %v1588
        %v1608 = vadd.f32 %v1556, %v1590
        %v1609 = vadd.f32 %v1557, %v1592
        %v1610 = vadd.f32 %v1558, %v1594
        %1612 = vrot.lane.b32.xlu0 %v436, 120
        %v1613 = vpop.permute.xlu0 %1612
        %v1615 = vmul.f32 %v838, %v1613
        %v1616 = vmul.f32 %v839, %v1613
        %v1617 = vmul.f32 %v840, %v1613
        %v1618 = vmul.f32 %v841, %v1613
        %v1619 = vmul.f32 %v842, %v1613
        %v1620 = vmul.f32 %v843, %v1613
        %v1621 = vmul.f32 %v844, %v1613
        %v1622 = vmul.f32 %v845, %v1613
        %v1623 = vsel %vm492, %v1615, 0.0
        %1624 = vadd.xlane.f32.xlu0 %v1623
        %v1625 = vpop.xlane.xlu0 %1624
        %v1626 = vsel %vm492, %v1616, 0.0
        %1627 = vadd.xlane.f32.xlu0 %v1626
        %v1628 = vpop.xlane.xlu0 %1627
        %v1629 = vsel %vm492, %v1617, 0.0
        %1630 = vadd.xlane.f32.xlu0 %v1629
        %v1631 = vpop.xlane.xlu0 %1630
        %v1632 = vsel %vm492, %v1618, 0.0
        %1633 = vadd.xlane.f32.xlu0 %v1632
        %v1634 = vpop.xlane.xlu0 %1633
        %v1635 = vsel %vm492, %v1619, 0.0
        %1636 = vadd.xlane.f32.xlu0 %v1635
        %v1637 = vpop.xlane.xlu0 %1636
        %v1638 = vsel %vm492, %v1620, 0.0
        %1639 = vadd.xlane.f32.xlu0 %v1638
        %v1640 = vpop.xlane.xlu0 %1639
        %v1641 = vsel %vm492, %v1621, 0.0
        %1642 = vadd.xlane.f32.xlu0 %v1641
        %v1643 = vpop.xlane.xlu0 %1642
        %v1644 = vsel %vm492, %v1622, 0.0
        %1645 = vadd.xlane.f32.xlu0 %v1644
        %v1646 = vpop.xlane.xlu0 %1645
        %v1647 = vmul.f32 %v1419, %v1625
        %v1648 = vmul.f32 %v1422, %v1628
        %v1649 = vmul.f32 %v1425, %v1631
        %v1650 = vmul.f32 %v1428, %v1634
        %v1651 = vmul.f32 %v1431, %v1637
        %v1652 = vmul.f32 %v1434, %v1640
        %v1653 = vmul.f32 %v1437, %v1643
        %v1654 = vmul.f32 %v1440, %v1646
        %1663 = vrot.lane.b32.xlu0 %v1647, 120
        %v1664 = vpop.permute.xlu0 %1663
        %1665 = vrot.lane.b32.xlu0 %v1648, 120
        %v1666 = vpop.permute.xlu0 %1665
        %1667 = vrot.lane.b32.xlu0 %v1649, 120
        %v1668 = vpop.permute.xlu0 %1667
        %1669 = vrot.lane.b32.xlu0 %v1650, 120
        %v1670 = vpop.permute.xlu0 %1669
        %1671 = vrot.lane.b32.xlu0 %v1651, 120
        %v1672 = vpop.permute.xlu0 %1671
        %1673 = vrot.lane.b32.xlu0 %v1652, 120
        %v1674 = vpop.permute.xlu0 %1673
        %1675 = vrot.lane.b32.xlu0 %v1653, 120
        %v1676 = vpop.permute.xlu0 %1675
        %1677 = vrot.lane.b32.xlu0 %v1654, 120
        %v1678 = vpop.permute.xlu0 %1677
        %v1687 = vadd.f32 %v1603, %v1664
        %v1688 = vadd.f32 %v1604, %v1666
        %v1689 = vadd.f32 %v1605, %v1668
        %v1690 = vadd.f32 %v1606, %v1670
        %v1691 = vadd.f32 %v1607, %v1672
        %v1692 = vadd.f32 %v1608, %v1674
        %v1693 = vadd.f32 %v1609, %v1676
        %v1694 = vadd.f32 %v1610, %v1678
        %1696 = vrot.lane.b32.xlu0 %v441, 117
        %v1697 = vpop.permute.xlu0 %1696
        %v1699 = vmul.f32 %v838, %v1697
        %v1700 = vmul.f32 %v839, %v1697
        %v1701 = vmul.f32 %v840, %v1697
        %v1702 = vmul.f32 %v841, %v1697
        %v1703 = vmul.f32 %v842, %v1697
        %v1704 = vmul.f32 %v843, %v1697
        %v1705 = vmul.f32 %v844, %v1697
        %v1706 = vmul.f32 %v845, %v1697
        %v1707 = vsel %vm492, %v1699, 0.0
        %1708 = vadd.xlane.f32.xlu0 %v1707
        %v1709 = vpop.xlane.xlu0 %1708
        %v1710 = vsel %vm492, %v1700, 0.0
        %1711 = vadd.xlane.f32.xlu0 %v1710
        %v1712 = vpop.xlane.xlu0 %1711
        %v1713 = vsel %vm492, %v1701, 0.0
        %1714 = vadd.xlane.f32.xlu0 %v1713
        %v1715 = vpop.xlane.xlu0 %1714
        %v1716 = vsel %vm492, %v1702, 0.0
        %1717 = vadd.xlane.f32.xlu0 %v1716
        %v1718 = vpop.xlane.xlu0 %1717
        %v1719 = vsel %vm492, %v1703, 0.0
        %1720 = vadd.xlane.f32.xlu0 %v1719
        %v1721 = vpop.xlane.xlu0 %1720
        %v1722 = vsel %vm492, %v1704, 0.0
        %1723 = vadd.xlane.f32.xlu0 %v1722
        %v1724 = vpop.xlane.xlu0 %1723
        %v1725 = vsel %vm492, %v1705, 0.0
        %1726 = vadd.xlane.f32.xlu0 %v1725
        %v1727 = vpop.xlane.xlu0 %1726
        %v1728 = vsel %vm492, %v1706, 0.0
        %1729 = vadd.xlane.f32.xlu0 %v1728
        %v1730 = vpop.xlane.xlu0 %1729
        %v1731 = vmul.f32 %v1419, %v1709
        %v1732 = vmul.f32 %v1422, %v1712
        %v1733 = vmul.f32 %v1425, %v1715
        %v1734 = vmul.f32 %v1428, %v1718
        %v1735 = vmul.f32 %v1431, %v1721
        %v1736 = vmul.f32 %v1434, %v1724
        %v1737 = vmul.f32 %v1437, %v1727
        %v1738 = vmul.f32 %v1440, %v1730
        %1747 = vrot.lane.b32.xlu0 %v1731, 118
        %v1748 = vpop.permute.xlu0 %1747
        %1749 = vrot.lane.b32.xlu0 %v1732, 118
        %v1750 = vpop.permute.xlu0 %1749
        %1751 = vrot.lane.b32.xlu0 %v1733, 118
        %v1752 = vpop.permute.xlu0 %1751
        %1753 = vrot.lane.b32.xlu0 %v1734, 118
        %v1754 = vpop.permute.xlu0 %1753
        %1755 = vrot.lane.b32.xlu0 %v1735, 118
        %v1756 = vpop.permute.xlu0 %1755
        %1757 = vrot.lane.b32.xlu0 %v1736, 118
        %v1758 = vpop.permute.xlu0 %1757
        %1759 = vrot.lane.b32.xlu0 %v1737, 118
        %v1760 = vpop.permute.xlu0 %1759
        %1761 = vrot.lane.b32.xlu0 %v1738, 118
        %v1762 = vpop.permute.xlu0 %1761
        %v1771 = vadd.f32 %v1687, %v1748
        %v1772 = vadd.f32 %v1688, %v1750
        %v1773 = vadd.f32 %v1689, %v1752
        %v1774 = vadd.f32 %v1690, %v1754
        %v1775 = vadd.f32 %v1691, %v1756
        %v1776 = vadd.f32 %v1692, %v1758
        %v1777 = vadd.f32 %v1693, %v1760
        %v1778 = vadd.f32 %v1694, %v1762
        %1780 = vrot.lane.b32.xlu0 %v446, 114
        %v1781 = vpop.permute.xlu0 %1780
        %v1783 = vmul.f32 %v838, %v1781
        %v1784 = vmul.f32 %v839, %v1781
        %v1785 = vmul.f32 %v840, %v1781
        %v1786 = vmul.f32 %v841, %v1781
        %v1787 = vmul.f32 %v842, %v1781
        %v1788 = vmul.f32 %v843, %v1781
        %v1789 = vmul.f32 %v844, %v1781
        %v1790 = vmul.f32 %v845, %v1781
        %v1791 = vsel %vm492, %v1783, 0.0
        %1792 = vadd.xlane.f32.xlu0 %v1791
        %v1793 = vpop.xlane.xlu0 %1792
        %v1794 = vsel %vm492, %v1784, 0.0
        %1795 = vadd.xlane.f32.xlu0 %v1794
        %v1796 = vpop.xlane.xlu0 %1795
        %v1797 = vsel %vm492, %v1785, 0.0
        %1798 = vadd.xlane.f32.xlu0 %v1797
        %v1799 = vpop.xlane.xlu0 %1798
        %v1800 = vsel %vm492, %v1786, 0.0
        %1801 = vadd.xlane.f32.xlu0 %v1800
        %v1802 = vpop.xlane.xlu0 %1801
        %v1803 = vsel %vm492, %v1787, 0.0
        %1804 = vadd.xlane.f32.xlu0 %v1803
        %v1805 = vpop.xlane.xlu0 %1804
        %v1806 = vsel %vm492, %v1788, 0.0
        %1807 = vadd.xlane.f32.xlu0 %v1806
        %v1808 = vpop.xlane.xlu0 %1807
        %v1809 = vsel %vm492, %v1789, 0.0
        %1810 = vadd.xlane.f32.xlu0 %v1809
        %v1811 = vpop.xlane.xlu0 %1810
        %v1812 = vsel %vm492, %v1790, 0.0
        %1813 = vadd.xlane.f32.xlu0 %v1812
        %v1814 = vpop.xlane.xlu0 %1813
        %v1815 = vmul.f32 %v1419, %v1793
        %v1816 = vmul.f32 %v1422, %v1796
        %v1817 = vmul.f32 %v1425, %v1799
        %v1818 = vmul.f32 %v1428, %v1802
        %v1819 = vmul.f32 %v1431, %v1805
        %v1820 = vmul.f32 %v1434, %v1808
        %v1821 = vmul.f32 %v1437, %v1811
        %v1822 = vmul.f32 %v1440, %v1814
        %1831 = vrot.lane.b32.xlu0 %v1815, 116
        %v1832 = vpop.permute.xlu0 %1831
        %1833 = vrot.lane.b32.xlu0 %v1816, 116
        %v1834 = vpop.permute.xlu0 %1833
        %1835 = vrot.lane.b32.xlu0 %v1817, 116
        %v1836 = vpop.permute.xlu0 %1835
        %1837 = vrot.lane.b32.xlu0 %v1818, 116
        %v1838 = vpop.permute.xlu0 %1837
        %1839 = vrot.lane.b32.xlu0 %v1819, 116
        %v1840 = vpop.permute.xlu0 %1839
        %1841 = vrot.lane.b32.xlu0 %v1820, 116
        %v1842 = vpop.permute.xlu0 %1841
        %1843 = vrot.lane.b32.xlu0 %v1821, 116
        %v1844 = vpop.permute.xlu0 %1843
        %1845 = vrot.lane.b32.xlu0 %v1822, 116
        %v1846 = vpop.permute.xlu0 %1845
        %v1855 = vadd.f32 %v1771, %v1832
        %v1856 = vadd.f32 %v1772, %v1834
        %v1857 = vadd.f32 %v1773, %v1836
        %v1858 = vadd.f32 %v1774, %v1838
        %v1859 = vadd.f32 %v1775, %v1840
        %v1860 = vadd.f32 %v1776, %v1842
        %v1861 = vadd.f32 %v1777, %v1844
        %v1862 = vadd.f32 %v1778, %v1846
        %1864 = vrot.lane.b32.xlu0 %v451, 111
        %v1865 = vpop.permute.xlu0 %1864
        %v1867 = vmul.f32 %v838, %v1865
        %v1868 = vmul.f32 %v839, %v1865
        %v1869 = vmul.f32 %v840, %v1865
        %v1870 = vmul.f32 %v841, %v1865
        %v1871 = vmul.f32 %v842, %v1865
        %v1872 = vmul.f32 %v843, %v1865
        %v1873 = vmul.f32 %v844, %v1865
        %v1874 = vmul.f32 %v845, %v1865
        %v1875 = vsel %vm492, %v1867, 0.0
        %1876 = vadd.xlane.f32.xlu0 %v1875
        %v1877 = vpop.xlane.xlu0 %1876
        %v1878 = vsel %vm492, %v1868, 0.0
        %1879 = vadd.xlane.f32.xlu0 %v1878
        %v1880 = vpop.xlane.xlu0 %1879
        %v1881 = vsel %vm492, %v1869, 0.0
        %1882 = vadd.xlane.f32.xlu0 %v1881
        %v1883 = vpop.xlane.xlu0 %1882
        %v1884 = vsel %vm492, %v1870, 0.0
        %1885 = vadd.xlane.f32.xlu0 %v1884
        %v1886 = vpop.xlane.xlu0 %1885
        %v1887 = vsel %vm492, %v1871, 0.0
        %1888 = vadd.xlane.f32.xlu0 %v1887
        %v1889 = vpop.xlane.xlu0 %1888
        %v1890 = vsel %vm492, %v1872, 0.0
        %1891 = vadd.xlane.f32.xlu0 %v1890
        %v1892 = vpop.xlane.xlu0 %1891
        %v1893 = vsel %vm492, %v1873, 0.0
        %1894 = vadd.xlane.f32.xlu0 %v1893
        %v1895 = vpop.xlane.xlu0 %1894
        %v1896 = vsel %vm492, %v1874, 0.0
        %1897 = vadd.xlane.f32.xlu0 %v1896
        %v1898 = vpop.xlane.xlu0 %1897
        %v1899 = vmul.f32 %v1419, %v1877
        %v1900 = vmul.f32 %v1422, %v1880
        %v1901 = vmul.f32 %v1425, %v1883
        %v1902 = vmul.f32 %v1428, %v1886
        %v1903 = vmul.f32 %v1431, %v1889
        %v1904 = vmul.f32 %v1434, %v1892
        %v1905 = vmul.f32 %v1437, %v1895
        %v1906 = vmul.f32 %v1440, %v1898
        %1915 = vrot.lane.b32.xlu0 %v1899, 114
        %v1916 = vpop.permute.xlu0 %1915
        %1917 = vrot.lane.b32.xlu0 %v1900, 114
        %v1918 = vpop.permute.xlu0 %1917
        %1919 = vrot.lane.b32.xlu0 %v1901, 114
        %v1920 = vpop.permute.xlu0 %1919
        %1921 = vrot.lane.b32.xlu0 %v1902, 114
        %v1922 = vpop.permute.xlu0 %1921
        %1923 = vrot.lane.b32.xlu0 %v1903, 114
        %v1924 = vpop.permute.xlu0 %1923
        %1925 = vrot.lane.b32.xlu0 %v1904, 114
        %v1926 = vpop.permute.xlu0 %1925
        %1927 = vrot.lane.b32.xlu0 %v1905, 114
        %v1928 = vpop.permute.xlu0 %1927
        %1929 = vrot.lane.b32.xlu0 %v1906, 114
        %v1930 = vpop.permute.xlu0 %1929
        %v1939 = vadd.f32 %v1855, %v1916
        %v1940 = vadd.f32 %v1856, %v1918
        %v1941 = vadd.f32 %v1857, %v1920
        %v1942 = vadd.f32 %v1858, %v1922
        %v1943 = vadd.f32 %v1859, %v1924
        %v1944 = vadd.f32 %v1860, %v1926
        %v1945 = vadd.f32 %v1861, %v1928
        %v1946 = vadd.f32 %v1862, %v1930
        %v1947 = vsel %vm829, %v1939, 0.0
        %v1948 = vrot.slane %v1947, 4
        %v1949 = vadd.f32 %v1947, %v1948
        %v1950 = vrot.slane %v1949, 2
        %v1951 = vadd.f32 %v1949, %v1950
        %v1952 = vrot.slane %v1951, 1
        %v1953 = vadd.f32 %v1951, %v1952
        %v1954 = vsel %vm829, %v1940, 0.0
        %v1955 = vrot.slane %v1954, 4
        %v1956 = vadd.f32 %v1954, %v1955
        %v1957 = vrot.slane %v1956, 2
        %v1958 = vadd.f32 %v1956, %v1957
        %v1959 = vrot.slane %v1958, 1
        %v1960 = vadd.f32 %v1958, %v1959
        %v1961 = vsel %vm829, %v1941, 0.0
        %v1962 = vrot.slane %v1961, 4
        %v1963 = vadd.f32 %v1961, %v1962
        %v1964 = vrot.slane %v1963, 2
        %v1965 = vadd.f32 %v1963, %v1964
        %v1966 = vrot.slane %v1965, 1
        %v1967 = vadd.f32 %v1965, %v1966
        %v1968 = vsel %vm829, %v1942, 0.0
        %v1969 = vrot.slane %v1968, 4
        %v1970 = vadd.f32 %v1968, %v1969
        %v1971 = vrot.slane %v1970, 2
        %v1972 = vadd.f32 %v1970, %v1971
        %v1973 = vrot.slane %v1972, 1
        %v1974 = vadd.f32 %v1972, %v1973
        %v1975 = vsel %vm829, %v1943, 0.0
        %v1976 = vrot.slane %v1975, 4
        %v1977 = vadd.f32 %v1975, %v1976
        %v1978 = vrot.slane %v1977, 2
        %v1979 = vadd.f32 %v1977, %v1978
        %v1980 = vrot.slane %v1979, 1
        %v1981 = vadd.f32 %v1979, %v1980
        %v1982 = vsel %vm829, %v1944, 0.0
        %v1983 = vrot.slane %v1982, 4
        %v1984 = vadd.f32 %v1982, %v1983
        %v1985 = vrot.slane %v1984, 2
        %v1986 = vadd.f32 %v1984, %v1985
        %v1987 = vrot.slane %v1986, 1
        %v1988 = vadd.f32 %v1986, %v1987
        %v1989 = vsel %vm829, %v1945, 0.0
        %v1990 = vrot.slane %v1989, 4
        %v1991 = vadd.f32 %v1989, %v1990
        %v1992 = vrot.slane %v1991, 2
        %v1993 = vadd.f32 %v1991, %v1992
        %v1994 = vrot.slane %v1993, 1
        %v1995 = vadd.f32 %v1993, %v1994
        %v1996 = vsel %vm829, %v1946, 0.0
        %v1997 = vrot.slane %v1996, 4
        %v1998 = vadd.f32 %v1996, %v1997
        %v1999 = vrot.slane %v1998, 2
        %v2000 = vadd.f32 %v1998, %v1999
        %v2001 = vrot.slane %v2000, 1
        %v2002 = vadd.f32 %v2000, %v2001
        %v2003 = vmul.f32 %v1953, 0.17677669
        %v2004 = vmul.f32 %v1960, 0.17677669
        %v2005 = vmul.f32 %v1967, 0.17677669
        %v2006 = vmul.f32 %v1974, 0.17677669
        %v2007 = vmul.f32 %v1981, 0.17677669
        %v2008 = vmul.f32 %v1988, 0.17677669
        %v2009 = vmul.f32 %v1995, 0.17677669
        %v2010 = vmul.f32 %v2002, 0.17677669
        %vm2019 = vcmask 1041409
        %v2020 = vsel %vm2019, %v2004, %v2003
        %vm2021 = vcmask 1042434
        %v2022 = vsel %vm2021, %v2005, %v2020
        %vm2023 = vcmask 1043459
        %v2024 = vsel %vm2023, %v2006, %v2022
        %vm2025 = vcmask 1044484
        %v2026 = vsel %vm2025, %v2007, %v2024
        %vm2027 = vcmask 1045509
        %v2028 = vsel %vm2027, %v2008, %v2026
        %vm2029 = vcmask 1046534
        %v2030 = vsel %vm2029, %v2009, %v2028
        %vm2031 = vcmask 1047559
        %v2032 = vsel %vm2031, %v2010, %v2030
        %2034 = vst.msk [vmem:[%s359] sm:$0xff] %vm829, %v2032
        %p2035 = scmp.lt.s32.totalorder %s21, 1
        %s2036 = scalar_select %p2035, %s21, 1
        %s2037 = smul.addr %s2036, 8
        %s2038 = scalar_lea.vmem %s9, %s2037
        // Predicated region
        $region61: #{_lambda_.3} parent=55 // pred_check
          %p2039 = pneg %p238
        $region62: #{_lambda_.3} parent=55 // pred_check_branch
          %2041 = sbr.rel (%p2039) target = $region64
        $region63: #{_lambda_.3} parent=55 // pred_region
          _
        $region64: #{_lambda_.3} parent=55 // pred_fallthru
          _
      $region56: #{_lambda_.3} parent=5 // pred_fallthru
        _
      %p2042 = scmp.le.s32.totalorder 2, %s16
      // Predicated region
      $region65: #{_lambda_.3} parent=5 // pred_check
        %p2043 = pneg %p2042
      $region66: #{_lambda_.3} parent=5 // pred_check_branch
        %2045 = sbr.rel (%p2043) target = $region68
      $region67: #{_lambda_.3} parent=5 // pred_region
        %s2046 = ssub.s32 %s16, 2
        // Predicated region
        $region69: #{_lambda_.3} parent=67 // pred_check
          %p2047 = pneg %p244
        $region70: #{_lambda_.3} parent=67 // pred_check_branch
          %2049 = sbr.rel (%p2047) target = $region72
        $region71: #{_lambda_.3} parent=67 // pred_region
          %p2050 = scmp.lt.s32.totalorder %s22, 1
          %s2051 = scalar_select %p2050, %s22, 1
          %s2052 = smul.addr %s2051, 8
          %s2053 = scalar_lea.vmem %s9, %s2052
        $region72: #{_lambda_.3} parent=67 // pred_fallthru
          _
      $region68: #{_lambda_.3} parent=5 // pred_fallthru
        _
    $region6: #{_lambda_.3} parent=1 // loop_footer
      %s20 = sadd.s32 1, %s16
    $region7: #{_lambda_.3} parent=1 // loop_footer_branch
      %15 = sbr.rel target = $region3
    $region8: #{_lambda_.3} parent=1 // loop_exit
      _
    %2054 = vsyncpa [#allocation3], 1
    %s2055 = scalar_lea.sflag [#allocation3], 1
    %2056 = vsyncpa %s2055, 1

// kernel: _lambda_.2
$region0: #{_lambda_.2}
  #allocation0 [shape = 'u32[]', space=smem, size = 0x4, offset = 0x4, fixed_abs, tag = 'smem constant byte address 0x4 - core index']
  #allocation1 [shape = 'u32[72,128]{1,0:T(1,128)}', space=vmem, size = 0x9000, scoped, tag = 'internal scratch']
  %s0 = inlined_call_operand.vmem [shape: f32[2,8,4], index: 0, kind: input, shape index: {}]
  %s1 = inlined_call_operand.vmem [shape: f32[2,8,3], index: 1, kind: input, shape index: {}]
  %s2 = inlined_call_operand.hbm [shape: f32[3,16], index: 2, kind: input, shape index: {}]
  %s3 = inlined_call_operand.vmem [shape: f32[1,16], index: 3, kind: input, shape index: {}, may-alias: {3,5}]
  %s4 = inlined_call_operand.hbm [shape: f32[16,16], index: 4, kind: input, shape index: {}]
  %s5 = inlined_call_operand.vmem [shape: f32[1,16], index: 5, kind: input, shape index: {}, may-alias: {3,5}]
  %s6 = inlined_call_operand.vmem [shape: f32[16,48], index: 6, kind: input, shape index: {}]
  %s7 = inlined_call_operand.vmem [shape: f32[1,48], index: 7, kind: input, shape index: {}]
  %s8 = inlined_call_operand.vmem [shape: f32[2,8,20], index: 8, kind: output, shape index: {0}]
  %s9 = inlined_call_operand.vmem [shape: f32[2,1,20], index: 9, kind: output, shape index: {1}]
  %10 = xla_tuple %s8, %s9
  %s11 = sld [smem:[#allocation0]]
  $region81: #{_lambda_.2} parent=0
    _
  %s13 = ssub.s32 1, %s11
  %s14 = scalar_select 0, %s13, %s11
  $region1: #{_lambda_.2} parent=0
    #allocation2 [shape = 'u8[2048]{0}', space=vmem, size = 0x800, scoped, tag = 'input window, operand 2, single buffered']
    #allocation3 [shape = 's32[2]{0}', space=sflag, size = 0x8, scoped, tag = 'scoped memory for _lambda_.2']
    #allocation4 [shape = 'u8[8192]{0}', space=vmem, size = 0x2000, scoped, tag = 'input window, operand 4, single buffered']
    #allocation5 [shape = 's32[1]{0}', space=sflag, size = 0x4, scoped, tag = 'scoped memory for _lambda_.2']
    %15 = vsyncpa [#allocation3], 0
    %16 = vsyncpa [#allocation5], 0
    loop: start=0, step=1, limit=4
    $region2: #{_lambda_.2} parent=1 // loop_pre_header
      _
    $region3: #{_lambda_.2} parent=1 // loop_header
      %s18 = sphi 0, %s22
      %p19 = scmp.ge.s32.totalorder %s18, 4
      %s28 = sphi 0, %s30
      %s31 = sphi 0, %s28
      %s32 = sphi 0, %s31
      %s48 = sphi 0, %s32
      %s54 = sphi 0, %s56
      %s57 = sphi 0, %s54
      %s58 = sphi 0, %s57
      %s74 = sphi 0, %s58
      %s78 = sphi 0, %s78
      %s80 = sphi 0, %s78
      %s81 = sphi 0, %s80
      %s95 = sphi 0, %s81
      %s99 = sphi 0, %s99
      %s101 = sphi 0, %s99
      %s102 = sphi 0, %s101
      %s116 = sphi 0, %s102
      %s120 = sphi 0, %s120
      %s122 = sphi 0, %s120
      %s123 = sphi 0, %s122
      %s137 = sphi 0, %s123
      %s141 = sphi 0, %s141
      %s143 = sphi 0, %s141
      %s144 = sphi 0, %s143
      %s158 = sphi 0, %s144
      %s162 = sphi 0, %s162
      %s164 = sphi 0, %s162
      %s165 = sphi 0, %s164
      %s179 = sphi 0, %s165
      %s183 = sphi 0, %s183
      %s185 = sphi 0, %s183
      %s186 = sphi 0, %s185
      %s200 = sphi 0, %s186
      %s206 = sphi 0, %s208
      %s209 = sphi 0, %s206
      %s210 = sphi 0, %s209
      %s226 = sphi 0, %s210
      %s232 = sphi 0, %s234
      %s235 = sphi 0, %s232
      %s236 = sphi 0, %s235
      %s252 = sphi 0, %s236
    $region4: #{_lambda_.2} parent=1 // loop_header_branch
      %21 = sbr.rel (%p19) target = $region8
    $region5: #{_lambda_.2} parent=1 // loop_body
      %s23 = ssub.s32 %s18, 1
      %s24 = ssub.s32 %s18, 2
      %s25 = sadd.s32 %s18, 1
      %s26 = ssub.s32 %s18, %s25
      %p27 = scmp.eq.s32.totalorder %s26, 0
      %s29 = sadd.s32 %s28, 1
      %s30 = scalar_select %p27, %s28, %s29
      %p33 = pneg %p27
      %p34 = scmp.eq.s32.totalorder %s18, 1
      %p35 = por %p33, %p34
      %p36 = scmp.ne.s32.totalorder %s28, %s31
      %p37 = scmp.eq.s32.totalorder %s18, 0
      %p38 = por %p36, %p37
      %p39 = scmp.ne.s32.totalorder %s28, %s31
      %p40 = scmp.eq.s32.totalorder %s23, 1
      %p41 = por %p39, %p40
      %p42 = scmp.ne.s32.totalorder %s31, %s32
      %p43 = scmp.eq.s32.totalorder %s23, 0
      %p44 = por %p42, %p43
      %p45 = scmp.ne.s32.totalorder %s31, %s32
      %p46 = scmp.eq.s32.totalorder %s24, 1
      %p47 = por %p45, %p46
      %p49 = scmp.ne.s32.totalorder %s32, %s48
      %p50 = scmp.eq.s32.totalorder %s24, 0
      %p51 = por %p49, %p50
      %s52 = ssub.s32 %s18, %s25
      %p53 = scmp.eq.s32.totalorder %s52, 0
      %s55 = sadd.s32 %s54, 1
      %s56 = scalar_select %p53, %s54, %s55
      %p59 = pneg %p53
      %p60 = scmp.eq.s32.totalorder %s18, 1
      %p61 = por %p59, %p60
      %p62 = scmp.ne.s32.totalorder %s54, %s57
      %p63 = scmp.eq.s32.totalorder %s18, 0
      %p64 = por %p62, %p63
      %p65 = scmp.ne.s32.totalorder %s54, %s57
      %p66 = scmp.eq.s32.totalorder %s23, 1
      %p67 = por %p65, %p66
      %p68 = scmp.ne.s32.totalorder %s57, %s58
      %p69 = scmp.eq.s32.totalorder %s23, 0
      %p70 = por %p68, %p69
      %p71 = scmp.ne.s32.totalorder %s57, %s58
      %p72 = scmp.eq.s32.totalorder %s24, 1
      %p73 = por %p71, %p72
      %p75 = scmp.ne.s32.totalorder %s58, %s74
      %p76 = scmp.eq.s32.totalorder %s24, 0
      %p77 = por %p75, %p76
      %s79 = sadd.s32 %s78, 1
      %p82 = scmp.eq.s32.totalorder %s18, 1
      %p83 = scmp.ne.s32.totalorder %s78, %s80
      %p84 = scmp.eq.s32.totalorder %s18, 0
      %p85 = por %p83, %p84
      %p86 = scmp.ne.s32.totalorder %s78, %s80
      %p87 = scmp.eq.s32.totalorder %s23, 1
      %p88 = por %p86, %p87
      %p89 = scmp.ne.s32.totalorder %s80, %s81
      %p90 = scmp.eq.s32.totalorder %s23, 0
      %p91 = por %p89, %p90
      %p92 = scmp.ne.s32.totalorder %s80, %s81
      %p93 = scmp.eq.s32.totalorder %s24, 1
      %p94 = por %p92, %p93
      %p96 = scmp.ne.s32.totalorder %s81, %s95
      %p97 = scmp.eq.s32.totalorder %s24, 0
      %p98 = por %p96, %p97
      %s100 = sadd.s32 %s99, 1
      %p103 = scmp.eq.s32.totalorder %s18, 1
      %p104 = scmp.ne.s32.totalorder %s99, %s101
      %p105 = scmp.eq.s32.totalorder %s18, 0
      %p106 = por %p104, %p105
      %p107 = scmp.ne.s32.totalorder %s99, %s101
      %p108 = scmp.eq.s32.totalorder %s23, 1
      %p109 = por %p107, %p108
      %p110 = scmp.ne.s32.totalorder %s101, %s102
      %p111 = scmp.eq.s32.totalorder %s23, 0
      %p112 = por %p110, %p111
      %p113 = scmp.ne.s32.totalorder %s101, %s102
      %p114 = scmp.eq.s32.totalorder %s24, 1
      %p115 = por %p113, %p114
      %p117 = scmp.ne.s32.totalorder %s102, %s116
      %p118 = scmp.eq.s32.totalorder %s24, 0
      %p119 = por %p117, %p118
      %s121 = sadd.s32 %s120, 1
      %p124 = scmp.eq.s32.totalorder %s18, 1
      %p125 = scmp.ne.s32.totalorder %s120, %s122
      %p126 = scmp.eq.s32.totalorder %s18, 0
      %p127 = por %p125, %p126
      %p128 = scmp.ne.s32.totalorder %s120, %s122
      %p129 = scmp.eq.s32.totalorder %s23, 1
      %p130 = por %p128, %p129
      %p131 = scmp.ne.s32.totalorder %s122, %s123
      %p132 = scmp.eq.s32.totalorder %s23, 0
      %p133 = por %p131, %p132
      %p134 = scmp.ne.s32.totalorder %s122, %s123
      %p135 = scmp.eq.s32.totalorder %s24, 1
      %p136 = por %p134, %p135
      %p138 = scmp.ne.s32.totalorder %s123, %s137
      %p139 = scmp.eq.s32.totalorder %s24, 0
      %p140 = por %p138, %p139
      %s142 = sadd.s32 %s141, 1
      %p145 = scmp.eq.s32.totalorder %s18, 1
      %p146 = scmp.ne.s32.totalorder %s141, %s143
      %p147 = scmp.eq.s32.totalorder %s18, 0
      %p148 = por %p146, %p147
      %p149 = scmp.ne.s32.totalorder %s141, %s143
      %p150 = scmp.eq.s32.totalorder %s23, 1
      %p151 = por %p149, %p150
      %p152 = scmp.ne.s32.totalorder %s143, %s144
      %p153 = scmp.eq.s32.totalorder %s23, 0
      %p154 = por %p152, %p153
      %p155 = scmp.ne.s32.totalorder %s143, %s144
      %p156 = scmp.eq.s32.totalorder %s24, 1
      %p157 = por %p155, %p156
      %p159 = scmp.ne.s32.totalorder %s144, %s158
      %p160 = scmp.eq.s32.totalorder %s24, 0
      %p161 = por %p159, %p160
      %s163 = sadd.s32 %s162, 1
      %p166 = scmp.eq.s32.totalorder %s18, 1
      %p167 = scmp.ne.s32.totalorder %s162, %s164
      %p168 = scmp.eq.s32.totalorder %s18, 0
      %p169 = por %p167, %p168
      %p170 = scmp.ne.s32.totalorder %s162, %s164
      %p171 = scmp.eq.s32.totalorder %s23, 1
      %p172 = por %p170, %p171
      %p173 = scmp.ne.s32.totalorder %s164, %s165
      %p174 = scmp.eq.s32.totalorder %s23, 0
      %p175 = por %p173, %p174
      %p176 = scmp.ne.s32.totalorder %s164, %s165
      %p177 = scmp.eq.s32.totalorder %s24, 1
      %p178 = por %p176, %p177
      %p180 = scmp.ne.s32.totalorder %s165, %s179
      %p181 = scmp.eq.s32.totalorder %s24, 0
      %p182 = por %p180, %p181
      %s184 = sadd.s32 %s183, 1
      %p187 = scmp.eq.s32.totalorder %s18, 1
      %p188 = scmp.ne.s32.totalorder %s183, %s185
      %p189 = scmp.eq.s32.totalorder %s18, 0
      %p190 = por %p188, %p189
      %p191 = scmp.ne.s32.totalorder %s183, %s185
      %p192 = scmp.eq.s32.totalorder %s23, 1
      %p193 = por %p191, %p192
      %p194 = scmp.ne.s32.totalorder %s185, %s186
      %p195 = scmp.eq.s32.totalorder %s23, 0
      %p196 = por %p194, %p195
      %p197 = scmp.ne.s32.totalorder %s185, %s186
      %p198 = scmp.eq.s32.totalorder %s24, 1
      %p199 = por %p197, %p198
      %p201 = scmp.ne.s32.totalorder %s186, %s200
      %p202 = scmp.eq.s32.totalorder %s24, 0
      %p203 = por %p201, %p202
      %s204 = ssub.s32 %s18, %s25
      %p205 = scmp.eq.s32.totalorder %s204, 0
      %s207 = sadd.s32 %s206, 1
      %s208 = scalar_select %p205, %s206, %s207
      %p211 = pneg %p205
      %p212 = scmp.eq.s32.totalorder %s18, 1
      %p213 = por %p211, %p212
      %p214 = scmp.ne.s32.totalorder %s206, %s209
      %p215 = scmp.eq.s32.totalorder %s18, 0
      %p216 = por %p214, %p215
      %p217 = scmp.ne.s32.totalorder %s206, %s209
      %p218 = scmp.eq.s32.totalorder %s23, 1
      %p219 = por %p217, %p218
      %p220 = scmp.ne.s32.totalorder %s209, %s210
      %p221 = scmp.eq.s32.totalorder %s23, 0
      %p222 = por %p220, %p221
      %p223 = scmp.ne.s32.totalorder %s209, %s210
      %p224 = scmp.eq.s32.totalorder %s24, 1
      %p225 = por %p223, %p224
      %p227 = scmp.ne.s32.totalorder %s210, %s226
      %p228 = scmp.eq.s32.totalorder %s24, 0
      %p229 = por %p227, %p228
      %s230 = ssub.s32 %s18, %s25
      %p231 = scmp.eq.s32.totalorder %s230, 0
      %s233 = sadd.s32 %s232, 1
      %s234 = scalar_select %p231, %s232, %s233
      %p237 = pneg %p231
      %p238 = scmp.eq.s32.totalorder %s18, 1
      %p239 = por %p237, %p238
      %p240 = scmp.ne.s32.totalorder %s232, %s235
      %p241 = scmp.eq.s32.totalorder %s18, 0
      %p242 = por %p240, %p241
      %p243 = scmp.ne.s32.totalorder %s232, %s235
      %p244 = scmp.eq.s32.totalorder %s23, 1
      %p245 = por %p243, %p244
      %p246 = scmp.ne.s32.totalorder %s235, %s236
      %p247 = scmp.eq.s32.totalorder %s23, 0
      %p248 = por %p246, %p247
      %p249 = scmp.ne.s32.totalorder %s235, %s236
      %p250 = scmp.eq.s32.totalorder %s24, 1
      %p251 = por %p249, %p250
      %p253 = scmp.ne.s32.totalorder %s236, %s252
      %p254 = scmp.eq.s32.totalorder %s24, 0
      %p255 = por %p253, %p254
      %p256 = scmp.le.s32.totalorder 1, %s18
      %p257 = scmp.lt.s32.totalorder %s18, 3
      %p258 = pnand %p256, %p257
      %p259 = pneg %p258
      // Predicated region
      $region9: #{_lambda_.2} parent=5 // pred_check
        _
      $region10: #{_lambda_.2} parent=5 // pred_check_branch
        %261 = sbr.rel (%p258) target = $region12
      $region11: #{_lambda_.2} parent=5 // pred_region
        %s262 = ssub.s32 %s18, 1
        // Predicated region
        $region13: #{_lambda_.2} parent=11 // pred_check
          %p263 = pneg %p91
        $region14: #{_lambda_.2} parent=11 // pred_check_branch
          %265 = sbr.rel (%p263) target = $region16
        $region15: #{_lambda_.2} parent=11 // pred_region
          %267 = vsyncadd [#allocation3], 0
          %s269 = sshll.u32 %s2, 4
          %s270 = int_to_ptr.hbm [resolvable:$true] %s269
          %s271 = sshll.u32 [#allocation2], 4
          %s272 = int_to_ptr.vmem [resolvable:$true] %s271
          %274 = dma.hbm_to_vmem [thread:$0]  %s270, 64, %s272, [#allocation3]
        $region16: #{_lambda_.2} parent=11 // pred_fallthru
          _
        // Predicated region
        $region17: #{_lambda_.2} parent=11 // pred_check
          %p275 = pneg %p112
        $region18: #{_lambda_.2} parent=11 // pred_check_branch
          %277 = sbr.rel (%p275) target = $region20
        $region19: #{_lambda_.2} parent=11 // pred_region
          _
        $region20: #{_lambda_.2} parent=11 // pred_fallthru
          _
        // Predicated region
        $region21: #{_lambda_.2} parent=11 // pred_check
          %p278 = pneg %p133
        $region22: #{_lambda_.2} parent=11 // pred_check_branch
          %280 = sbr.rel (%p278) target = $region24
        $region23: #{_lambda_.2} parent=11 // pred_region
          %282 = vsyncadd [#allocation5], 0
          %s283 = sshll.u32 %s4, 4
          %s284 = int_to_ptr.hbm [resolvable:$true] %s283
          %s285 = sshll.u32 [#allocation4], 4
          %s286 = int_to_ptr.vmem [resolvable:$true] %s285
          %291 = dma.hbm_to_vmem [thread:$0]  %s284, 256, %s286, [#allocation5], 128, 128, 8
        $region24: #{_lambda_.2} parent=11 // pred_fallthru
          _
        // Predicated region
        $region25: #{_lambda_.2} parent=11 // pred_check
          %p292 = pneg %p154
        $region26: #{_lambda_.2} parent=11 // pred_check_branch
          %294 = sbr.rel (%p292) target = $region28
        $region27: #{_lambda_.2} parent=11 // pred_region
          _
        $region28: #{_lambda_.2} parent=11 // pred_fallthru
          _
        // Predicated region
        $region29: #{_lambda_.2} parent=11 // pred_check
          %p295 = pneg %p175
        $region30: #{_lambda_.2} parent=11 // pred_check_branch
          %297 = sbr.rel (%p295) target = $region32
        $region31: #{_lambda_.2} parent=11 // pred_region
          _
        $region32: #{_lambda_.2} parent=11 // pred_fallthru
          _
        // Predicated region
        $region33: #{_lambda_.2} parent=11 // pred_check
          %p298 = pneg %p196
        $region34: #{_lambda_.2} parent=11 // pred_check_branch
          %300 = sbr.rel (%p298) target = $region36
        $region35: #{_lambda_.2} parent=11 // pred_region
          _
        $region36: #{_lambda_.2} parent=11 // pred_fallthru
          _
      $region12: #{_lambda_.2} parent=5 // pred_fallthru
        _
      %p301 = scmp.lt.s32.totalorder %s18, 2
      // Predicated region
      $region37: #{_lambda_.2} parent=5 // pred_check
        %p302 = pneg %p301
      $region38: #{_lambda_.2} parent=5 // pred_check_branch
        %304 = sbr.rel (%p302) target = $region40
      $region39: #{_lambda_.2} parent=5 // pred_region
        // Predicated region
        $region41: #{_lambda_.2} parent=39 // pred_check
          %p305 = pneg %p38
        $region42: #{_lambda_.2} parent=39 // pred_check_branch
          %307 = sbr.rel (%p305) target = $region44
        $region43: #{_lambda_.2} parent=39 // pred_region
          %p308 = scmp.lt.s32.totalorder %s18, 1
          %s309 = scalar_select %p308, %s18, 1
          %s310 = smul.addr %s309, 8
          %s311 = scalar_lea.vmem %s0, %s310
        $region44: #{_lambda_.2} parent=39 // pred_fallthru
          _
        // Predicated region
        $region45: #{_lambda_.2} parent=39 // pred_check
          %p312 = pneg %p64
        $region46: #{_lambda_.2} parent=39 // pred_check_branch
          %314 = sbr.rel (%p312) target = $region48
        $region47: #{_lambda_.2} parent=39 // pred_region
          %p315 = scmp.lt.s32.totalorder %s18, 1
          %s316 = scalar_select %p315, %s18, 1
          %s317 = smul.addr %s316, 8
          %s318 = scalar_lea.vmem %s1, %s317
        $region48: #{_lambda_.2} parent=39 // pred_fallthru
          _
      $region40: #{_lambda_.2} parent=5 // pred_fallthru
        _
      %p319 = scmp.le.s32.totalorder 1, %s18
      %p320 = scmp.lt.s32.totalorder %s18, 3
      %p321 = pnand %p319, %p320
      %p322 = pneg %p321
      // Predicated region
      $region49: #{_lambda_.2} parent=5 // pred_check
        _
      $region50: #{_lambda_.2} parent=5 // pred_check_branch
        %324 = sbr.rel (%p321) target = $region52
      $region51: #{_lambda_.2} parent=5 // pred_region
        %s325 = ssub.s32 %s18, 1
        // Predicated region
        $region53: #{_lambda_.2} parent=51 // pred_check
          %p326 = pneg %p91
        $region54: #{_lambda_.2} parent=51 // pred_check_branch
          %328 = sbr.rel (%p326) target = $region56
        $region55: #{_lambda_.2} parent=51 // pred_region
          %330 = dma.done [#allocation3], 64
        $region56: #{_lambda_.2} parent=51 // pred_fallthru
          _
        // Predicated region
        $region57: #{_lambda_.2} parent=51 // pred_check
          %p331 = pneg %p133
        $region58: #{_lambda_.2} parent=51 // pred_check_branch
          %333 = sbr.rel (%p331) target = $region60
        $region59: #{_lambda_.2} parent=51 // pred_region
          %335 = dma.done [#allocation5], 256
        $region60: #{_lambda_.2} parent=51 // pred_fallthru
          _
        %p336 = scmp.lt.s32.totalorder %s23, 1
        %s337 = scalar_select %p336, %s23, 1
        %s338 = smul.addr %s337, 8
        %s339 = scalar_lea.vmem %s0, %s338
        %p340 = pneg %p44
        %p341 = pneg %p41
        %p342 = scmp.lt.s32.totalorder %s23, 1
        %s343 = scalar_select %p342, %s23, 1
        %s344 = smul.addr %s343, 8
        %s345 = scalar_lea.vmem %s1, %s344
        %p346 = pneg %p70
        %p347 = pneg %p67
        %p348 = pneg %p91
        %p349 = pneg %p88
        %p350 = pneg %p112
        %p351 = pneg %p109
        %p352 = pneg %p133
        %p353 = pneg %p130
        %p354 = pneg %p154
        %p355 = pneg %p151
        %p356 = pneg %p175
        %p357 = pneg %p172
        %p358 = pneg %p196
        %p359 = pneg %p193
        %p360 = pneg %p222
        %p361 = pneg %p219
        %p362 = scmp.lt.s32.totalorder %s23, 1
        %s363 = scalar_select %p362, %s23, 1
        %s364 = smul.addr %s363, 8
        %s365 = scalar_lea.vmem %s8, %s364
        %p366 = pneg %p248
        %p367 = pneg %p245
        %p368 = scmp.lt.s32.totalorder %s23, 1
        %s369 = scalar_select %p368, %s23, 1
        %s370 = scalar_lea.vmem %s9, %s369
        %p371 = scmp.lt.s32.totalorder %s23, 1
        %s372 = scalar_select %p371, %s23, 1
        %s373 = smul.addr %s372, 8
        %s374 = scalar_lea.vmem %s0, %s373
        %p375 = scmp.lt.s32.totalorder %s23, 1
        %s376 = scalar_select %p375, %s23, 1
        %s377 = smul.addr %s376, 8
        %s378 = scalar_lea.vmem %s1, %s377
        %p379 = scmp.lt.s32.totalorder %s23, 1
        %s380 = scalar_select %p379, %s23, 1
        %s381 = smul.addr %s380, 8
        %s382 = scalar_lea.vmem %s8, %s381
        %p383 = scmp.lt.s32.totalorder %s23, 1
        %s384 = scalar_select %p383, %s23, 1
        %s385 = scalar_lea.vmem %s9, %s384
        %v386 = vld [vmem:[%s374] sm:$0xff]
        %v387 = vld [vmem:[%s378] sm:$0xff]
        %v389 = vrot.slane %v387, 1
        %v390 = vrot.slane %v387, 2
        %v391 = vrot.slane %v387, 3
        %v392 = vrot.slane %v387, 4
        %v393 = vrot.slane %v387, 5
        %v394 = vrot.slane %v387, 6
        %v395 = vrot.slane %v387, 7
        %v396 = vperm.slane %v387, 0
        %v397 = vperm.slane %v389, 0
        %v398 = vperm.slane %v390, 0
        %v399 = vperm.slane %v391, 0
        %v400 = vperm.slane %v392, 0
        %v401 = vperm.slane %v393, 0
        %v402 = vperm.slane %v394, 0
        %v403 = vperm.slane %v395, 0
        %v412 = vsub.f32 %v387, %v396
        %v413 = vsub.f32 %v387, %v397
        %v414 = vsub.f32 %v387, %v398
        %v415 = vsub.f32 %v387, %v399
        %v416 = vsub.f32 %v387, %v400
        %v417 = vsub.f32 %v387, %v401
        %v418 = vsub.f32 %v387, %v402
        %v419 = vsub.f32 %v387, %v403
        %v420 = vmul.f32 %v412, %v412
        %v421 = vmul.f32 %v413, %v413
        %v422 = vmul.f32 %v414, %v414
        %v423 = vmul.f32 %v415, %v415
        %v424 = vmul.f32 %v416, %v416
        %v425 = vmul.f32 %v417, %v417
        %v426 = vmul.f32 %v418, %v418
        %v427 = vmul.f32 %v419, %v419
        %vm428 = vcmask 23552
        %v429 = vsel %vm428, %v420, 0.0
        %430 = vadd.xlane.f32.xlu0 %v429
        %v431 = vpop.xlane.xlu0 %430
        %v432 = vsel %vm428, %v421, 0.0
        %433 = vadd.xlane.f32.xlu0 %v432
        %v434 = vpop.xlane.xlu0 %433
        %v435 = vsel %vm428, %v422, 0.0
        %436 = vadd.xlane.f32.xlu0 %v435
        %v437 = vpop.xlane.xlu0 %436
        %v438 = vsel %vm428, %v423, 0.0
        %439 = vadd.xlane.f32.xlu0 %v438
        %v440 = vpop.xlane.xlu0 %439
        %v441 = vsel %vm428, %v424, 0.0
        %442 = vadd.xlane.f32.xlu0 %v441
        %v443 = vpop.xlane.xlu0 %442
        %v444 = vsel %vm428, %v425, 0.0
        %445 = vadd.xlane.f32.xlu0 %v444
        %v446 = vpop.xlane.xlu0 %445
        %v447 = vsel %vm428, %v426, 0.0
        %448 = vadd.xlane.f32.xlu0 %v447
        %v449 = vpop.xlane.xlu0 %448
        %v450 = vsel %vm428, %v427, 0.0
        %451 = vadd.xlane.f32.xlu0 %v450
        %v452 = vpop.xlane.xlu0 %451
        %v453 = vrsqrt.pop %v431
        %v454 = vmul.f32 %v453, %v431
        %v455 = vmul.f32 %v454, %v453
        %v456 = vmul.f32 0.5, %v455
        %v457 = vsub.f32 1.5, %v456
        %v458 = vmul.f32 %v453, %v457
        %v459 = vmul.f32 %v431, %v458
        %vm460 = vcmp.eq.f32.partialorder %v431, inf
        %v461 = vsel %vm460, %v431, %v459
        %vm462 = vcmp.eq.f32.partialorder %v431, 0.0
        %v463 = vand.u32 %v431, 2147483648
        %v464 = vsel %vm462, %v463, %v461
        %v465 = vrsqrt.pop %v434
        %v466 = vmul.f32 %v465, %v434
        %v467 = vmul.f32 %v466, %v465
        %v468 = vmul.f32 0.5, %v467
        %v469 = vsub.f32 1.5, %v468
        %v470 = vmul.f32 %v465, %v469
        %v471 = vmul.f32 %v434, %v470
        %vm472 = vcmp.eq.f32.partialorder %v434, inf
        %v473 = vsel %vm472, %v434, %v471
        %vm474 = vcmp.eq.f32.partialorder %v434, 0.0
        %v475 = vand.u32 %v434, 2147483648
        %v476 = vsel %vm474, %v475, %v473
        %v477 = vrsqrt.pop %v437
        %v478 = vmul.f32 %v477, %v437
        %v479 = vmul.f32 %v478, %v477
        %v480 = vmul.f32 0.5, %v479
        %v481 = vsub.f32 1.5, %v480
        %v482 = vmul.f32 %v477, %v481
        %v483 = vmul.f32 %v437, %v482
        %vm484 = vcmp.eq.f32.partialorder %v437, inf
        %v485 = vsel %vm484, %v437, %v483
        %vm486 = vcmp.eq.f32.partialorder %v437, 0.0
        %v487 = vand.u32 %v437, 2147483648
        %v488 = vsel %vm486, %v487, %v485
        %v489 = vrsqrt.pop %v440
        %v490 = vmul.f32 %v489, %v440
        %v491 = vmul.f32 %v490, %v489
        %v492 = vmul.f32 0.5, %v491
        %v493 = vsub.f32 1.5, %v492
        %v494 = vmul.f32 %v489, %v493
        %v495 = vmul.f32 %v440, %v494
        %vm496 = vcmp.eq.f32.partialorder %v440, inf
        %v497 = vsel %vm496, %v440, %v495
        %vm498 = vcmp.eq.f32.partialorder %v440, 0.0
        %v499 = vand.u32 %v440, 2147483648
        %v500 = vsel %vm498, %v499, %v497
        %v501 = vrsqrt.pop %v443
        %v502 = vmul.f32 %v501, %v443
        %v503 = vmul.f32 %v502, %v501
        %v504 = vmul.f32 0.5, %v503
        %v505 = vsub.f32 1.5, %v504
        %v506 = vmul.f32 %v501, %v505
        %v507 = vmul.f32 %v443, %v506
        %vm508 = vcmp.eq.f32.partialorder %v443, inf
        %v509 = vsel %vm508, %v443, %v507
        %vm510 = vcmp.eq.f32.partialorder %v443, 0.0
        %v511 = vand.u32 %v443, 2147483648
        %v512 = vsel %vm510, %v511, %v509
        %v513 = vrsqrt.pop %v446
        %v514 = vmul.f32 %v513, %v446
        %v515 = vmul.f32 %v514, %v513
        %v516 = vmul.f32 0.5, %v515
        %v517 = vsub.f32 1.5, %v516
        %v518 = vmul.f32 %v513, %v517
        %v519 = vmul.f32 %v446, %v518
        %vm520 = vcmp.eq.f32.partialorder %v446, inf
        %v521 = vsel %vm520, %v446, %v519
        %vm522 = vcmp.eq.f32.partialorder %v446, 0.0
        %v523 = vand.u32 %v446, 2147483648
        %v524 = vsel %vm522, %v523, %v521
        %v525 = vrsqrt.pop %v449
        %v526 = vmul.f32 %v525, %v449
        %v527 = vmul.f32 %v526, %v525
        %v528 = vmul.f32 0.5, %v527
        %v529 = vsub.f32 1.5, %v528
        %v530 = vmul.f32 %v525, %v529
        %v531 = vmul.f32 %v449, %v530
        %vm532 = vcmp.eq.f32.partialorder %v449, inf
        %v533 = vsel %vm532, %v449, %v531
        %vm534 = vcmp.eq.f32.partialorder %v449, 0.0
        %v535 = vand.u32 %v449, 2147483648
        %v536 = vsel %vm534, %v535, %v533
        %v537 = vrsqrt.pop %v452
        %v538 = vmul.f32 %v537, %v452
        %v539 = vmul.f32 %v538, %v537
        %v540 = vmul.f32 0.5, %v539
        %v541 = vsub.f32 1.5, %v540
        %v542 = vmul.f32 %v537, %v541
        %v543 = vmul.f32 %v452, %v542
        %vm544 = vcmp.eq.f32.partialorder %v452, inf
        %v545 = vsel %vm544, %v452, %v543
        %vm546 = vcmp.eq.f32.partialorder %v452, 0.0
        %v547 = vand.u32 %v452, 2147483648
        %v548 = vsel %vm546, %v547, %v545
        %vm549 = vcmp.gt.f32.partialorder %v464, 1e-09
        %vm550 = vcmp.gt.f32.partialorder %v476, 1e-09
        %vm551 = vcmp.gt.f32.partialorder %v488, 1e-09
        %vm552 = vcmp.gt.f32.partialorder %v500, 1e-09
        %vm553 = vcmp.gt.f32.partialorder %v512, 1e-09
        %vm554 = vcmp.gt.f32.partialorder %v524, 1e-09
        %vm555 = vcmp.gt.f32.partialorder %v536, 1e-09
        %vm556 = vcmp.gt.f32.partialorder %v548, 1e-09
        %v557 = vmax.f32 %v464, 1e-09
        %v558 = vmax.f32 %v476, 1e-09
        %v559 = vmax.f32 %v488, 1e-09
        %v560 = vmax.f32 %v500, 1e-09
        %v561 = vmax.f32 %v512, 1e-09
        %v562 = vmax.f32 %v524, 1e-09
        %v563 = vmax.f32 %v536, 1e-09
        %v564 = vmax.f32 %v548, 1e-09
        %v565 = vrcp.pop %v557
        %v566 = vmul.f32 %v557, %v565
        %v567 = vsub.f32 1.0, %v566
        %v568 = vmul.f32 %v565, %v567
        %v569 = vadd.f32 %v565, %v568
        %vm570 = vweird.f32 %v557
        %vm571 = vweird.f32 %v565
        %vm572 = vmor %vm570, %vm571
        %v573 = vsel %vm572, %v565, %v569
        %v574 = vand.u32 2147483647, %v557
        %vm575 = vcmp.eq.f32.partialorder %v574, 8.507059e+37
        %v576 = vand.u32 %v557, 2147483648
        %v577 = vor.u32 1.1754944e-38, %v576
        %v578 = vsel %vm575, %v577, %v573
        %v579 = vmul.f32 %v412, %v578
        %v580 = vrcp.pop %v558
        %v581 = vmul.f32 %v558, %v580
        %v582 = vsub.f32 1.0, %v581
        %v583 = vmul.f32 %v580, %v582
        %v584 = vadd.f32 %v580, %v583
        %vm585 = vweird.f32 %v558
        %vm586 = vweird.f32 %v580
        %vm587 = vmor %vm585, %vm586
        %v588 = vsel %vm587, %v580, %v584
        %v589 = vand.u32 2147483647, %v558
        %vm590 = vcmp.eq.f32.partialorder %v589, 8.507059e+37
        %v591 = vand.u32 %v558, 2147483648
        %v592 = vor.u32 1.1754944e-38, %v591
        %v593 = vsel %vm590, %v592, %v588
        %v594 = vmul.f32 %v413, %v593
        %v595 = vrcp.pop %v559
        %v596 = vmul.f32 %v559, %v595
        %v597 = vsub.f32 1.0, %v596
        %v598 = vmul.f32 %v595, %v597
        %v599 = vadd.f32 %v595, %v598
        %vm600 = vweird.f32 %v559
        %vm601 = vweird.f32 %v595
        %vm602 = vmor %vm600, %vm601
        %v603 = vsel %vm602, %v595, %v599
        %v604 = vand.u32 2147483647, %v559
        %vm605 = vcmp.eq.f32.partialorder %v604, 8.507059e+37
        %v606 = vand.u32 %v559, 2147483648
        %v607 = vor.u32 1.1754944e-38, %v606
        %v608 = vsel %vm605, %v607, %v603
        %v609 = vmul.f32 %v414, %v608
        %v610 = vrcp.pop %v560
        %v611 = vmul.f32 %v560, %v610
        %v612 = vsub.f32 1.0, %v611
        %v613 = vmul.f32 %v610, %v612
        %v614 = vadd.f32 %v610, %v613
        %vm615 = vweird.f32 %v560
        %vm616 = vweird.f32 %v610
        %vm617 = vmor %vm615, %vm616
        %v618 = vsel %vm617, %v610, %v614
        %v619 = vand.u32 2147483647, %v560
        %vm620 = vcmp.eq.f32.partialorder %v619, 8.507059e+37
        %v621 = vand.u32 %v560, 2147483648
        %v622 = vor.u32 1.1754944e-38, %v621
        %v623 = vsel %vm620, %v622, %v618
        %v624 = vmul.f32 %v415, %v623
        %v625 = vrcp.pop %v561
        %v626 = vmul.f32 %v561, %v625
        %v627 = vsub.f32 1.0, %v626
        %v628 = vmul.f32 %v625, %v627
        %v629 = vadd.f32 %v625, %v628
        %vm630 = vweird.f32 %v561
        %vm631 = vweird.f32 %v625
        %vm632 = vmor %vm630, %vm631
        %v633 = vsel %vm632, %v625, %v629
        %v634 = vand.u32 2147483647, %v561
        %vm635 = vcmp.eq.f32.partialorder %v634, 8.507059e+37
        %v636 = vand.u32 %v561, 2147483648
        %v637 = vor.u32 1.1754944e-38, %v636
        %v638 = vsel %vm635, %v637, %v633
        %v639 = vmul.f32 %v416, %v638
        %v640 = vrcp.pop %v562
        %v641 = vmul.f32 %v562, %v640
        %v642 = vsub.f32 1.0, %v641
        %v643 = vmul.f32 %v640, %v642
        %v644 = vadd.f32 %v640, %v643
        %vm645 = vweird.f32 %v562
        %vm646 = vweird.f32 %v640
        %vm647 = vmor %vm645, %vm646
        %v648 = vsel %vm647, %v640, %v644
        %v649 = vand.u32 2147483647, %v562
        %vm650 = vcmp.eq.f32.partialorder %v649, 8.507059e+37
        %v651 = vand.u32 %v562, 2147483648
        %v652 = vor.u32 1.1754944e-38, %v651
        %v653 = vsel %vm650, %v652, %v648
        %v654 = vmul.f32 %v417, %v653
        %v655 = vrcp.pop %v563
        %v656 = vmul.f32 %v563, %v655
        %v657 = vsub.f32 1.0, %v656
        %v658 = vmul.f32 %v655, %v657
        %v659 = vadd.f32 %v655, %v658
        %vm660 = vweird.f32 %v563
        %vm661 = vweird.f32 %v655
        %vm662 = vmor %vm660, %vm661
        %v663 = vsel %vm662, %v655, %v659
        %v664 = vand.u32 2147483647, %v563
        %vm665 = vcmp.eq.f32.partialorder %v664, 8.507059e+37
        %v666 = vand.u32 %v563, 2147483648
        %v667 = vor.u32 1.1754944e-38, %v666
        %v668 = vsel %vm665, %v667, %v663
        %v669 = vmul.f32 %v418, %v668
        %v670 = vrcp.pop %v564
        %v671 = vmul.f32 %v564, %v670
        %v672 = vsub.f32 1.0, %v671
        %v673 = vmul.f32 %v670, %v672
        %v674 = vadd.f32 %v670, %v673
        %vm675 = vweird.f32 %v564
        %vm676 = vweird.f32 %v670
        %vm677 = vmor %vm675, %vm676
        %v678 = vsel %vm677, %v670, %v674
        %v679 = vand.u32 2147483647, %v564
        %vm680 = vcmp.eq.f32.partialorder %v679, 8.507059e+37
        %v681 = vand.u32 %v564, 2147483648
        %v682 = vor.u32 1.1754944e-38, %v681
        %v683 = vsel %vm680, %v682, %v678
        %v684 = vmul.f32 %v419, %v683
        %v685 = vsel %vm549, 1, 0
        %v686 = vsel %vm550, 1, 0
        %v687 = vsel %vm551, 1, 0
        %v688 = vsel %vm552, 1, 0
        %v689 = vsel %vm553, 1, 0
        %v690 = vsel %vm554, 1, 0
        %v691 = vsel %vm555, 1, 0
        %v692 = vsel %vm556, 1, 0
        %vm693 = vcmp.eq.s32.totalorder %v685, 1
        %vm694 = vcmp.eq.s32.totalorder %v686, 1
        %vm695 = vcmp.eq.s32.totalorder %v687, 1
        %vm696 = vcmp.eq.s32.totalorder %v688, 1
        %vm697 = vcmp.eq.s32.totalorder %v689, 1
        %vm698 = vcmp.eq.s32.totalorder %v690, 1
        %vm699 = vcmp.eq.s32.totalorder %v691, 1
        %vm700 = vcmp.eq.s32.totalorder %v692, 1
        %v701 = vsel %vm693, %v579, 0.0
        %v702 = vsel %vm694, %v594, 0.0
        %v703 = vsel %vm695, %v609, 0.0
        %v704 = vsel %vm696, %v624, 0.0
        %v705 = vsel %vm697, %v639, 0.0
        %v706 = vsel %vm698, %v654, 0.0
        %v707 = vsel %vm699, %v669, 0.0
        %v708 = vsel %vm700, %v684, 0.0
        %717 = vrot.lane.b32.xlu0 %v701, 127
        %v718 = vpop.permute.xlu0 %717
        %719 = vrot.lane.b32.xlu0 %v702, 127
        %v720 = vpop.permute.xlu0 %719
        %721 = vrot.lane.b32.xlu0 %v703, 127
        %v722 = vpop.permute.xlu0 %721
        %723 = vrot.lane.b32.xlu0 %v704, 127
        %v724 = vpop.permute.xlu0 %723
        %725 = vrot.lane.b32.xlu0 %v705, 127
        %v726 = vpop.permute.xlu0 %725
        %727 = vrot.lane.b32.xlu0 %v706, 127
        %v728 = vpop.permute.xlu0 %727
        %729 = vrot.lane.b32.xlu0 %v707, 127
        %v730 = vpop.permute.xlu0 %729
        %731 = vrot.lane.b32.xlu0 %v708, 127
        %v732 = vpop.permute.xlu0 %731
        %741 = vrot.lane.b32.xlu0 %v701, 2
        %v742 = vpop.permute.xlu0 %741
        %743 = vrot.lane.b32.xlu0 %v702, 2
        %v744 = vpop.permute.xlu0 %743
        %745 = vrot.lane.b32.xlu0 %v703, 2
        %v746 = vpop.permute.xlu0 %745
        %747 = vrot.lane.b32.xlu0 %v704, 2
        %v748 = vpop.permute.xlu0 %747
        %749 = vrot.lane.b32.xlu0 %v705, 2
        %v750 = vpop.permute.xlu0 %749
        %751 = vrot.lane.b32.xlu0 %v706, 2
        %v752 = vpop.permute.xlu0 %751
        %753 = vrot.lane.b32.xlu0 %v707, 2
        %v754 = vpop.permute.xlu0 %753
        %755 = vrot.lane.b32.xlu0 %v708, 2
        %v756 = vpop.permute.xlu0 %755
        %vm765 = vcmask 7168
        %vm766 = vcmask 15360
        %v767 = vsel %vm766, %v718, %v742
        %v768 = vsel %vm766, %v720, %v744
        %v769 = vsel %vm766, %v722, %v746
        %v770 = vsel %vm766, %v724, %v748
        %v771 = vsel %vm766, %v726, %v750
        %v772 = vsel %vm766, %v728, %v752
        %v773 = vsel %vm766, %v730, %v754
        %v774 = vsel %vm766, %v732, %v756
        %v775 = vmul.f32 %v767, 1.7320508
        %v776 = vmul.f32 %v768, 1.7320508
        %v777 = vmul.f32 %v769, 1.7320508
        %v778 = vmul.f32 %v770, 1.7320508
        %v779 = vmul.f32 %v771, 1.7320508
        %v780 = vmul.f32 %v772, 1.7320508
        %v781 = vmul.f32 %v773, 1.7320508
        %v782 = vmul.f32 %v774, 1.7320508
        %v783 = vlaneseq
        %v784 = vand.u32 %v783, 127
        %v785 = vcvt.s32.f32 %v784
        %v786 = vmul.f32 %v785, 0.5
        %v787 = vsub.f32 %v464, %v786
        %v788 = vsub.f32 %v476, %v786
        %v789 = vsub.f32 %v488, %v786
        %v790 = vsub.f32 %v500, %v786
        %v791 = vsub.f32 %v512, %v786
        %v792 = vsub.f32 %v524, %v786
        %v793 = vsub.f32 %v536, %v786
        %v794 = vsub.f32 %v548, %v786
        %v795 = vrcp.pop 0.4
        %v796 = vmul.f32 0.4, %v795
        %v797 = vsub.f32 1.0, %v796
        %v798 = vmul.f32 %v795, %v797
        %v799 = vadd.f32 %v795, %v798
        %vm800 = vweird.f32 %v795
        %v801 = vsel %vm800, %v795, %v799
        %v802 = vmul.f32 %v787, %v801
        %v803 = vmul.f32 %v788, %v801
        %v804 = vmul.f32 %v789, %v801
        %v805 = vmul.f32 %v790, %v801
        %v806 = vmul.f32 %v791, %v801
        %v807 = vmul.f32 %v792, %v801
        %v808 = vmul.f32 %v793, %v801
        %v809 = vmul.f32 %v794, %v801
        %v810 = vmul.f32 %v802, %v802
        %v811 = vmul.f32 %v803, %v803
        %v812 = vmul.f32 %v804, %v804
        %v813 = vmul.f32 %v805, %v805
        %v814 = vmul.f32 %v806, %v806
        %v815 = vmul.f32 %v807, %v807
        %v816 = vmul.f32 %v808, %v808
        %v817 = vmul.f32 %v809, %v809
        %v818 = vsub.f32 0.0, %v810
        %v819 = vsub.f32 0.0, %v811
        %v820 = vsub.f32 0.0, %v812
        %v821 = vsub.f32 0.0, %v813
        %v822 = vsub.f32 0.0, %v814
        %v823 = vsub.f32 0.0, %v815
        %v824 = vsub.f32 0.0, %v816
        %v825 = vsub.f32 0.0, %v817
        %v826 = vmul.f32 %v818, 1.442695
        %v827 = vpow.pop %v826
        %v828 = vmul.f32 %v819, 1.442695
        %v829 = vpow.pop %v828
        %v830 = vmul.f32 %v820, 1.442695
        %v831 = vpow.pop %v830
        %v832 = vmul.f32 %v821, 1.442695
        %v833 = vpow.pop %v832
        %v834 = vmul.f32 %v822, 1.442695
        %v835 = vpow.pop %v834
        %v836 = vmul.f32 %v823, 1.442695
        %v837 = vpow.pop %v836
        %v838 = vmul.f32 %v824, 1.442695
        %v839 = vpow.pop %v838
        %v840 = vmul.f32 %v825, 1.442695
        %v841 = vpow.pop %v840
        %v842 = vld [vmem:[#allocation2] sm:$0x7]
        %v843 = vld [vmem:[%s3] sm:$0x1]
        %v844 = vld [vmem:[#allocation4] sm:$0xff]
        %v845 = vld [vmem:[#allocation4 + $0x8] sm:$0xff]
        %v846 = vld [vmem:[%s5] sm:$0x1]
        %v847 = vld [vmem:[%s6] sm:$0xff]
        %v848 = vld [vmem:[%s6 + $0x8] sm:$0xff]
        %v849 = vld [vmem:[%s7] sm:$0x1]
        %v851 = vperm.slane %v843, 0
        %v854 = vsel %vm428, %v827, 0
        %v857 = vsel %vm428, %v829, 0
        %v860 = vsel %vm428, %v831, 0
        %v863 = vsel %vm428, %v833, 0
        %v866 = vsel %vm428, %v835, 0
        %v869 = vsel %vm428, %v837, 0
        %v872 = vsel %vm428, %v839, 0
        %v875 = vsel %vm428, %v841, 0
        %vm877 = vcmask 1042432
        %v879 = vsel %vm877, %v842, 0
        %881 = vmatpush.msra.mxu0 0.0
        %882 = vmatpush.msra.mxu0 0.0
        %883 = vmatpush.msra.mxu0 0.0
        %884 = vmatpush.msra.mxu0 0.0
        %885 = vmatpush.msra.mxu0 0.0
        %886 = vmatpush.msra.mxu0 0.0
        %887 = vmatpush.msra.mxu0 0.0
        %888 = vmatpush.msra.mxu0 0.0
        %889 = vmatpush.msra.mxu0 0.0
        %890 = vmatpush.msra.mxu0 0.0
        %891 = vmatpush.msra.mxu0 0.0
        %892 = vmatpush.msra.mxu0 0.0
        %893 = vmatpush.msra.mxu0 0.0
        %894 = vmatpush.msra.mxu0 0.0
        %895 = vmatpush.msra.mxu0 0.0
        %896 = vmatpush.msra.mxu0 %v879
        %897 = vmatmul.f32.gmra.mxu0 %v854
        %v898 = vpop.f32.mrf.mxu0
        %v899 = vadd.f32 %v851, %v898
        %900 = vmatmul.f32.gmra.mxu0 %v857
        %v901 = vpop.f32.mrf.mxu0
        %v902 = vadd.f32 %v851, %v901
        %903 = vmatmul.f32.gmra.mxu0 %v860
        %v904 = vpop.f32.mrf.mxu0
        %v905 = vadd.f32 %v851, %v904
        %906 = vmatmul.f32.gmra.mxu0 %v863
        %v907 = vpop.f32.mrf.mxu0
        %v908 = vadd.f32 %v851, %v907
        %909 = vmatmul.f32.gmra.mxu0 %v866
        %v910 = vpop.f32.mrf.mxu0
        %v911 = vadd.f32 %v851, %v910
        %912 = vmatmul.f32.gmra.mxu0 %v869
        %v913 = vpop.f32.mrf.mxu0
        %v914 = vadd.f32 %v851, %v913
        %915 = vmatmul.f32.gmra.mxu0 %v872
        %v916 = vpop.f32.mrf.mxu0
        %v917 = vadd.f32 %v851, %v916
        %918 = vmatmul.f32.gmra.mxu0 %v875
        %v919 = vpop.f32.mrf.mxu0
        %v920 = vadd.f32 %v851, %v919
        %921 = vdwg.mxu0
        %v922 = vsub.f32 0.0, %v899
        %v923 = vsub.f32 0.0, %v902
        %v924 = vsub.f32 0.0, %v905
        %v925 = vsub.f32 0.0, %v908
        %v926 = vsub.f32 0.0, %v911
        %v927 = vsub.f32 0.0, %v914
        %v928 = vsub.f32 0.0, %v917
        %v929 = vsub.f32 0.0, %v920
        %v930 = vmul.f32 %v922, 1.442695
        %v931 = vpow.pop %v930
        %v932 = vmul.f32 %v923, 1.442695
        %v933 = vpow.pop %v932
        %v934 = vmul.f32 %v924, 1.442695
        %v935 = vpow.pop %v934
        %v936 = vmul.f32 %v925, 1.442695
        %v937 = vpow.pop %v936
        %v938 = vmul.f32 %v926, 1.442695
        %v939 = vpow.pop %v938
        %v940 = vmul.f32 %v927, 1.442695
        %v941 = vpow.pop %v940
        %v942 = vmul.f32 %v928, 1.442695
        %v943 = vpow.pop %v942
        %v944 = vmul.f32 %v929, 1.442695
        %v945 = vpow.pop %v944
        %v946 = vadd.f32 %v931, 1.0
        %v947 = vadd.f32 %v933, 1.0
        %v948 = vadd.f32 %v935, 1.0
        %v949 = vadd.f32 %v937, 1.0
        %v950 = vadd.f32 %v939, 1.0
        %v951 = vadd.f32 %v941, 1.0
        %v952 = vadd.f32 %v943, 1.0
        %v953 = vadd.f32 %v945, 1.0
        %v954 = vrcp.pop %v946
        %v955 = vmul.f32 %v946, %v954
        %v956 = vsub.f32 1.0, %v955
        %v957 = vmul.f32 %v954, %v956
        %v958 = vadd.f32 %v954, %v957
        %vm959 = vweird.f32 %v946
        %vm960 = vweird.f32 %v954
        %vm961 = vmor %vm959, %vm960
        %v962 = vsel %vm961, %v954, %v958
        %v963 = vand.u32 2147483647, %v946
        %vm964 = vcmp.eq.f32.partialorder %v963, 8.507059e+37
        %v965 = vand.u32 %v946, 2147483648
        %v966 = vor.u32 1.1754944e-38, %v965
        %v967 = vsel %vm964, %v966, %v962
        %v968 = vmul.f32 1.0, %v967
        %v969 = vrcp.pop %v947
        %v970 = vmul.f32 %v947, %v969
        %v971 = vsub.f32 1.0, %v970
        %v972 = vmul.f32 %v969, %v971
        %v973 = vadd.f32 %v969, %v972
        %vm974 = vweird.f32 %v947
        %vm975 = vweird.f32 %v969
        %vm976 = vmor %vm974, %vm975
        %v977 = vsel %vm976, %v969, %v973
        %v978 = vand.u32 2147483647, %v947
        %vm979 = vcmp.eq.f32.partialorder %v978, 8.507059e+37
        %v980 = vand.u32 %v947, 2147483648
        %v981 = vor.u32 1.1754944e-38, %v980
        %v982 = vsel %vm979, %v981, %v977
        %v983 = vmul.f32 1.0, %v982
        %v984 = vrcp.pop %v948
        %v985 = vmul.f32 %v948, %v984
        %v986 = vsub.f32 1.0, %v985
        %v987 = vmul.f32 %v984, %v986
        %v988 = vadd.f32 %v984, %v987
        %vm989 = vweird.f32 %v948
        %vm990 = vweird.f32 %v984
        %vm991 = vmor %vm989, %vm990
        %v992 = vsel %vm991, %v984, %v988
        %v993 = vand.u32 2147483647, %v948
        %vm994 = vcmp.eq.f32.partialorder %v993, 8.507059e+37
        %v995 = vand.u32 %v948, 2147483648
        %v996 = vor.u32 1.1754944e-38, %v995
        %v997 = vsel %vm994, %v996, %v992
        %v998 = vmul.f32 1.0, %v997
        %v999 = vrcp.pop %v949
        %v1000 = vmul.f32 %v949, %v999
        %v1001 = vsub.f32 1.0, %v1000
        %v1002 = vmul.f32 %v999, %v1001
        %v1003 = vadd.f32 %v999, %v1002
        %vm1004 = vweird.f32 %v949
        %vm1005 = vweird.f32 %v999
        %vm1006 = vmor %vm1004, %vm1005
        %v1007 = vsel %vm1006, %v999, %v1003
        %v1008 = vand.u32 2147483647, %v949
        %vm1009 = vcmp.eq.f32.partialorder %v1008, 8.507059e+37
        %v1010 = vand.u32 %v949, 2147483648
        %v1011 = vor.u32 1.1754944e-38, %v1010
        %v1012 = vsel %vm1009, %v1011, %v1007
        %v1013 = vmul.f32 1.0, %v1012
        %v1014 = vrcp.pop %v950
        %v1015 = vmul.f32 %v950, %v1014
        %v1016 = vsub.f32 1.0, %v1015
        %v1017 = vmul.f32 %v1014, %v1016
        %v1018 = vadd.f32 %v1014, %v1017
        %vm1019 = vweird.f32 %v950
        %vm1020 = vweird.f32 %v1014
        %vm1021 = vmor %vm1019, %vm1020
        %v1022 = vsel %vm1021, %v1014, %v1018
        %v1023 = vand.u32 2147483647, %v950
        %vm1024 = vcmp.eq.f32.partialorder %v1023, 8.507059e+37
        %v1025 = vand.u32 %v950, 2147483648
        %v1026 = vor.u32 1.1754944e-38, %v1025
        %v1027 = vsel %vm1024, %v1026, %v1022
        %v1028 = vmul.f32 1.0, %v1027
        %v1029 = vrcp.pop %v951
        %v1030 = vmul.f32 %v951, %v1029
        %v1031 = vsub.f32 1.0, %v1030
        %v1032 = vmul.f32 %v1029, %v1031
        %v1033 = vadd.f32 %v1029, %v1032
        %vm1034 = vweird.f32 %v951
        %vm1035 = vweird.f32 %v1029
        %vm1036 = vmor %vm1034, %vm1035
        %v1037 = vsel %vm1036, %v1029, %v1033
        %v1038 = vand.u32 2147483647, %v951
        %vm1039 = vcmp.eq.f32.partialorder %v1038, 8.507059e+37
        %v1040 = vand.u32 %v951, 2147483648
        %v1041 = vor.u32 1.1754944e-38, %v1040
        %v1042 = vsel %vm1039, %v1041, %v1037
        %v1043 = vmul.f32 1.0, %v1042
        %v1044 = vrcp.pop %v952
        %v1045 = vmul.f32 %v952, %v1044
        %v1046 = vsub.f32 1.0, %v1045
        %v1047 = vmul.f32 %v1044, %v1046
        %v1048 = vadd.f32 %v1044, %v1047
        %vm1049 = vweird.f32 %v952
        %vm1050 = vweird.f32 %v1044
        %vm1051 = vmor %vm1049, %vm1050
        %v1052 = vsel %vm1051, %v1044, %v1048
        %v1053 = vand.u32 2147483647, %v952
        %vm1054 = vcmp.eq.f32.partialorder %v1053, 8.507059e+37
        %v1055 = vand.u32 %v952, 2147483648
        %v1056 = vor.u32 1.1754944e-38, %v1055
        %v1057 = vsel %vm1054, %v1056, %v1052
        %v1058 = vmul.f32 1.0, %v1057
        %v1059 = vrcp.pop %v953
        %v1060 = vmul.f32 %v953, %v1059
        %v1061 = vsub.f32 1.0, %v1060
        %v1062 = vmul.f32 %v1059, %v1061
        %v1063 = vadd.f32 %v1059, %v1062
        %vm1064 = vweird.f32 %v953
        %vm1065 = vweird.f32 %v1059
        %vm1066 = vmor %vm1064, %vm1065
        %v1067 = vsel %vm1066, %v1059, %v1063
        %v1068 = vand.u32 2147483647, %v953
        %vm1069 = vcmp.eq.f32.partialorder %v1068, 8.507059e+37
        %v1070 = vand.u32 %v953, 2147483648
        %v1071 = vor.u32 1.1754944e-38, %v1070
        %v1072 = vsel %vm1069, %v1071, %v1067
        %v1073 = vmul.f32 1.0, %v1072
        %v1074 = vmul.f32 %v899, %v968
        %v1075 = vmul.f32 %v902, %v983
        %v1076 = vmul.f32 %v905, %v998
        %v1077 = vmul.f32 %v908, %v1013
        %v1078 = vmul.f32 %v911, %v1028
        %v1079 = vmul.f32 %v914, %v1043
        %v1080 = vmul.f32 %v917, %v1058
        %v1081 = vmul.f32 %v920, %v1073
        %v1083 = vperm.slane %v846, 0
        %vm1085 = vcmask 130048
        %v1087 = vsel %vm1085, %v1074, 0
        %v1090 = vsel %vm1085, %v1075, 0
        %v1093 = vsel %vm1085, %v1076, 0
        %v1096 = vsel %vm1085, %v1077, 0
        %v1099 = vsel %vm1085, %v1078, 0
        %v1102 = vsel %vm1085, %v1079, 0
        %v1105 = vsel %vm1085, %v1080, 0
        %v1108 = vsel %vm1085, %v1081, 0
        %1110 = vmatpush.msra.mxu0 0.0
        %1111 = vmatpush.msra.mxu0 0.0
        %1112 = vmatpush.msra.mxu0 0.0
        %1113 = vmatpush.msra.mxu0 0.0
        %1114 = vmatpush.msra.mxu0 0.0
        %1115 = vmatpush.msra.mxu0 0.0
        %1116 = vmatpush.msra.mxu0 0.0
        %1117 = vmatpush.msra.mxu0 0.0
        %1118 = vmatpush.msra.mxu0 0.0
        %1119 = vmatpush.msra.mxu0 0.0
        %1120 = vmatpush.msra.mxu0 0.0
        %1121 = vmatpush.msra.mxu0 0.0
        %1122 = vmatpush.msra.mxu0 0.0
        %1123 = vmatpush.msra.mxu0 0.0
        %1124 = vmatpush.msra.mxu0 %v845
        %1125 = vmatpush.msra.mxu0 %v844
        %1126 = vmatmul.f32.gmra.mxu0 %v1087
        %v1127 = vpop.f32.mrf.mxu0
        %v1128 = vadd.f32 %v1083, %v1127
        %1129 = vmatmul.f32.gmra.mxu0 %v1090
        %v1130 = vpop.f32.mrf.mxu0
        %v1131 = vadd.f32 %v1083, %v1130
        %1132 = vmatmul.f32.gmra.mxu0 %v1093
        %v1133 = vpop.f32.mrf.mxu0
        %v1134 = vadd.f32 %v1083, %v1133
        %1135 = vmatmul.f32.gmra.mxu0 %v1096
        %v1136 = vpop.f32.mrf.mxu0
        %v1137 = vadd.f32 %v1083, %v1136
        %1138 = vmatmul.f32.gmra.mxu0 %v1099
        %v1139 = vpop.f32.mrf.mxu0
        %v1140 = vadd.f32 %v1083, %v1139
        %1141 = vmatmul.f32.gmra.mxu0 %v1102
        %v1142 = vpop.f32.mrf.mxu0
        %v1143 = vadd.f32 %v1083, %v1142
        %1144 = vmatmul.f32.gmra.mxu0 %v1105
        %v1145 = vpop.f32.mrf.mxu0
        %v1146 = vadd.f32 %v1083, %v1145
        %1147 = vmatmul.f32.gmra.mxu0 %v1108
        %v1148 = vpop.f32.mrf.mxu0
        %v1149 = vadd.f32 %v1083, %v1148
        %1150 = vdwg.mxu0
        %v1151 = vsub.f32 0.0, %v1128
        %v1152 = vsub.f32 0.0, %v1131
        %v1153 = vsub.f32 0.0, %v1134
        %v1154 = vsub.f32 0.0, %v1137
        %v1155 = vsub.f32 0.0, %v1140
        %v1156 = vsub.f32 0.0, %v1143
        %v1157 = vsub.f32 0.0, %v1146
        %v1158 = vsub.f32 0.0, %v1149
        %v1159 = vmul.f32 %v1151, 1.442695
        %v1160 = vpow.pop %v1159
        %v1161 = vmul.f32 %v1152, 1.442695
        %v1162 = vpow.pop %v1161
        %v1163 = vmul.f32 %v1153, 1.442695
        %v1164 = vpow.pop %v1163
        %v1165 = vmul.f32 %v1154, 1.442695
        %v1166 = vpow.pop %v1165
        %v1167 = vmul.f32 %v1155, 1.442695
        %v1168 = vpow.pop %v1167
        %v1169 = vmul.f32 %v1156, 1.442695
        %v1170 = vpow.pop %v1169
        %v1171 = vmul.f32 %v1157, 1.442695
        %v1172 = vpow.pop %v1171
        %v1173 = vmul.f32 %v1158, 1.442695
        %v1174 = vpow.pop %v1173
        %v1175 = vadd.f32 %v1160, 1.0
        %v1176 = vadd.f32 %v1162, 1.0
        %v1177 = vadd.f32 %v1164, 1.0
        %v1178 = vadd.f32 %v1166, 1.0
        %v1179 = vadd.f32 %v1168, 1.0
        %v1180 = vadd.f32 %v1170, 1.0
        %v1181 = vadd.f32 %v1172, 1.0
        %v1182 = vadd.f32 %v1174, 1.0
        %v1183 = vrcp.pop %v1175
        %v1184 = vmul.f32 %v1175, %v1183
        %v1185 = vsub.f32 1.0, %v1184
        %v1186 = vmul.f32 %v1183, %v1185
        %v1187 = vadd.f32 %v1183, %v1186
        %vm1188 = vweird.f32 %v1175
        %vm1189 = vweird.f32 %v1183
        %vm1190 = vmor %vm1188, %vm1189
        %v1191 = vsel %vm1190, %v1183, %v1187
        %v1192 = vand.u32 2147483647, %v1175
        %vm1193 = vcmp.eq.f32.partialorder %v1192, 8.507059e+37
        %v1194 = vand.u32 %v1175, 2147483648
        %v1195 = vor.u32 1.1754944e-38, %v1194
        %v1196 = vsel %vm1193, %v1195, %v1191
        %v1197 = vmul.f32 1.0, %v1196
        %v1198 = vrcp.pop %v1176
        %v1199 = vmul.f32 %v1176, %v1198
        %v1200 = vsub.f32 1.0, %v1199
        %v1201 = vmul.f32 %v1198, %v1200
        %v1202 = vadd.f32 %v1198, %v1201
        %vm1203 = vweird.f32 %v1176
        %vm1204 = vweird.f32 %v1198
        %vm1205 = vmor %vm1203, %vm1204
        %v1206 = vsel %vm1205, %v1198, %v1202
        %v1207 = vand.u32 2147483647, %v1176
        %vm1208 = vcmp.eq.f32.partialorder %v1207, 8.507059e+37
        %v1209 = vand.u32 %v1176, 2147483648
        %v1210 = vor.u32 1.1754944e-38, %v1209
        %v1211 = vsel %vm1208, %v1210, %v1206
        %v1212 = vmul.f32 1.0, %v1211
        %v1213 = vrcp.pop %v1177
        %v1214 = vmul.f32 %v1177, %v1213
        %v1215 = vsub.f32 1.0, %v1214
        %v1216 = vmul.f32 %v1213, %v1215
        %v1217 = vadd.f32 %v1213, %v1216
        %vm1218 = vweird.f32 %v1177
        %vm1219 = vweird.f32 %v1213
        %vm1220 = vmor %vm1218, %vm1219
        %v1221 = vsel %vm1220, %v1213, %v1217
        %v1222 = vand.u32 2147483647, %v1177
        %vm1223 = vcmp.eq.f32.partialorder %v1222, 8.507059e+37
        %v1224 = vand.u32 %v1177, 2147483648
        %v1225 = vor.u32 1.1754944e-38, %v1224
        %v1226 = vsel %vm1223, %v1225, %v1221
        %v1227 = vmul.f32 1.0, %v1226
        %v1228 = vrcp.pop %v1178
        %v1229 = vmul.f32 %v1178, %v1228
        %v1230 = vsub.f32 1.0, %v1229
        %v1231 = vmul.f32 %v1228, %v1230
        %v1232 = vadd.f32 %v1228, %v1231
        %vm1233 = vweird.f32 %v1178
        %vm1234 = vweird.f32 %v1228
        %vm1235 = vmor %vm1233, %vm1234
        %v1236 = vsel %vm1235, %v1228, %v1232
        %v1237 = vand.u32 2147483647, %v1178
        %vm1238 = vcmp.eq.f32.partialorder %v1237, 8.507059e+37
        %v1239 = vand.u32 %v1178, 2147483648
        %v1240 = vor.u32 1.1754944e-38, %v1239
        %v1241 = vsel %vm1238, %v1240, %v1236
        %v1242 = vmul.f32 1.0, %v1241
        %v1243 = vrcp.pop %v1179
        %v1244 = vmul.f32 %v1179, %v1243
        %v1245 = vsub.f32 1.0, %v1244
        %v1246 = vmul.f32 %v1243, %v1245
        %v1247 = vadd.f32 %v1243, %v1246
        %vm1248 = vweird.f32 %v1179
        %vm1249 = vweird.f32 %v1243
        %vm1250 = vmor %vm1248, %vm1249
        %v1251 = vsel %vm1250, %v1243, %v1247
        %v1252 = vand.u32 2147483647, %v1179
        %vm1253 = vcmp.eq.f32.partialorder %v1252, 8.507059e+37
        %v1254 = vand.u32 %v1179, 2147483648
        %v1255 = vor.u32 1.1754944e-38, %v1254
        %v1256 = vsel %vm1253, %v1255, %v1251
        %v1257 = vmul.f32 1.0, %v1256
        %v1258 = vrcp.pop %v1180
        %v1259 = vmul.f32 %v1180, %v1258
        %v1260 = vsub.f32 1.0, %v1259
        %v1261 = vmul.f32 %v1258, %v1260
        %v1262 = vadd.f32 %v1258, %v1261
        %vm1263 = vweird.f32 %v1180
        %vm1264 = vweird.f32 %v1258
        %vm1265 = vmor %vm1263, %vm1264
        %v1266 = vsel %vm1265, %v1258, %v1262
        %v1267 = vand.u32 2147483647, %v1180
        %vm1268 = vcmp.eq.f32.partialorder %v1267, 8.507059e+37
        %v1269 = vand.u32 %v1180, 2147483648
        %v1270 = vor.u32 1.1754944e-38, %v1269
        %v1271 = vsel %vm1268, %v1270, %v1266
        %v1272 = vmul.f32 1.0, %v1271
        %v1273 = vrcp.pop %v1181
        %v1274 = vmul.f32 %v1181, %v1273
        %v1275 = vsub.f32 1.0, %v1274
        %v1276 = vmul.f32 %v1273, %v1275
        %v1277 = vadd.f32 %v1273, %v1276
        %vm1278 = vweird.f32 %v1181
        %vm1279 = vweird.f32 %v1273
        %vm1280 = vmor %vm1278, %vm1279
        %v1281 = vsel %vm1280, %v1273, %v1277
        %v1282 = vand.u32 2147483647, %v1181
        %vm1283 = vcmp.eq.f32.partialorder %v1282, 8.507059e+37
        %v1284 = vand.u32 %v1181, 2147483648
        %v1285 = vor.u32 1.1754944e-38, %v1284
        %v1286 = vsel %vm1283, %v1285, %v1281
        %v1287 = vmul.f32 1.0, %v1286
        %v1288 = vrcp.pop %v1182
        %v1289 = vmul.f32 %v1182, %v1288
        %v1290 = vsub.f32 1.0, %v1289
        %v1291 = vmul.f32 %v1288, %v1290
        %v1292 = vadd.f32 %v1288, %v1291
        %vm1293 = vweird.f32 %v1182
        %vm1294 = vweird.f32 %v1288
        %vm1295 = vmor %vm1293, %vm1294
        %v1296 = vsel %vm1295, %v1288, %v1292
        %v1297 = vand.u32 2147483647, %v1182
        %vm1298 = vcmp.eq.f32.partialorder %v1297, 8.507059e+37
        %v1299 = vand.u32 %v1182, 2147483648
        %v1300 = vor.u32 1.1754944e-38, %v1299
        %v1301 = vsel %vm1298, %v1300, %v1296
        %v1302 = vmul.f32 1.0, %v1301
        %v1303 = vmul.f32 %v1128, %v1197
        %v1304 = vmul.f32 %v1131, %v1212
        %v1305 = vmul.f32 %v1134, %v1227
        %v1306 = vmul.f32 %v1137, %v1242
        %v1307 = vmul.f32 %v1140, %v1257
        %v1308 = vmul.f32 %v1143, %v1272
        %v1309 = vmul.f32 %v1146, %v1287
        %v1310 = vmul.f32 %v1149, %v1302
        %v1312 = vperm.slane %v849, 0
        %v1315 = vsel %vm1085, %v1303, 0
        %v1318 = vsel %vm1085, %v1304, 0
        %v1321 = vsel %vm1085, %v1305, 0
        %v1324 = vsel %vm1085, %v1306, 0
        %v1327 = vsel %vm1085, %v1307, 0
        %v1330 = vsel %vm1085, %v1308, 0
        %v1333 = vsel %vm1085, %v1309, 0
        %v1336 = vsel %vm1085, %v1310, 0
        %1338 = vmatpush.msra.mxu0 0.0
        %1339 = vmatpush.msra.mxu0 0.0
        %1340 = vmatpush.msra.mxu0 0.0
        %1341 = vmatpush.msra.mxu0 0.0
        %1342 = vmatpush.msra.mxu0 0.0
        %1343 = vmatpush.msra.mxu0 0.0
        %1344 = vmatpush.msra.mxu0 0.0
        %1345 = vmatpush.msra.mxu0 0.0
        %1346 = vmatpush.msra.mxu0 0.0
        %1347 = vmatpush.msra.mxu0 0.0
        %1348 = vmatpush.msra.mxu0 0.0
        %1349 = vmatpush.msra.mxu0 0.0
        %1350 = vmatpush.msra.mxu0 0.0
        %1351 = vmatpush.msra.mxu0 0.0
        %1352 = vmatpush.msra.mxu0 %v848
        %1353 = vmatpush.msra.mxu0 %v847
        %1354 = vmatmul.f32.gmra.mxu0 %v1315
        %v1355 = vpop.f32.mrf.mxu0
        %v1356 = vadd.f32 %v1312, %v1355
        %1357 = vmatmul.f32.gmra.mxu0 %v1318
        %v1358 = vpop.f32.mrf.mxu0
        %v1359 = vadd.f32 %v1312, %v1358
        %1360 = vmatmul.f32.gmra.mxu0 %v1321
        %v1361 = vpop.f32.mrf.mxu0
        %v1362 = vadd.f32 %v1312, %v1361
        %1363 = vmatmul.f32.gmra.mxu0 %v1324
        %v1364 = vpop.f32.mrf.mxu0
        %v1365 = vadd.f32 %v1312, %v1364
        %1366 = vmatmul.f32.gmra.mxu0 %v1327
        %v1367 = vpop.f32.mrf.mxu0
        %v1368 = vadd.f32 %v1312, %v1367
        %1369 = vmatmul.f32.gmra.mxu0 %v1330
        %v1370 = vpop.f32.mrf.mxu0
        %v1371 = vadd.f32 %v1312, %v1370
        %1372 = vmatmul.f32.gmra.mxu0 %v1333
        %v1373 = vpop.f32.mrf.mxu0
        %v1374 = vadd.f32 %v1312, %v1373
        %1375 = vmatmul.f32.gmra.mxu0 %v1336
        %v1376 = vpop.f32.mrf.mxu0
        %v1377 = vadd.f32 %v1312, %v1376
        %1378 = vdwg.mxu0
        %1380 = vset.pattern.permute.xlu0 0
        %1381 = vperm.xlu0 %1380, %v386
        %v1382 = vpop.permute.xlu0 %1381
        %v1384 = vmul.f32 %v1356, %v1382
        %v1385 = vmul.f32 %v1359, %v1382
        %v1386 = vmul.f32 %v1362, %v1382
        %v1387 = vmul.f32 %v1365, %v1382
        %v1388 = vmul.f32 %v1368, %v1382
        %v1389 = vmul.f32 %v1371, %v1382
        %v1390 = vmul.f32 %v1374, %v1382
        %v1391 = vmul.f32 %v1377, %v1382
        %1392 = vset.pattern.permute.xlu0 1
        %1393 = vperm.xlu0 %1392, %v386
        %v1394 = vpop.permute.xlu0 %1393
        %v1396 = vmul.f32 %v1356, %v1394
        %v1397 = vmul.f32 %v1359, %v1394
        %v1398 = vmul.f32 %v1362, %v1394
        %v1399 = vmul.f32 %v1365, %v1394
        %v1400 = vmul.f32 %v1368, %v1394
        %v1401 = vmul.f32 %v1371, %v1394
        %v1402 = vmul.f32 %v1374, %v1394
        %v1403 = vmul.f32 %v1377, %v1394
        %1412 = vrot.lane.b32.xlu0 %v1396, 116
        %v1413 = vpop.permute.xlu0 %1412
        %1414 = vrot.lane.b32.xlu0 %v1397, 116
        %v1415 = vpop.permute.xlu0 %1414
        %1416 = vrot.lane.b32.xlu0 %v1398, 116
        %v1417 = vpop.permute.xlu0 %1416
        %1418 = vrot.lane.b32.xlu0 %v1399, 116
        %v1419 = vpop.permute.xlu0 %1418
        %1420 = vrot.lane.b32.xlu0 %v1400, 116
        %v1421 = vpop.permute.xlu0 %1420
        %1422 = vrot.lane.b32.xlu0 %v1401, 116
        %v1423 = vpop.permute.xlu0 %1422
        %1424 = vrot.lane.b32.xlu0 %v1402, 116
        %v1425 = vpop.permute.xlu0 %1424
        %1426 = vrot.lane.b32.xlu0 %v1403, 116
        %v1427 = vpop.permute.xlu0 %1426
        %v1436 = vadd.f32 %v1384, %v1413
        %v1437 = vadd.f32 %v1385, %v1415
        %v1438 = vadd.f32 %v1386, %v1417
        %v1439 = vadd.f32 %v1387, %v1419
        %v1440 = vadd.f32 %v1388, %v1421
        %v1441 = vadd.f32 %v1389, %v1423
        %v1442 = vadd.f32 %v1390, %v1425
        %v1443 = vadd.f32 %v1391, %v1427
        %1444 = vset.pattern.permute.xlu0 2
        %1445 = vperm.xlu0 %1444, %v386
        %v1446 = vpop.permute.xlu0 %1445
        %v1448 = vmul.f32 %v1356, %v1446
        %v1449 = vmul.f32 %v1359, %v1446
        %v1450 = vmul.f32 %v1362, %v1446
        %v1451 = vmul.f32 %v1365, %v1446
        %v1452 = vmul.f32 %v1368, %v1446
        %v1453 = vmul.f32 %v1371, %v1446
        %v1454 = vmul.f32 %v1374, %v1446
        %v1455 = vmul.f32 %v1377, %v1446
        %1464 = vrot.lane.b32.xlu0 %v1448, 104
        %v1465 = vpop.permute.xlu0 %1464
        %1466 = vrot.lane.b32.xlu0 %v1449, 104
        %v1467 = vpop.permute.xlu0 %1466
        %1468 = vrot.lane.b32.xlu0 %v1450, 104
        %v1469 = vpop.permute.xlu0 %1468
        %1470 = vrot.lane.b32.xlu0 %v1451, 104
        %v1471 = vpop.permute.xlu0 %1470
        %1472 = vrot.lane.b32.xlu0 %v1452, 104
        %v1473 = vpop.permute.xlu0 %1472
        %1474 = vrot.lane.b32.xlu0 %v1453, 104
        %v1475 = vpop.permute.xlu0 %1474
        %1476 = vrot.lane.b32.xlu0 %v1454, 104
        %v1477 = vpop.permute.xlu0 %1476
        %1478 = vrot.lane.b32.xlu0 %v1455, 104
        %v1479 = vpop.permute.xlu0 %1478
        %v1488 = vadd.f32 %v1436, %v1465
        %v1489 = vadd.f32 %v1437, %v1467
        %v1490 = vadd.f32 %v1438, %v1469
        %v1491 = vadd.f32 %v1439, %v1471
        %v1492 = vadd.f32 %v1440, %v1473
        %v1493 = vadd.f32 %v1441, %v1475
        %v1494 = vadd.f32 %v1442, %v1477
        %v1495 = vadd.f32 %v1443, %v1479
        %1496 = vset.pattern.permute.xlu0 3
        %1497 = vperm.xlu0 %1496, %v386
        %v1498 = vpop.permute.xlu0 %1497
        %v1500 = vmul.f32 %v1356, %v1498
        %v1501 = vmul.f32 %v1359, %v1498
        %v1502 = vmul.f32 %v1362, %v1498
        %v1503 = vmul.f32 %v1365, %v1498
        %v1504 = vmul.f32 %v1368, %v1498
        %v1505 = vmul.f32 %v1371, %v1498
        %v1506 = vmul.f32 %v1374, %v1498
        %v1507 = vmul.f32 %v1377, %v1498
        %1516 = vrot.lane.b32.xlu0 %v1500, 92
        %v1517 = vpop.permute.xlu0 %1516
        %1518 = vrot.lane.b32.xlu0 %v1501, 92
        %v1519 = vpop.permute.xlu0 %1518
        %1520 = vrot.lane.b32.xlu0 %v1502, 92
        %v1521 = vpop.permute.xlu0 %1520
        %1522 = vrot.lane.b32.xlu0 %v1503, 92
        %v1523 = vpop.permute.xlu0 %1522
        %1524 = vrot.lane.b32.xlu0 %v1504, 92
        %v1525 = vpop.permute.xlu0 %1524
        %1526 = vrot.lane.b32.xlu0 %v1505, 92
        %v1527 = vpop.permute.xlu0 %1526
        %1528 = vrot.lane.b32.xlu0 %v1506, 92
        %v1529 = vpop.permute.xlu0 %1528
        %1530 = vrot.lane.b32.xlu0 %v1507, 92
        %v1531 = vpop.permute.xlu0 %1530
        %v1540 = vadd.f32 %v1488, %v1517
        %v1541 = vadd.f32 %v1489, %v1519
        %v1542 = vadd.f32 %v1490, %v1521
        %v1543 = vadd.f32 %v1491, %v1523
        %v1544 = vadd.f32 %v1492, %v1525
        %v1545 = vadd.f32 %v1493, %v1527
        %v1546 = vadd.f32 %v1494, %v1529
        %v1547 = vadd.f32 %v1495, %v1531
        %vm1548 = vcmask 64512
        %v1549 = vsel %vm1548, %v1540, 0.0
        %v1550 = vrot.slane %v1549, 4
        %v1551 = vadd.f32 %v1549, %v1550
        %v1552 = vrot.slane %v1551, 2
        %v1553 = vadd.f32 %v1551, %v1552
        %v1554 = vrot.slane %v1553, 1
        %v1555 = vadd.f32 %v1553, %v1554
        %v1556 = vsel %vm1548, %v1541, 0.0
        %v1557 = vrot.slane %v1556, 4
        %v1558 = vadd.f32 %v1556, %v1557
        %v1559 = vrot.slane %v1558, 2
        %v1560 = vadd.f32 %v1558, %v1559
        %v1561 = vrot.slane %v1560, 1
        %v1562 = vadd.f32 %v1560, %v1561
        %v1563 = vsel %vm1548, %v1542, 0.0
        %v1564 = vrot.slane %v1563, 4
        %v1565 = vadd.f32 %v1563, %v1564
        %v1566 = vrot.slane %v1565, 2
        %v1567 = vadd.f32 %v1565, %v1566
        %v1568 = vrot.slane %v1567, 1
        %v1569 = vadd.f32 %v1567, %v1568
        %v1570 = vsel %vm1548, %v1543, 0.0
        %v1571 = vrot.slane %v1570, 4
        %v1572 = vadd.f32 %v1570, %v1571
        %v1573 = vrot.slane %v1572, 2
        %v1574 = vadd.f32 %v1572, %v1573
        %v1575 = vrot.slane %v1574, 1
        %v1576 = vadd.f32 %v1574, %v1575
        %v1577 = vsel %vm1548, %v1544, 0.0
        %v1578 = vrot.slane %v1577, 4
        %v1579 = vadd.f32 %v1577, %v1578
        %v1580 = vrot.slane %v1579, 2
        %v1581 = vadd.f32 %v1579, %v1580
        %v1582 = vrot.slane %v1581, 1
        %v1583 = vadd.f32 %v1581, %v1582
        %v1584 = vsel %vm1548, %v1545, 0.0
        %v1585 = vrot.slane %v1584, 4
        %v1586 = vadd.f32 %v1584, %v1585
        %v1587 = vrot.slane %v1586, 2
        %v1588 = vadd.f32 %v1586, %v1587
        %v1589 = vrot.slane %v1588, 1
        %v1590 = vadd.f32 %v1588, %v1589
        %v1591 = vsel %vm1548, %v1546, 0.0
        %v1592 = vrot.slane %v1591, 4
        %v1593 = vadd.f32 %v1591, %v1592
        %v1594 = vrot.slane %v1593, 2
        %v1595 = vadd.f32 %v1593, %v1594
        %v1596 = vrot.slane %v1595, 1
        %v1597 = vadd.f32 %v1595, %v1596
        %v1598 = vsel %vm1548, %v1547, 0.0
        %v1599 = vrot.slane %v1598, 4
        %v1600 = vadd.f32 %v1598, %v1599
        %v1601 = vrot.slane %v1600, 2
        %v1602 = vadd.f32 %v1600, %v1601
        %v1603 = vrot.slane %v1602, 1
        %v1604 = vadd.f32 %v1602, %v1603
        %1606 = vset.pattern.permute.xlu0 8
        %1607 = vperm.xlu0 %1606, %v1540
        %v1608 = vpop.permute.xlu0 %1607
        %1611 = vset.pattern.permute.xlu0 8
        %1612 = vperm.xlu0 %1611, %v1541
        %v1613 = vpop.permute.xlu0 %1612
        %1616 = vset.pattern.permute.xlu0 8
        %1617 = vperm.xlu0 %1616, %v1542
        %v1618 = vpop.permute.xlu0 %1617
        %1621 = vset.pattern.permute.xlu0 8
        %1622 = vperm.xlu0 %1621, %v1543
        %v1623 = vpop.permute.xlu0 %1622
        %1626 = vset.pattern.permute.xlu0 8
        %1627 = vperm.xlu0 %1626, %v1544
        %v1628 = vpop.permute.xlu0 %1627
        %1631 = vset.pattern.permute.xlu0 8
        %1632 = vperm.xlu0 %1631, %v1545
        %v1633 = vpop.permute.xlu0 %1632
        %1636 = vset.pattern.permute.xlu0 8
        %1637 = vperm.xlu0 %1636, %v1546
        %v1638 = vpop.permute.xlu0 %1637
        %1641 = vset.pattern.permute.xlu0 8
        %1642 = vperm.xlu0 %1641, %v1547
        %v1643 = vpop.permute.xlu0 %1642
        %v1645 = vmul.f32 %v1608, %v775
        %v1646 = vmul.f32 %v1613, %v776
        %v1647 = vmul.f32 %v1618, %v777
        %v1648 = vmul.f32 %v1623, %v778
        %v1649 = vmul.f32 %v1628, %v779
        %v1650 = vmul.f32 %v1633, %v780
        %v1651 = vmul.f32 %v1638, %v781
        %v1652 = vmul.f32 %v1643, %v782
        %v1653 = vsel %vm428, %v1645, 0.0
        %v1654 = vrot.slane %v1653, 4
        %v1655 = vadd.f32 %v1653, %v1654
        %v1656 = vrot.slane %v1655, 2
        %v1657 = vadd.f32 %v1655, %v1656
        %v1658 = vrot.slane %v1657, 1
        %v1659 = vadd.f32 %v1657, %v1658
        %v1660 = vsel %vm428, %v1646, 0.0
        %v1661 = vrot.slane %v1660, 4
        %v1662 = vadd.f32 %v1660, %v1661
        %v1663 = vrot.slane %v1662, 2
        %v1664 = vadd.f32 %v1662, %v1663
        %v1665 = vrot.slane %v1664, 1
        %v1666 = vadd.f32 %v1664, %v1665
        %v1667 = vsel %vm428, %v1647, 0.0
        %v1668 = vrot.slane %v1667, 4
        %v1669 = vadd.f32 %v1667, %v1668
        %v1670 = vrot.slane %v1669, 2
        %v1671 = vadd.f32 %v1669, %v1670
        %v1672 = vrot.slane %v1671, 1
        %v1673 = vadd.f32 %v1671, %v1672
        %v1674 = vsel %vm428, %v1648, 0.0
        %v1675 = vrot.slane %v1674, 4
        %v1676 = vadd.f32 %v1674, %v1675
        %v1677 = vrot.slane %v1676, 2
        %v1678 = vadd.f32 %v1676, %v1677
        %v1679 = vrot.slane %v1678, 1
        %v1680 = vadd.f32 %v1678, %v1679
        %v1681 = vsel %vm428, %v1649, 0.0
        %v1682 = vrot.slane %v1681, 4
        %v1683 = vadd.f32 %v1681, %v1682
        %v1684 = vrot.slane %v1683, 2
        %v1685 = vadd.f32 %v1683, %v1684
        %v1686 = vrot.slane %v1685, 1
        %v1687 = vadd.f32 %v1685, %v1686
        %v1688 = vsel %vm428, %v1650, 0.0
        %v1689 = vrot.slane %v1688, 4
        %v1690 = vadd.f32 %v1688, %v1689
        %v1691 = vrot.slane %v1690, 2
        %v1692 = vadd.f32 %v1690, %v1691
        %v1693 = vrot.slane %v1692, 1
        %v1694 = vadd.f32 %v1692, %v1693
        %v1695 = vsel %vm428, %v1651, 0.0
        %v1696 = vrot.slane %v1695, 4
        %v1697 = vadd.f32 %v1695, %v1696
        %v1698 = vrot.slane %v1697, 2
        %v1699 = vadd.f32 %v1697, %v1698
        %v1700 = vrot.slane %v1699, 1
        %v1701 = vadd.f32 %v1699, %v1700
        %v1702 = vsel %vm428, %v1652, 0.0
        %v1703 = vrot.slane %v1702, 4
        %v1704 = vadd.f32 %v1702, %v1703
        %v1705 = vrot.slane %v1704, 2
        %v1706 = vadd.f32 %v1704, %v1705
        %v1707 = vrot.slane %v1706, 1
        %v1708 = vadd.f32 %v1706, %v1707
        %1709 = vset.pattern.permute.xlu0 9
        %1710 = vperm.xlu0 %1709, %v1540
        %v1711 = vpop.permute.xlu0 %1710
        %1713 = vset.pattern.permute.xlu0 9
        %1714 = vperm.xlu0 %1713, %v1541
        %v1715 = vpop.permute.xlu0 %1714
        %1717 = vset.pattern.permute.xlu0 9
        %1718 = vperm.xlu0 %1717, %v1542
        %v1719 = vpop.permute.xlu0 %1718
        %1721 = vset.pattern.permute.xlu0 9
        %1722 = vperm.xlu0 %1721, %v1543
        %v1723 = vpop.permute.xlu0 %1722
        %1725 = vset.pattern.permute.xlu0 9
        %1726 = vperm.xlu0 %1725, %v1544
        %v1727 = vpop.permute.xlu0 %1726
        %1729 = vset.pattern.permute.xlu0 9
        %1730 = vperm.xlu0 %1729, %v1545
        %v1731 = vpop.permute.xlu0 %1730
        %1733 = vset.pattern.permute.xlu0 9
        %1734 = vperm.xlu0 %1733, %v1546
        %v1735 = vpop.permute.xlu0 %1734
        %1737 = vset.pattern.permute.xlu0 9
        %1738 = vperm.xlu0 %1737, %v1547
        %v1739 = vpop.permute.xlu0 %1738
        %v1741 = vmul.f32 %v1711, %v775
        %v1742 = vmul.f32 %v1715, %v776
        %v1743 = vmul.f32 %v1719, %v777
        %v1744 = vmul.f32 %v1723, %v778
        %v1745 = vmul.f32 %v1727, %v779
        %v1746 = vmul.f32 %v1731, %v780
        %v1747 = vmul.f32 %v1735, %v781
        %v1748 = vmul.f32 %v1739, %v782
        %v1749 = vsel %vm428, %v1741, 0.0
        %v1750 = vrot.slane %v1749, 4
        %v1751 = vadd.f32 %v1749, %v1750
        %v1752 = vrot.slane %v1751, 2
        %v1753 = vadd.f32 %v1751, %v1752
        %v1754 = vrot.slane %v1753, 1
        %v1755 = vadd.f32 %v1753, %v1754
        %v1756 = vsel %vm428, %v1742, 0.0
        %v1757 = vrot.slane %v1756, 4
        %v1758 = vadd.f32 %v1756, %v1757
        %v1759 = vrot.slane %v1758, 2
        %v1760 = vadd.f32 %v1758, %v1759
        %v1761 = vrot.slane %v1760, 1
        %v1762 = vadd.f32 %v1760, %v1761
        %v1763 = vsel %vm428, %v1743, 0.0
        %v1764 = vrot.slane %v1763, 4
        %v1765 = vadd.f32 %v1763, %v1764
        %v1766 = vrot.slane %v1765, 2
        %v1767 = vadd.f32 %v1765, %v1766
        %v1768 = vrot.slane %v1767, 1
        %v1769 = vadd.f32 %v1767, %v1768
        %v1770 = vsel %vm428, %v1744, 0.0
        %v1771 = vrot.slane %v1770, 4
        %v1772 = vadd.f32 %v1770, %v1771
        %v1773 = vrot.slane %v1772, 2
        %v1774 = vadd.f32 %v1772, %v1773
        %v1775 = vrot.slane %v1774, 1
        %v1776 = vadd.f32 %v1774, %v1775
        %v1777 = vsel %vm428, %v1745, 0.0
        %v1778 = vrot.slane %v1777, 4
        %v1779 = vadd.f32 %v1777, %v1778
        %v1780 = vrot.slane %v1779, 2
        %v1781 = vadd.f32 %v1779, %v1780
        %v1782 = vrot.slane %v1781, 1
        %v1783 = vadd.f32 %v1781, %v1782
        %v1784 = vsel %vm428, %v1746, 0.0
        %v1785 = vrot.slane %v1784, 4
        %v1786 = vadd.f32 %v1784, %v1785
        %v1787 = vrot.slane %v1786, 2
        %v1788 = vadd.f32 %v1786, %v1787
        %v1789 = vrot.slane %v1788, 1
        %v1790 = vadd.f32 %v1788, %v1789
        %v1791 = vsel %vm428, %v1747, 0.0
        %v1792 = vrot.slane %v1791, 4
        %v1793 = vadd.f32 %v1791, %v1792
        %v1794 = vrot.slane %v1793, 2
        %v1795 = vadd.f32 %v1793, %v1794
        %v1796 = vrot.slane %v1795, 1
        %v1797 = vadd.f32 %v1795, %v1796
        %v1798 = vsel %vm428, %v1748, 0.0
        %v1799 = vrot.slane %v1798, 4
        %v1800 = vadd.f32 %v1798, %v1799
        %v1801 = vrot.slane %v1800, 2
        %v1802 = vadd.f32 %v1800, %v1801
        %v1803 = vrot.slane %v1802, 1
        %v1804 = vadd.f32 %v1802, %v1803
        %1805 = vset.pattern.permute.xlu0 10
        %1806 = vperm.xlu0 %1805, %v1540
        %v1807 = vpop.permute.xlu0 %1806
        %1809 = vset.pattern.permute.xlu0 10
        %1810 = vperm.xlu0 %1809, %v1541
        %v1811 = vpop.permute.xlu0 %1810
        %1813 = vset.pattern.permute.xlu0 10
        %1814 = vperm.xlu0 %1813, %v1542
        %v1815 = vpop.permute.xlu0 %1814
        %1817 = vset.pattern.permute.xlu0 10
        %1818 = vperm.xlu0 %1817, %v1543
        %v1819 = vpop.permute.xlu0 %1818
        %1821 = vset.pattern.permute.xlu0 10
        %1822 = vperm.xlu0 %1821, %v1544
        %v1823 = vpop.permute.xlu0 %1822
        %1825 = vset.pattern.permute.xlu0 10
        %1826 = vperm.xlu0 %1825, %v1545
        %v1827 = vpop.permute.xlu0 %1826
        %1829 = vset.pattern.permute.xlu0 10
        %1830 = vperm.xlu0 %1829, %v1546
        %v1831 = vpop.permute.xlu0 %1830
        %1833 = vset.pattern.permute.xlu0 10
        %1834 = vperm.xlu0 %1833, %v1547
        %v1835 = vpop.permute.xlu0 %1834
        %v1837 = vmul.f32 %v1807, %v775
        %v1838 = vmul.f32 %v1811, %v776
        %v1839 = vmul.f32 %v1815, %v777
        %v1840 = vmul.f32 %v1819, %v778
        %v1841 = vmul.f32 %v1823, %v779
        %v1842 = vmul.f32 %v1827, %v780
        %v1843 = vmul.f32 %v1831, %v781
        %v1844 = vmul.f32 %v1835, %v782
        %v1845 = vsel %vm428, %v1837, 0.0
        %v1846 = vrot.slane %v1845, 4
        %v1847 = vadd.f32 %v1845, %v1846
        %v1848 = vrot.slane %v1847, 2
        %v1849 = vadd.f32 %v1847, %v1848
        %v1850 = vrot.slane %v1849, 1
        %v1851 = vadd.f32 %v1849, %v1850
        %v1852 = vsel %vm428, %v1838, 0.0
        %v1853 = vrot.slane %v1852, 4
        %v1854 = vadd.f32 %v1852, %v1853
        %v1855 = vrot.slane %v1854, 2
        %v1856 = vadd.f32 %v1854, %v1855
        %v1857 = vrot.slane %v1856, 1
        %v1858 = vadd.f32 %v1856, %v1857
        %v1859 = vsel %vm428, %v1839, 0.0
        %v1860 = vrot.slane %v1859, 4
        %v1861 = vadd.f32 %v1859, %v1860
        %v1862 = vrot.slane %v1861, 2
        %v1863 = vadd.f32 %v1861, %v1862
        %v1864 = vrot.slane %v1863, 1
        %v1865 = vadd.f32 %v1863, %v1864
        %v1866 = vsel %vm428, %v1840, 0.0
        %v1867 = vrot.slane %v1866, 4
        %v1868 = vadd.f32 %v1866, %v1867
        %v1869 = vrot.slane %v1868, 2
        %v1870 = vadd.f32 %v1868, %v1869
        %v1871 = vrot.slane %v1870, 1
        %v1872 = vadd.f32 %v1870, %v1871
        %v1873 = vsel %vm428, %v1841, 0.0
        %v1874 = vrot.slane %v1873, 4
        %v1875 = vadd.f32 %v1873, %v1874
        %v1876 = vrot.slane %v1875, 2
        %v1877 = vadd.f32 %v1875, %v1876
        %v1878 = vrot.slane %v1877, 1
        %v1879 = vadd.f32 %v1877, %v1878
        %v1880 = vsel %vm428, %v1842, 0.0
        %v1881 = vrot.slane %v1880, 4
        %v1882 = vadd.f32 %v1880, %v1881
        %v1883 = vrot.slane %v1882, 2
        %v1884 = vadd.f32 %v1882, %v1883
        %v1885 = vrot.slane %v1884, 1
        %v1886 = vadd.f32 %v1884, %v1885
        %v1887 = vsel %vm428, %v1843, 0.0
        %v1888 = vrot.slane %v1887, 4
        %v1889 = vadd.f32 %v1887, %v1888
        %v1890 = vrot.slane %v1889, 2
        %v1891 = vadd.f32 %v1889, %v1890
        %v1892 = vrot.slane %v1891, 1
        %v1893 = vadd.f32 %v1891, %v1892
        %v1894 = vsel %vm428, %v1844, 0.0
        %v1895 = vrot.slane %v1894, 4
        %v1896 = vadd.f32 %v1894, %v1895
        %v1897 = vrot.slane %v1896, 2
        %v1898 = vadd.f32 %v1896, %v1897
        %v1899 = vrot.slane %v1898, 1
        %v1900 = vadd.f32 %v1898, %v1899
        %1901 = vset.pattern.permute.xlu0 11
        %1902 = vperm.xlu0 %1901, %v1540
        %v1903 = vpop.permute.xlu0 %1902
        %1905 = vset.pattern.permute.xlu0 11
        %1906 = vperm.xlu0 %1905, %v1541
        %v1907 = vpop.permute.xlu0 %1906
        %1909 = vset.pattern.permute.xlu0 11
        %1910 = vperm.xlu0 %1909, %v1542
        %v1911 = vpop.permute.xlu0 %1910
        %1913 = vset.pattern.permute.xlu0 11
        %1914 = vperm.xlu0 %1913, %v1543
        %v1915 = vpop.permute.xlu0 %1914
        %1917 = vset.pattern.permute.xlu0 11
        %1918 = vperm.xlu0 %1917, %v1544
        %v1919 = vpop.permute.xlu0 %1918
        %1921 = vset.pattern.permute.xlu0 11
        %1922 = vperm.xlu0 %1921, %v1545
        %v1923 = vpop.permute.xlu0 %1922
        %1925 = vset.pattern.permute.xlu0 11
        %1926 = vperm.xlu0 %1925, %v1546
        %v1927 = vpop.permute.xlu0 %1926
        %1929 = vset.pattern.permute.xlu0 11
        %1930 = vperm.xlu0 %1929, %v1547
        %v1931 = vpop.permute.xlu0 %1930
        %v1933 = vmul.f32 %v1903, %v775
        %v1934 = vmul.f32 %v1907, %v776
        %v1935 = vmul.f32 %v1911, %v777
        %v1936 = vmul.f32 %v1915, %v778
        %v1937 = vmul.f32 %v1919, %v779
        %v1938 = vmul.f32 %v1923, %v780
        %v1939 = vmul.f32 %v1927, %v781
        %v1940 = vmul.f32 %v1931, %v782
        %v1941 = vsel %vm428, %v1933, 0.0
        %v1942 = vrot.slane %v1941, 4
        %v1943 = vadd.f32 %v1941, %v1942
        %v1944 = vrot.slane %v1943, 2
        %v1945 = vadd.f32 %v1943, %v1944
        %v1946 = vrot.slane %v1945, 1
        %v1947 = vadd.f32 %v1945, %v1946
        %v1948 = vsel %vm428, %v1934, 0.0
        %v1949 = vrot.slane %v1948, 4
        %v1950 = vadd.f32 %v1948, %v1949
        %v1951 = vrot.slane %v1950, 2
        %v1952 = vadd.f32 %v1950, %v1951
        %v1953 = vrot.slane %v1952, 1
        %v1954 = vadd.f32 %v1952, %v1953
        %v1955 = vsel %vm428, %v1935, 0.0
        %v1956 = vrot.slane %v1955, 4
        %v1957 = vadd.f32 %v1955, %v1956
        %v1958 = vrot.slane %v1957, 2
        %v1959 = vadd.f32 %v1957, %v1958
        %v1960 = vrot.slane %v1959, 1
        %v1961 = vadd.f32 %v1959, %v1960
        %v1962 = vsel %vm428, %v1936, 0.0
        %v1963 = vrot.slane %v1962, 4
        %v1964 = vadd.f32 %v1962, %v1963
        %v1965 = vrot.slane %v1964, 2
        %v1966 = vadd.f32 %v1964, %v1965
        %v1967 = vrot.slane %v1966, 1
        %v1968 = vadd.f32 %v1966, %v1967
        %v1969 = vsel %vm428, %v1937, 0.0
        %v1970 = vrot.slane %v1969, 4
        %v1971 = vadd.f32 %v1969, %v1970
        %v1972 = vrot.slane %v1971, 2
        %v1973 = vadd.f32 %v1971, %v1972
        %v1974 = vrot.slane %v1973, 1
        %v1975 = vadd.f32 %v1973, %v1974
        %v1976 = vsel %vm428, %v1938, 0.0
        %v1977 = vrot.slane %v1976, 4
        %v1978 = vadd.f32 %v1976, %v1977
        %v1979 = vrot.slane %v1978, 2
        %v1980 = vadd.f32 %v1978, %v1979
        %v1981 = vrot.slane %v1980, 1
        %v1982 = vadd.f32 %v1980, %v1981
        %v1983 = vsel %vm428, %v1939, 0.0
        %v1984 = vrot.slane %v1983, 4
        %v1985 = vadd.f32 %v1983, %v1984
        %v1986 = vrot.slane %v1985, 2
        %v1987 = vadd.f32 %v1985, %v1986
        %v1988 = vrot.slane %v1987, 1
        %v1989 = vadd.f32 %v1987, %v1988
        %v1990 = vsel %vm428, %v1940, 0.0
        %v1991 = vrot.slane %v1990, 4
        %v1992 = vadd.f32 %v1990, %v1991
        %v1993 = vrot.slane %v1992, 2
        %v1994 = vadd.f32 %v1992, %v1993
        %v1995 = vrot.slane %v1994, 1
        %v1996 = vadd.f32 %v1994, %v1995
        %vm2005 = vcmask 1041409
        %v2006 = vsel %vm2005, %v1562, %v1555
        %vm2007 = vcmask 1042434
        %v2008 = vsel %vm2007, %v1569, %v2006
        %vm2009 = vcmask 1043459
        %v2010 = vsel %vm2009, %v1576, %v2008
        %vm2011 = vcmask 1044484
        %v2012 = vsel %vm2011, %v1583, %v2010
        %vm2013 = vcmask 1045509
        %v2014 = vsel %vm2013, %v1590, %v2012
        %vm2015 = vcmask 1046534
        %v2016 = vsel %vm2015, %v1597, %v2014
        %vm2017 = vcmask 1047559
        %v2018 = vsel %vm2017, %v1604, %v2016
        %v2028 = vsel %vm2005, %v1666, %v1659
        %v2029 = vsel %vm2007, %v1673, %v2028
        %v2030 = vsel %vm2009, %v1680, %v2029
        %v2031 = vsel %vm2011, %v1687, %v2030
        %v2032 = vsel %vm2013, %v1694, %v2031
        %v2033 = vsel %vm2015, %v1701, %v2032
        %v2034 = vsel %vm2017, %v1708, %v2033
        %2035 = vrot.lane.b32.xlu0 %v2034, 8
        %v2036 = vpop.permute.xlu0 %2035
        %v2046 = vsel %vm2005, %v1762, %v1755
        %v2047 = vsel %vm2007, %v1769, %v2046
        %v2048 = vsel %vm2009, %v1776, %v2047
        %v2049 = vsel %vm2011, %v1783, %v2048
        %v2050 = vsel %vm2013, %v1790, %v2049
        %v2051 = vsel %vm2015, %v1797, %v2050
        %v2052 = vsel %vm2017, %v1804, %v2051
        %2053 = vrot.lane.b32.xlu0 %v2052, 11
        %v2054 = vpop.permute.xlu0 %2053
        %v2064 = vsel %vm2005, %v1858, %v1851
        %v2065 = vsel %vm2007, %v1865, %v2064
        %v2066 = vsel %vm2009, %v1872, %v2065
        %v2067 = vsel %vm2011, %v1879, %v2066
        %v2068 = vsel %vm2013, %v1886, %v2067
        %v2069 = vsel %vm2015, %v1893, %v2068
        %v2070 = vsel %vm2017, %v1900, %v2069
        %2071 = vrot.lane.b32.xlu0 %v2070, 14
        %v2072 = vpop.permute.xlu0 %2071
        %v2082 = vsel %vm2005, %v1954, %v1947
        %v2083 = vsel %vm2007, %v1961, %v2082
        %v2084 = vsel %vm2009, %v1968, %v2083
        %v2085 = vsel %vm2011, %v1975, %v2084
        %v2086 = vsel %vm2013, %v1982, %v2085
        %v2087 = vsel %vm2015, %v1989, %v2086
        %v2088 = vsel %vm2017, %v1996, %v2087
        %2089 = vrot.lane.b32.xlu0 %v2088, 17
        %v2090 = vpop.permute.xlu0 %2089
        %v2092 = vsel %vm1548, %v2018, %v2036
        %vm2093 = vcmask 89088
        %v2094 = vsel %vm2093, %v2092, %v2054
        %vm2095 = vcmask 113664
        %v2096 = vsel %vm2095, %v2094, %v2072
        %vm2097 = vcmask 138240
        %v2098 = vsel %vm2097, %v2096, %v2090
        %v2099 = vmul.f32 %v2098, 0.17677669
        %vm2100 = vcmask 162816
        %2101 = vst.msk [vmem:[%s382] sm:$0xff] %vm2100, %v2099
        %v2102 = vsel %vm1548, %v2099, 0.0
        %v2103 = vrot.slane %v2102, 4
        %v2104 = vadd.f32 %v2102, %v2103
        %v2105 = vrot.slane %v2104, 2
        %v2106 = vadd.f32 %v2104, %v2105
        %v2107 = vrot.slane %v2106, 1
        %v2108 = vadd.f32 %v2106, %v2107
        %v2109 = vmul.f32 %v2099, %v2099
        %v2110 = vsel %vm1548, %v2109, 0.0
        %v2111 = vrot.slane %v2110, 4
        %v2112 = vadd.f32 %v2110, %v2111
        %v2113 = vrot.slane %v2112, 2
        %v2114 = vadd.f32 %v2112, %v2113
        %v2115 = vrot.slane %v2114, 1
        %v2116 = vadd.f32 %v2114, %v2115
        %2118 = vrot.lane.b32.xlu0 %v2109, 120
        %v2119 = vpop.permute.xlu0 %2118
        %v2121 = vsel %vm428, %v2119, 0.0
        %2122 = vadd.xlane.f32.xlu0 %v2121
        %v2123 = vpop.xlane.xlu0 %2122
        %2124 = vrot.lane.b32.xlu0 %v2109, 117
        %v2125 = vpop.permute.xlu0 %2124
        %v2127 = vsel %vm428, %v2125, 0.0
        %2128 = vadd.xlane.f32.xlu0 %v2127
        %v2129 = vpop.xlane.xlu0 %2128
        %2130 = vrot.lane.b32.xlu0 %v2109, 114
        %v2131 = vpop.permute.xlu0 %2130
        %v2133 = vsel %vm428, %v2131, 0.0
        %2134 = vadd.xlane.f32.xlu0 %v2133
        %v2135 = vpop.xlane.xlu0 %2134
        %2136 = vrot.lane.b32.xlu0 %v2109, 111
        %v2137 = vpop.permute.xlu0 %2136
        %v2139 = vsel %vm428, %v2137, 0.0
        %2140 = vadd.xlane.f32.xlu0 %v2139
        %v2141 = vpop.xlane.xlu0 %2140
        %v2142 = vsel %vm765, %v2123, %v2129
        %v2143 = vsel %vm766, %v2142, %v2135
        %v2144 = vsel %vm428, %v2143, %v2141
        %vm2145 = vcmask 31744
        %v2146 = vsel %vm2145, %v2144, 0.0
        %v2147 = vrot.slane %v2146, 4
        %v2148 = vadd.f32 %v2146, %v2147
        %v2149 = vrot.slane %v2148, 2
        %v2150 = vadd.f32 %v2148, %v2149
        %v2151 = vrot.slane %v2150, 1
        %v2152 = vadd.f32 %v2150, %v2151
        %v2153 = vmul.f32 %v2152, 0.33333334
        %2155 = vrot.lane.b32.xlu0 %v2116, 8
        %v2156 = vpop.permute.xlu0 %2155
        %2159 = vrot.lane.b32.xlu0 %v2153, 16
        %v2160 = vpop.permute.xlu0 %2159
        %v2162 = vsel %vm1548, %v2108, %v2156
        %v2163 = vsel %vm1085, %v2162, %v2160
        %vm2164 = vcmask 155648
        %2165 = vst.msk [vmem:[%s385] sm:$0x1] %vm2164, %v2163
        %p2166 = scmp.lt.s32.totalorder %s23, 1
        %s2167 = scalar_select %p2166, %s23, 1
        %s2168 = smul.addr %s2167, 8
        %s2169 = scalar_lea.vmem %s8, %s2168
        %p2170 = scmp.lt.s32.totalorder %s23, 1
        %s2171 = scalar_select %p2170, %s23, 1
        %s2172 = scalar_lea.vmem %s9, %s2171
        // Predicated region
        $region61: #{_lambda_.2} parent=51 // pred_check
          %p2173 = pneg %p219
        $region62: #{_lambda_.2} parent=51 // pred_check_branch
          %2175 = sbr.rel (%p2173) target = $region64
        $region63: #{_lambda_.2} parent=51 // pred_region
          _
        $region64: #{_lambda_.2} parent=51 // pred_fallthru
          _
        // Predicated region
        $region65: #{_lambda_.2} parent=51 // pred_check
          %p2176 = pneg %p245
        $region66: #{_lambda_.2} parent=51 // pred_check_branch
          %2178 = sbr.rel (%p2176) target = $region68
        $region67: #{_lambda_.2} parent=51 // pred_region
          _
        $region68: #{_lambda_.2} parent=51 // pred_fallthru
          _
      $region52: #{_lambda_.2} parent=5 // pred_fallthru
        _
      %p2179 = scmp.le.s32.totalorder 2, %s18
      // Predicated region
      $region69: #{_lambda_.2} parent=5 // pred_check
        %p2180 = pneg %p2179
      $region70: #{_lambda_.2} parent=5 // pred_check_branch
        %2182 = sbr.rel (%p2180) target = $region72
      $region71: #{_lambda_.2} parent=5 // pred_region
        %s2183 = ssub.s32 %s18, 2
        // Predicated region
        $region73: #{_lambda_.2} parent=71 // pred_check
          %p2184 = pneg %p225
        $region74: #{_lambda_.2} parent=71 // pred_check_branch
          %2186 = sbr.rel (%p2184) target = $region76
        $region75: #{_lambda_.2} parent=71 // pred_region
          %p2187 = scmp.lt.s32.totalorder %s24, 1
          %s2188 = scalar_select %p2187, %s24, 1
          %s2189 = smul.addr %s2188, 8
          %s2190 = scalar_lea.vmem %s8, %s2189
        $region76: #{_lambda_.2} parent=71 // pred_fallthru
          _
        // Predicated region
        $region77: #{_lambda_.2} parent=71 // pred_check
          %p2191 = pneg %p251
        $region78: #{_lambda_.2} parent=71 // pred_check_branch
          %2193 = sbr.rel (%p2191) target = $region80
        $region79: #{_lambda_.2} parent=71 // pred_region
          %p2194 = scmp.lt.s32.totalorder %s24, 1
          %s2195 = scalar_select %p2194, %s24, 1
          %s2196 = scalar_lea.vmem %s9, %s2195
        $region80: #{_lambda_.2} parent=71 // pred_fallthru
          _
      $region72: #{_lambda_.2} parent=5 // pred_fallthru
        _
    $region6: #{_lambda_.2} parent=1 // loop_footer
      %s22 = sadd.s32 1, %s18
    $region7: #{_lambda_.2} parent=1 // loop_footer_branch
      %17 = sbr.rel target = $region3
    $region8: #{_lambda_.2} parent=1 // loop_exit
      _
    %2197 = vsyncpa [#allocation3], 1
    %s2198 = scalar_lea.sflag [#allocation3], 1
    %2199 = vsyncpa %s2198, 1
    %2200 = vsyncpa [#allocation5], 1

</llo_original>
